<compile_context>
chip_gen: v7x
topology: tpu7x:2x2x1
jax: 0.10.0
libtpu: 0.0.40
codegen_flags: <defaults>
</compile_context>

<pallas_src>
import math

import jax
import jax.numpy as jnp
from jax.experimental import pallas as pl
from jax.experimental.pallas import tpu as pltpu


def _round_up(v, m):
    return -(-v // m) * m


def _mm(a, w_ref):
    # bf16 x bf16 MXU matmul with f32 accumulation (cast is a no-op for bf16).
    return jnp.dot(a.astype(jnp.bfloat16), w_ref[...],
                   preferred_element_type=jnp.float32)


def _relu_bf16(y):
    # Bias add / ReLU stay in f32 (cheap on every VPU generation, incl. v5e
    # which has no bf16 VALU); single cast to bf16 for the next matmul + VMEM.
    return jnp.maximum(y, 0.0).astype(jnp.bfloat16)


def _const_spec(shape):
    # Full-array weight/bias block; same block every grid step (stays resident).
    # TODO(synk): pipeline_mode=pl.Buffered(1) would drop the duplicate buffer.
    return pl.BlockSpec(shape, lambda b: (0,) * len(shape))


# ---------------------------------------------------------------------------
# Fused kernel factory: encoder (input_mlp + feature_mlp) + per-batch global
# max + seg_mlp.  Row layout per grid step: `bblk` batch segments of `n_pad`
# points each, flattened to (bblk * n_pad) rows.  Chunks tile the row axis;
# when nchunks > 1 we force bblk == 1, so chunks never cross a batch segment.
# ---------------------------------------------------------------------------
def _make_kernel(bblk, n_pad, nc_chunk, nchunks, n_valid):
    total_rows = bblk * n_pad
    if nchunks == 1:
        chunks = [(0, total_rows)]                       # (row_start, row_len)

        def segs(_c):
            # one segment per batch element, point offset 0
            return [(bi * n_pad, n_pad, bi, 0) for bi in range(bblk)]
    else:
        chunks = [(c * nc_chunk, nc_chunk) for c in range(nchunks)]

        def segs(c):
            # bblk == 1: the whole chunk is one segment of batch element 0
            return [(0, nc_chunk, 0, c * nc_chunk)]

    def kernel(x_ref,
               w1, b1, w2, b2, w3, b3, w4, b4, w5, b5,
               sw1a, sw1b, sb1, sw2, sb2, sw3, sb3, sw4, sb4,
               out_ref, x1_sc, gmax_sc):
        # Running per-batch global max; post-ReLU features are >= 0, so 0-init
        # (and 0-masking of padded points) is exact.
        gmax_sc[...] = jnp.zeros_like(gmax_sc)

        # ---- pass 1: encoder per chunk, stash x1, fold 1024-wide feature ----
        for ci, (r0, rlen) in enumerate(chunks):
            xc = x_ref[r0:r0 + rlen, :]                      # (rlen, cin) bf16
            h = _relu_bf16(_mm(xc, w1) + b1[...])            # input_mlp
            h = _relu_bf16(_mm(h, w2) + b2[...])             # x1: (rlen, 64)
            x1_sc[r0:r0 + rlen, :] = h
            g = _relu_bf16(_mm(h, w3) + b3[...])             # feature_mlp
            g = _relu_bf16(_mm(g, w4) + b4[...])
            g = jnp.maximum(_mm(g, w5) + b5[...], 0.0)       # (rlen, 1024) f32
            for (s0, slen, bi, off) in segs(ci):
                gseg = g[s0:s0 + slen]
                if off + slen > n_valid:                     # zero padded points
                    idx = jax.lax.broadcasted_iota(jnp.int32, (slen, 1), 0)
                    gseg = jnp.where(idx < (n_valid - off), gseg, 0.0)
                m = jnp.max(gseg, axis=0, keepdims=True)     # (1, 1024)
                gmax_sc[bi:bi + 1, :] = jnp.maximum(gmax_sc[bi:bi + 1, :], m)

        # ---- global-feature half of seg layer 1 (once per batch element) ----
        # concat([x1, g]) @ W == x1 @ W[:64] + g @ W[64:]
        gp = _mm(gmax_sc[...], sw1b) + sb1[...]              # (bblk, 512) f32

        # ---- pass 2: segmentation MLP per chunk ----
        for ci, (r0, rlen) in enumerate(chunks):
            x1 = x1_sc[r0:r0 + rlen, :]                      # (rlen, 64) bf16
            hw = _mm(x1, sw1a)                               # (rlen, 512) f32
            parts = [hw[s0:s0 + slen] + gp[bi:bi + 1, :]
                     for (s0, slen, bi, _off) in segs(ci)]
            h = parts[0] if len(parts) == 1 else jnp.concatenate(parts, axis=0)
            h = _relu_bf16(h)
            h = _relu_bf16(_mm(h, sw2) + sb2[...])
            h = _relu_bf16(_mm(h, sw3) + sb3[...])
            out_ref[r0:r0 + rlen, :] = (_mm(h, sw4) + sb4[...]).astype(out_ref.dtype)

    return kernel


def pointnet_forward(x, params, *, rows_target=512, max_chunk_rows=2048):
    """x: (B, N, input_dim) float32 -> (B, N, num_classes) float32."""
    B, N, Cin = x.shape
    enc, seg = params["encoder"], params["seg"]
    num_classes = seg[-1][0].shape[1]

    # ---- tiling: pack batch elements to feed >= rows_target rows per MXU
    #      pass; chunk the point axis when one batch element exceeds the
    #      per-chunk VMEM cap (bounds the live (rows,1024) f32 intermediate).
    if N >= rows_target:
        bblk = 1
        nchunks = -(-N // max_chunk_rows)
        nc_chunk = _round_up(-(-N // nchunks), 8)
        n_pad = nchunks * nc_chunk
    else:
        n_pad = _round_up(N, 8)
        bblk = min(B, -(-rows_target // N), max(1, max_chunk_rows // n_pad))
        nc_chunk = n_pad
        nchunks = 1
    b_pad = -(-B // bblk) * bblk
    rows_step = bblk * n_pad
    chunk_rows = rows_step if nchunks == 1 else nc_chunk

    # ---- wrapper-side prep: pad + cast to bf16 matmul operands ----
    cin_p = max(8, _round_up(Cin, 8))
    x_p = jnp.pad(x, ((0, b_pad - B), (0, n_pad - N), (0, cin_p - Cin)))
    x_2d = x_p.reshape(b_pad * n_pad, cin_p).astype(jnp.bfloat16)

    enc_args = []
    for i, (w, b) in enumerate(enc):
        if i == 0 and cin_p != Cin:
            w = jnp.pad(w, ((0, cin_p - Cin), (0, 0)))       # zero rows: no-op
        enc_args += [w.astype(jnp.bfloat16), b.astype(jnp.float32)]

    (w1, b1), (w2, b2), (w3, b3), (w4, b4) = seg
    nc_p = max(128, _round_up(num_classes, 128))             # lane-dense output
    w4p = jnp.pad(w4, ((0, 0), (0, nc_p - num_classes)))
    b4p = jnp.pad(b4, ((0, 0), (0, nc_p - num_classes)))
    seg_args = [
        w1[:64].astype(jnp.bfloat16),                        # x1 half of concat
        w1[64:].astype(jnp.bfloat16),                        # global-feature half
        b1.astype(jnp.float32),
        w2.astype(jnp.bfloat16), b2.astype(jnp.float32),
        w3.astype(jnp.bfloat16), b3.astype(jnp.float32),
        w4p.astype(jnp.bfloat16), b4p.astype(jnp.float32),
    ]
    const_args = enc_args + seg_args

    # ---- explicit VMEM budget (double-buffered blocks + resident weights +
    #      per-chunk live activations), with headroom ----
    weight_bytes = sum(int(a.size) * a.dtype.itemsize for a in const_args)
    live_bytes = chunk_rows * (1024 * 4 + 1024 * 2 + 512 * 4 + 512 * 2
                               + 2 * 256 * 2 + 4 * 128 * 2 + 4 * 64 * 2)
    est = (2 * rows_step * cin_p * 2        # x block (double-buffered)
           + 2 * rows_step * nc_p * 4       # out block (double-buffered)
           + 2 * weight_bytes               # resident weights (double-buffered)
           + rows_step * 64 * 2             # x1 scratch (bf16)
           + 8 * 1024 * 4                   # gmax scratch
           + live_bytes)
    vmem_limit = int(min(max(2 * est + (8 << 20), 32 << 20), 100 << 20))

    kernel = _make_kernel(bblk, n_pad, nc_chunk, nchunks, N)

    out = pl.pallas_call(
        kernel,
        out_shape=jax.ShapeDtypeStruct((b_pad * n_pad, nc_p), jnp.float32),
        grid=(b_pad // bblk,),
        in_specs=[pl.BlockSpec((rows_step, cin_p), lambda b: (b, 0))]
                 + [_const_spec(a.shape) for a in const_args],
        out_specs=pl.BlockSpec((rows_step, nc_p), lambda b: (b, 0)),
        scratch_shapes=[pltpu.VMEM((rows_step, 64), jnp.bfloat16),   # x1
                        pltpu.VMEM((bblk, 1024), jnp.float32)],      # running max
        compiler_params=pltpu.CompilerParams(
            dimension_semantics=("parallel",),
            vmem_limit_bytes=vmem_limit),
    )(x_2d, *const_args)

    return out.reshape(b_pad, n_pad, nc_p)[:B, :N, :num_classes]


# ---------------------------------------------------------------------------
# Deterministic parameter construction (synthetic, mirrors the module shapes).
# Conv1d(cin, cout, 1) weight -> (cin, cout); BatchNorm folded in (eval mode).
# ---------------------------------------------------------------------------
def _conv_bn(key, cin, cout, with_bn=True, eps=1e-5):
    k = jax.random.split(key, 6)
    bound = 1.0 / math.sqrt(cin)
    w = jax.random.uniform(k[0], (cin, cout), jnp.float32, -bound, bound)
    b = jax.random.uniform(k[1], (cout,), jnp.float32, -bound, bound)
    if with_bn:
        gamma = jax.random.uniform(k[2], (cout,), jnp.float32, 0.5, 1.5)
        beta = jax.random.uniform(k[3], (cout,), jnp.float32, -0.5, 0.5)
        mean = jax.random.uniform(k[4], (cout,), jnp.float32, -0.5, 0.5)
        var = jax.random.uniform(k[5], (cout,), jnp.float32, 0.5, 1.5)
        s = gamma / jnp.sqrt(var + eps)
        w = w * s[None, :]
        b = b * s + (beta - mean * s)
    return w, b.reshape(1, cout)


def init_params(key, input_dim=3, num_classes=50):
    keys = jax.random.split(key, 9)
    encoder = [
        _conv_bn(keys[0], input_dim, 64),
        _conv_bn(keys[1], 64, 64),
        _conv_bn(keys[2], 64, 64),
        _conv_bn(keys[3], 64, 128),
        _conv_bn(keys[4], 128, 1024),
    ]
    seg = [
        _conv_bn(keys[5], 1088, 512),
        _conv_bn(keys[6], 512, 256),
        _conv_bn(keys[7], 256, 128),
        _conv_bn(keys[8], 128, num_classes, with_bn=False),
    ]
    return {"encoder": encoder, "seg": seg}


# ---------------------------------------------------------------------------
# Pure-JAX reference (same bf16-matmul / f32-accumulate math, no Pallas).
# ---------------------------------------------------------------------------
def pointnet_reference(x, params):
    def mm(a, w):
        return jnp.einsum("bnc,cd->bnd", a.astype(jnp.bfloat16),
                          w.astype(jnp.bfloat16),
                          preferred_element_type=jnp.float32)

    h = x
    for i, (w, b) in enumerate(params["encoder"]):
        h = jnp.maximum(mm(h, w) + b, 0.0)
        if i == 1:
            x1 = h
    gmax = jnp.max(h, axis=1, keepdims=True)                  # (B, 1, 1024)
    h = jnp.concatenate(
        [x1, jnp.broadcast_to(gmax, (x.shape[0], x.shape[1], gmax.shape[-1]))],
        axis=-1)                                              # (B, N, 1088)
    for i, (w, b) in enumerate(params["seg"]):
        h = mm(h, w) + b
        if i < 3:
            h = jnp.maximum(h, 0.0)
    return h


if __name__ == "__main__":
    key = jax.random.PRNGKey(0)
    k_x, k_p = jax.random.split(key)

    B, N, input_dim, num_classes = 2, 64, 3, 50
    # Module forward takes (B, N, input_dim) and transposes to NCL internally.
    x = jax.random.uniform(k_x, (B, N, input_dim), jnp.float32, -1.0, 1.0)
    params = init_params(k_p, input_dim=input_dim, num_classes=num_classes)

    out = pointnet_forward(x, params)
    out = jax.block_until_ready(out)
    assert out.shape == (B, N, num_classes), out.shape

    ref = pointnet_reference(x, params)
    if not jnp.allclose(out, ref, rtol=2e-2, atol=2e-2):
        raise AssertionError("Pallas output does not match JAX reference")

    print("KERNEL_OK")
</pallas_src>

<mosaic_0001>
module attributes {stable_mosaic.version = 11 : i64} {
  func.func @kernel(%arg0: i32, %arg1: memref<128x8xbf16, #tpu.memory_space<vmem>>, %arg2: memref<8x64xbf16, #tpu.memory_space<vmem>>, %arg3: memref<1x64xf32, #tpu.memory_space<vmem>>, %arg4: memref<64x64xbf16, #tpu.memory_space<vmem>>, %arg5: memref<1x64xf32, #tpu.memory_space<vmem>>, %arg6: memref<64x64xbf16, #tpu.memory_space<vmem>>, %arg7: memref<1x64xf32, #tpu.memory_space<vmem>>, %arg8: memref<64x128xbf16, #tpu.memory_space<vmem>>, %arg9: memref<1x128xf32, #tpu.memory_space<vmem>>, %arg10: memref<128x1024xbf16, #tpu.memory_space<vmem>>, %arg11: memref<1x1024xf32, #tpu.memory_space<vmem>>, %arg12: memref<64x512xbf16, #tpu.memory_space<vmem>>, %arg13: memref<1024x512xbf16, #tpu.memory_space<vmem>>, %arg14: memref<1x512xf32, #tpu.memory_space<vmem>>, %arg15: memref<512x256xbf16, #tpu.memory_space<vmem>>, %arg16: memref<1x256xf32, #tpu.memory_space<vmem>>, %arg17: memref<256x128xbf16, #tpu.memory_space<vmem>>, %arg18: memref<1x128xf32, #tpu.memory_space<vmem>>, %arg19: memref<128x128xbf16, #tpu.memory_space<vmem>>, %arg20: memref<1x128xf32, #tpu.memory_space<vmem>>, %arg21: memref<128x128xf32, #tpu.memory_space<vmem>>, %arg22: memref<128x64xbf16, #tpu.memory_space<vmem>>, %arg23: memref<2x1024xf32, #tpu.memory_space<vmem>>) attributes {dimension_semantics = [#tpu.dimension_semantics<parallel>], iteration_bounds = array<i64: 1>, scalar_prefetch = 0 : i64, scratch_operands = 2 : i64, tpu.core_type = #tpu.core_type<tc>, window_params = [{transform_indices = @transform_0, window_bounds = array<i64: 128, 8>}, {pipeline_mode = #tpu.pipeline_mode<synchronous>, transform_indices = @transform_1, window_bounds = array<i64: 8, 64>}, {pipeline_mode = #tpu.pipeline_mode<synchronous>, transform_indices = @transform_2, window_bounds = array<i64: 1, 64>}, {pipeline_mode = #tpu.pipeline_mode<synchronous>, transform_indices = @transform_3, window_bounds = array<i64: 64, 64>}, {pipeline_mode = #tpu.pipeline_mode<synchronous>, transform_indices = @transform_4, window_bounds = array<i64: 1, 64>}, {pipeline_mode = #tpu.pipeline_mode<synchronous>, transform_indices = @transform_5, window_bounds = array<i64: 64, 64>}, {pipeline_mode = #tpu.pipeline_mode<synchronous>, transform_indices = @transform_6, window_bounds = array<i64: 1, 64>}, {pipeline_mode = #tpu.pipeline_mode<synchronous>, transform_indices = @transform_7, window_bounds = array<i64: 64, 128>}, {pipeline_mode = #tpu.pipeline_mode<synchronous>, transform_indices = @transform_8, window_bounds = array<i64: 1, 128>}, {pipeline_mode = #tpu.pipeline_mode<synchronous>, transform_indices = @transform_9, window_bounds = array<i64: 128, 1024>}, {pipeline_mode = #tpu.pipeline_mode<synchronous>, transform_indices = @transform_10, window_bounds = array<i64: 1, 1024>}, {pipeline_mode = #tpu.pipeline_mode<synchronous>, transform_indices = @transform_11, window_bounds = array<i64: 64, 512>}, {pipeline_mode = #tpu.pipeline_mode<synchronous>, transform_indices = @transform_12, window_bounds = array<i64: 1024, 512>}, {pipeline_mode = #tpu.pipeline_mode<synchronous>, transform_indices = @transform_13, window_bounds = array<i64: 1, 512>}, {pipeline_mode = #tpu.pipeline_mode<synchronous>, transform_indices = @transform_14, window_bounds = array<i64: 512, 256>}, {pipeline_mode = #tpu.pipeline_mode<synchronous>, transform_indices = @transform_15, window_bounds = array<i64: 1, 256>}, {pipeline_mode = #tpu.pipeline_mode<synchronous>, transform_indices = @transform_16, window_bounds = array<i64: 256, 128>}, {pipeline_mode = #tpu.pipeline_mode<synchronous>, transform_indices = @transform_17, window_bounds = array<i64: 1, 128>}, {pipeline_mode = #tpu.pipeline_mode<synchronous>, transform_indices = @transform_18, window_bounds = array<i64: 128, 128>}, {pipeline_mode = #tpu.pipeline_mode<synchronous>, transform_indices = @transform_19, window_bounds = array<i64: 1, 128>}, {transform_indices = @transform_20, window_bounds = array<i64: 128, 128>}]} {
    %cst = arith.constant 0.000000e+00 : f32
    %0 = vector.broadcast %cst : f32 to vector<2x1024xf32>
    %c0 = arith.constant 0 : index
    %c0_0 = arith.constant 0 : index
    %1 = vector.load %arg23[%c0, %c0_0] : memref<2x1024xf32, #tpu.memory_space<vmem>>, vector<2x1024xf32>
    tpu.vector_store %arg23[%c0, %c0_0], %0 {strides = array<i32>} : memref<2x1024xf32, #tpu.memory_space<vmem>>, vector<2x1024xf32>,
    %c0_1 = arith.constant 0 : index
    %c0_2 = arith.constant 0 : index
    %2 = vector.load %arg1[%c0_1, %c0_2] : memref<128x8xbf16, #tpu.memory_space<vmem>>, vector<128x8xbf16>
    %c0_3 = arith.constant 0 : index
    %c0_4 = arith.constant 0 : index
    %3 = vector.load %arg2[%c0_3, %c0_4] : memref<8x64xbf16, #tpu.memory_space<vmem>>, vector<8x64xbf16>
    %cst_5 = arith.constant dense<0.000000e+00> : vector<128x64xf32>
    %4 = tpu.matmul %2, %3, %cst_5 {dimension_numbers = #tpu.dot_dimension_numbers<[1], [0], [0], [1], [0, 0, 1, 1], [], []>} : vector<128x8xbf16>, vector<8x64xbf16>, vector<128x64xf32> -> vector<128x64xf32>
    %c0_6 = arith.constant 0 : index
    %c0_7 = arith.constant 0 : index
    %5 = vector.load %arg3[%c0_6, %c0_7] : memref<1x64xf32, #tpu.memory_space<vmem>>, vector<1x64xf32>
    %6 = vector.broadcast %5 : vector<1x64xf32> to vector<128x64xf32>
    %7 = arith.addf %4, %6 : vector<128x64xf32>
    %cst_8 = arith.constant 0.000000e+00 : f32
    %8 = vector.broadcast %cst_8 : f32 to vector<128x64xf32>
    %9 = arith.maximumf %7, %8 : vector<128x64xf32>
    %10 = arith.truncf %9 : vector<128x64xf32> to vector<128x64xbf16>
    %c0_9 = arith.constant 0 : index
    %c0_10 = arith.constant 0 : index
    %11 = vector.load %arg4[%c0_9, %c0_10] : memref<64x64xbf16, #tpu.memory_space<vmem>>, vector<64x64xbf16>
    %cst_11 = arith.constant dense<0.000000e+00> : vector<128x64xf32>
    %12 = tpu.matmul %10, %11, %cst_11 {dimension_numbers = #tpu.dot_dimension_numbers<[1], [0], [0], [1], [0, 0, 1, 1], [], []>} : vector<128x64xbf16>, vector<64x64xbf16>, vector<128x64xf32> -> vector<128x64xf32>
    %c0_12 = arith.constant 0 : index
    %c0_13 = arith.constant 0 : index
    %13 = vector.load %arg5[%c0_12, %c0_13] : memref<1x64xf32, #tpu.memory_space<vmem>>, vector<1x64xf32>
    %14 = vector.broadcast %13 : vector<1x64xf32> to vector<128x64xf32>
    %15 = arith.addf %12, %14 : vector<128x64xf32>
    %cst_14 = arith.constant 0.000000e+00 : f32
    %16 = vector.broadcast %cst_14 : f32 to vector<128x64xf32>
    %17 = arith.maximumf %15, %16 : vector<128x64xf32>
    %18 = arith.truncf %17 : vector<128x64xf32> to vector<128x64xbf16>
    %c0_15 = arith.constant 0 : index
    %c0_16 = arith.constant 0 : index
    %19 = vector.load %arg22[%c0_15, %c0_16] : memref<128x64xbf16, #tpu.memory_space<vmem>>, vector<128x64xbf16>
    tpu.vector_store %arg22[%c0_15, %c0_16], %18 {strides = array<i32>} : memref<128x64xbf16, #tpu.memory_space<vmem>>, vector<128x64xbf16>,
    %c0_17 = arith.constant 0 : index
    %c0_18 = arith.constant 0 : index
    %20 = vector.load %arg6[%c0_17, %c0_18] : memref<64x64xbf16, #tpu.memory_space<vmem>>, vector<64x64xbf16>
    %cst_19 = arith.constant dense<0.000000e+00> : vector<128x64xf32>
    %21 = tpu.matmul %18, %20, %cst_19 {dimension_numbers = #tpu.dot_dimension_numbers<[1], [0], [0], [1], [0, 0, 1, 1], [], []>} : vector<128x64xbf16>, vector<64x64xbf16>, vector<128x64xf32> -> vector<128x64xf32>
    %c0_20 = arith.constant 0 : index
    %c0_21 = arith.constant 0 : index
    %22 = vector.load %arg7[%c0_20, %c0_21] : memref<1x64xf32, #tpu.memory_space<vmem>>, vector<1x64xf32>
    %23 = vector.broadcast %22 : vector<1x64xf32> to vector<128x64xf32>
    %24 = arith.addf %21, %23 : vector<128x64xf32>
    %cst_22 = arith.constant 0.000000e+00 : f32
    %25 = vector.broadcast %cst_22 : f32 to vector<128x64xf32>
    %26 = arith.maximumf %24, %25 : vector<128x64xf32>
    %27 = arith.truncf %26 : vector<128x64xf32> to vector<128x64xbf16>
    %c0_23 = arith.constant 0 : index
    %c0_24 = arith.constant 0 : index
    %28 = vector.load %arg8[%c0_23, %c0_24] : memref<64x128xbf16, #tpu.memory_space<vmem>>, vector<64x128xbf16>
    %cst_25 = arith.constant dense<0.000000e+00> : vector<128x128xf32>
    %29 = tpu.matmul %27, %28, %cst_25 {dimension_numbers = #tpu.dot_dimension_numbers<[1], [0], [0], [1], [0, 0, 1, 1], [], []>} : vector<128x64xbf16>, vector<64x128xbf16>, vector<128x128xf32> -> vector<128x128xf32>
    %c0_26 = arith.constant 0 : index
    %c0_27 = arith.constant 0 : index
    %30 = vector.load %arg9[%c0_26, %c0_27] : memref<1x128xf32, #tpu.memory_space<vmem>>, vector<1x128xf32>
    %31 = vector.broadcast %30 : vector<1x128xf32> to vector<128x128xf32>
    %32 = arith.addf %29, %31 : vector<128x128xf32>
    %cst_28 = arith.constant 0.000000e+00 : f32
    %33 = vector.broadcast %cst_28 : f32 to vector<128x128xf32>
    %34 = arith.maximumf %32, %33 : vector<128x128xf32>
    %35 = arith.truncf %34 : vector<128x128xf32> to vector<128x128xbf16>
    %c0_29 = arith.constant 0 : index
    %c0_30 = arith.constant 0 : index
    %36 = vector.load %arg10[%c0_29, %c0_30] : memref<128x1024xbf16, #tpu.memory_space<vmem>>, vector<128x1024xbf16>
    %cst_31 = arith.constant dense<0.000000e+00> : vector<128x1024xf32>
    %37 = tpu.matmul %35, %36, %cst_31 {dimension_numbers = #tpu.dot_dimension_numbers<[1], [0], [0], [1], [0, 0, 1, 1], [], []>} : vector<128x128xbf16>, vector<128x1024xbf16>, vector<128x1024xf32> -> vector<128x1024xf32>
    %c0_32 = arith.constant 0 : index
    %c0_33 = arith.constant 0 : index
    %38 = vector.load %arg11[%c0_32, %c0_33] : memref<1x1024xf32, #tpu.memory_space<vmem>>, vector<1x1024xf32>
    %39 = vector.broadcast %38 : vector<1x1024xf32> to vector<128x1024xf32>
    %40 = arith.addf %37, %39 : vector<128x1024xf32>
    %cst_34 = arith.constant 0.000000e+00 : f32
    %41 = vector.broadcast %cst_34 : f32 to vector<128x1024xf32>
    %42 = arith.maximumf %40, %41 : vector<128x1024xf32>
    %43 = vector.extract_strided_slice %42 {offsets = [0, 0], sizes = [64, 1024], strides = [1, 1]} : vector<128x1024xf32> to vector<64x1024xf32>
    %cst_35 = arith.constant dense<0xFF800000> : vector<1024xf32>
    %44 = vector.multi_reduction <maximumf>, %43, %cst_35 [0] : vector<64x1024xf32> to vector<1024xf32>
    %45 = vector.shape_cast %44 : vector<1024xf32> to vector<1x1024xf32>
    %c0_36 = arith.constant 0 : index
    %c0_37 = arith.constant 0 : index
    %46 = vector.load %arg23[%c0_36, %c0_37] : memref<2x1024xf32, #tpu.memory_space<vmem>>, vector<1x1024xf32>
    %47 = arith.maximumf %46, %45 : vector<1x1024xf32>
    %c0_38 = arith.constant 0 : index
    %c0_39 = arith.constant 0 : index
    %48 = vector.load %arg23[%c0_38, %c0_39] : memref<2x1024xf32, #tpu.memory_space<vmem>>, vector<1x1024xf32>
    tpu.vector_store %arg23[%c0_38, %c0_39], %47 {strides = array<i32>} : memref<2x1024xf32, #tpu.memory_space<vmem>>, vector<1x1024xf32>,
    %49 = vector.extract_strided_slice %42 {offsets = [64, 0], sizes = [64, 1024], strides = [1, 1]} : vector<128x1024xf32> to vector<64x1024xf32>
    %cst_40 = arith.constant dense<0xFF800000> : vector<1024xf32>
    %50 = vector.multi_reduction <maximumf>, %49, %cst_40 [0] : vector<64x1024xf32> to vector<1024xf32>
    %51 = vector.shape_cast %50 : vector<1024xf32> to vector<1x1024xf32>
    %c1 = arith.constant 1 : index
    %c0_41 = arith.constant 0 : index
    %52 = vector.load %arg23[%c1, %c0_41] : memref<2x1024xf32, #tpu.memory_space<vmem>>, vector<1x1024xf32>
    %53 = arith.maximumf %52, %51 : vector<1x1024xf32>
    %c1_42 = arith.constant 1 : index
    %c0_43 = arith.constant 0 : index
    %54 = vector.load %arg23[%c1_42, %c0_43] : memref<2x1024xf32, #tpu.memory_space<vmem>>, vector<1x1024xf32>
    tpu.vector_store %arg23[%c1_42, %c0_43], %53 {strides = array<i32>} : memref<2x1024xf32, #tpu.memory_space<vmem>>, vector<1x1024xf32>,
    %c0_44 = arith.constant 0 : index
    %c0_45 = arith.constant 0 : index
    %55 = vector.load %arg23[%c0_44, %c0_45] : memref<2x1024xf32, #tpu.memory_space<vmem>>, vector<2x1024xf32>
    %56 = arith.truncf %55 : vector<2x1024xf32> to vector<2x1024xbf16>
    %c0_46 = arith.constant 0 : index
    %c0_47 = arith.constant 0 : index
    %57 = vector.load %arg13[%c0_46, %c0_47] : memref<1024x512xbf16, #tpu.memory_space<vmem>>, vector<1024x512xbf16>
    %cst_48 = arith.constant dense<0.000000e+00> : vector<2x512xf32>
    %58 = tpu.matmul %56, %57, %cst_48 {dimension_numbers = #tpu.dot_dimension_numbers<[1], [0], [0], [1], [0, 0, 1, 1], [], []>} : vector<2x1024xbf16>, vector<1024x512xbf16>, vector<2x512xf32> -> vector<2x512xf32>
    %c0_49 = arith.constant 0 : index
    %c0_50 = arith.constant 0 : index
    %59 = vector.load %arg14[%c0_49, %c0_50] : memref<1x512xf32, #tpu.memory_space<vmem>>, vector<1x512xf32>
    %60 = vector.broadcast %59 : vector<1x512xf32> to vector<2x512xf32>
    %61 = arith.addf %58, %60 : vector<2x512xf32>
    %c0_51 = arith.constant 0 : index
    %c0_52 = arith.constant 0 : index
    %62 = vector.load %arg22[%c0_51, %c0_52] : memref<128x64xbf16, #tpu.memory_space<vmem>>, vector<128x64xbf16>
    %c0_53 = arith.constant 0 : index
    %c0_54 = arith.constant 0 : index
    %63 = vector.load %arg12[%c0_53, %c0_54] : memref<64x512xbf16, #tpu.memory_space<vmem>>, vector<64x512xbf16>
    %cst_55 = arith.constant dense<0.000000e+00> : vector<128x512xf32>
    %64 = tpu.matmul %62, %63, %cst_55 {dimension_numbers = #tpu.dot_dimension_numbers<[1], [0], [0], [1], [0, 0, 1, 1], [], []>} : vector<128x64xbf16>, vector<64x512xbf16>, vector<128x512xf32> -> vector<128x512xf32>
    %65 = vector.extract_strided_slice %64 {offsets = [0, 0], sizes = [64, 512], strides = [1, 1]} : vector<128x512xf32> to vector<64x512xf32>
    %66 = vector.extract_strided_slice %61 {offsets = [0, 0], sizes = [1, 512], strides = [1, 1]} : vector<2x512xf32> to vector<1x512xf32>
    %67 = vector.broadcast %66 : vector<1x512xf32> to vector<64x512xf32>
    %68 = arith.addf %65, %67 : vector<64x512xf32>
    %69 = vector.extract_strided_slice %64 {offsets = [64, 0], sizes = [64, 512], strides = [1, 1]} : vector<128x512xf32> to vector<64x512xf32>
    %70 = vector.extract_strided_slice %61 {offsets = [1, 0], sizes = [1, 512], strides = [1, 1]} : vector<2x512xf32> to vector<1x512xf32>
    %71 = vector.broadcast %70 : vector<1x512xf32> to vector<64x512xf32>
    %72 = arith.addf %69, %71 : vector<64x512xf32>
    %73 = tpu.concatenate %68, %72 in 0 : vector<64x512xf32>, vector<64x512xf32> -> vector<128x512xf32>
    %cst_56 = arith.constant 0.000000e+00 : f32
    %74 = vector.broadcast %cst_56 : f32 to vector<128x512xf32>
    %75 = arith.maximumf %73, %74 : vector<128x512xf32>
    %76 = arith.truncf %75 : vector<128x512xf32> to vector<128x512xbf16>
    %c0_57 = arith.constant 0 : index
    %c0_58 = arith.constant 0 : index
    %77 = vector.load %arg15[%c0_57, %c0_58] : memref<512x256xbf16, #tpu.memory_space<vmem>>, vector<512x256xbf16>
    %cst_59 = arith.constant dense<0.000000e+00> : vector<128x256xf32>
    %78 = tpu.matmul %76, %77, %cst_59 {dimension_numbers = #tpu.dot_dimension_numbers<[1], [0], [0], [1], [0, 0, 1, 1], [], []>} : vector<128x512xbf16>, vector<512x256xbf16>, vector<128x256xf32> -> vector<128x256xf32>
    %c0_60 = arith.constant 0 : index
    %c0_61 = arith.constant 0 : index
    %79 = vector.load %arg16[%c0_60, %c0_61] : memref<1x256xf32, #tpu.memory_space<vmem>>, vector<1x256xf32>
    %80 = vector.broadcast %79 : vector<1x256xf32> to vector<128x256xf32>
    %81 = arith.addf %78, %80 : vector<128x256xf32>
    %cst_62 = arith.constant 0.000000e+00 : f32
    %82 = vector.broadcast %cst_62 : f32 to vector<128x256xf32>
    %83 = arith.maximumf %81, %82 : vector<128x256xf32>
    %84 = arith.truncf %83 : vector<128x256xf32> to vector<128x256xbf16>
    %c0_63 = arith.constant 0 : index
    %c0_64 = arith.constant 0 : index
    %85 = vector.load %arg17[%c0_63, %c0_64] : memref<256x128xbf16, #tpu.memory_space<vmem>>, vector<256x128xbf16>
    %cst_65 = arith.constant dense<0.000000e+00> : vector<128x128xf32>
    %86 = tpu.matmul %84, %85, %cst_65 {dimension_numbers = #tpu.dot_dimension_numbers<[1], [0], [0], [1], [0, 0, 1, 1], [], []>} : vector<128x256xbf16>, vector<256x128xbf16>, vector<128x128xf32> -> vector<128x128xf32>
    %c0_66 = arith.constant 0 : index
    %c0_67 = arith.constant 0 : index
    %87 = vector.load %arg18[%c0_66, %c0_67] : memref<1x128xf32, #tpu.memory_space<vmem>>, vector<1x128xf32>
    %88 = vector.broadcast %87 : vector<1x128xf32> to vector<128x128xf32>
    %89 = arith.addf %86, %88 : vector<128x128xf32>
    %cst_68 = arith.constant 0.000000e+00 : f32
    %90 = vector.broadcast %cst_68 : f32 to vector<128x128xf32>
    %91 = arith.maximumf %89, %90 : vector<128x128xf32>
    %92 = arith.truncf %91 : vector<128x128xf32> to vector<128x128xbf16>
    %c0_69 = arith.constant 0 : index
    %c0_70 = arith.constant 0 : index
    %93 = vector.load %arg19[%c0_69, %c0_70] : memref<128x128xbf16, #tpu.memory_space<vmem>>, vector<128x128xbf16>
    %cst_71 = arith.constant dense<0.000000e+00> : vector<128x128xf32>
    %94 = tpu.matmul %92, %93, %cst_71 {dimension_numbers = #tpu.dot_dimension_numbers<[1], [0], [0], [1], [0, 0, 1, 1], [], []>} : vector<128x128xbf16>, vector<128x128xbf16>, vector<128x128xf32> -> vector<128x128xf32>
    %c0_72 = arith.constant 0 : index
    %c0_73 = arith.constant 0 : index
    %95 = vector.load %arg20[%c0_72, %c0_73] : memref<1x128xf32, #tpu.memory_space<vmem>>, vector<1x128xf32>
    %96 = vector.broadcast %95 : vector<1x128xf32> to vector<128x128xf32>
    %97 = arith.addf %94, %96 : vector<128x128xf32>
    %c0_74 = arith.constant 0 : index
    %c0_75 = arith.constant 0 : index
    %98 = vector.load %arg21[%c0_74, %c0_75] : memref<128x128xf32, #tpu.memory_space<vmem>>, vector<128x128xf32>
    tpu.vector_store %arg21[%c0_74, %c0_75], %97 {strides = array<i32>} : memref<128x128xf32, #tpu.memory_space<vmem>>, vector<128x128xf32>,
    return
  }
  func.func @transform_0(%arg0: i32) -> (i32, i32) {
    %c0_i32 = arith.constant 0 : i32
    %c0_i32_0 = arith.constant 0 : i32
    return %arg0, %c0_i32 : i32, i32
  }
  func.func @transform_1(%arg0: i32) -> (i32, i32) {
    %c0_i32 = arith.constant 0 : i32
    %c0_i32_0 = arith.constant 0 : i32
    %c0_i32_1 = arith.constant 0 : i32
    return %c0_i32, %c0_i32_0 : i32, i32
  }
  func.func @transform_2(%arg0: i32) -> (i32, i32) {
    %c0_i32 = arith.constant 0 : i32
    %c0_i32_0 = arith.constant 0 : i32
    %c0_i32_1 = arith.constant 0 : i32
    return %c0_i32, %c0_i32_0 : i32, i32
  }
  func.func @transform_3(%arg0: i32) -> (i32, i32) {
    %c0_i32 = arith.constant 0 : i32
    %c0_i32_0 = arith.constant 0 : i32
    %c0_i32_1 = arith.constant 0 : i32
    return %c0_i32, %c0_i32_0 : i32, i32
  }
  func.func @transform_4(%arg0: i32) -> (i32, i32) {
    %c0_i32 = arith.constant 0 : i32
    %c0_i32_0 = arith.constant 0 : i32
    %c0_i32_1 = arith.constant 0 : i32
    return %c0_i32, %c0_i32_0 : i32, i32
  }
  func.func @transform_5(%arg0: i32) -> (i32, i32) {
    %c0_i32 = arith.constant 0 : i32
    %c0_i32_0 = arith.constant 0 : i32
    %c0_i32_1 = arith.constant 0 : i32
    return %c0_i32, %c0_i32_0 : i32, i32
  }
  func.func @transform_6(%arg0: i32) -> (i32, i32) {
    %c0_i32 = arith.constant 0 : i32
    %c0_i32_0 = arith.constant 0 : i32
    %c0_i32_1 = arith.constant 0 : i32
    return %c0_i32, %c0_i32_0 : i32, i32
  }
  func.func @transform_7(%arg0: i32) -> (i32, i32) {
    %c0_i32 = arith.constant 0 : i32
    %c0_i32_0 = arith.constant 0 : i32
    %c0_i32_1 = arith.constant 0 : i32
    return %c0_i32, %c0_i32_0 : i32, i32
  }
  func.func @transform_8(%arg0: i32) -> (i32, i32) {
    %c0_i32 = arith.constant 0 : i32
    %c0_i32_0 = arith.constant 0 : i32
    %c0_i32_1 = arith.constant 0 : i32
    return %c0_i32, %c0_i32_0 : i32, i32
  }
  func.func @transform_9(%arg0: i32) -> (i32, i32) {
    %c0_i32 = arith.constant 0 : i32
    %c0_i32_0 = arith.constant 0 : i32
    %c0_i32_1 = arith.constant 0 : i32
    return %c0_i32, %c0_i32_0 : i32, i32
  }
  func.func @transform_10(%arg0: i32) -> (i32, i32) {
    %c0_i32 = arith.constant 0 : i32
    %c0_i32_0 = arith.constant 0 : i32
    %c0_i32_1 = arith.constant 0 : i32
    return %c0_i32, %c0_i32_0 : i32, i32
  }
  func.func @transform_11(%arg0: i32) -> (i32, i32) {
    %c0_i32 = arith.constant 0 : i32
    %c0_i32_0 = arith.constant 0 : i32
    %c0_i32_1 = arith.constant 0 : i32
    return %c0_i32, %c0_i32_0 : i32, i32
  }
  func.func @transform_12(%arg0: i32) -> (i32, i32) {
    %c0_i32 = arith.constant 0 : i32
    %c0_i32_0 = arith.constant 0 : i32
    %c0_i32_1 = arith.constant 0 : i32
    return %c0_i32, %c0_i32_0 : i32, i32
  }
  func.func @transform_13(%arg0: i32) -> (i32, i32) {
    %c0_i32 = arith.constant 0 : i32
    %c0_i32_0 = arith.constant 0 : i32
    %c0_i32_1 = arith.constant 0 : i32
    return %c0_i32, %c0_i32_0 : i32, i32
  }
  func.func @transform_14(%arg0: i32) -> (i32, i32) {
    %c0_i32 = arith.constant 0 : i32
    %c0_i32_0 = arith.constant 0 : i32
    %c0_i32_1 = arith.constant 0 : i32
    return %c0_i32, %c0_i32_0 : i32, i32
  }
  func.func @transform_15(%arg0: i32) -> (i32, i32) {
    %c0_i32 = arith.constant 0 : i32
    %c0_i32_0 = arith.constant 0 : i32
    %c0_i32_1 = arith.constant 0 : i32
    return %c0_i32, %c0_i32_0 : i32, i32
  }
  func.func @transform_16(%arg0: i32) -> (i32, i32) {
    %c0_i32 = arith.constant 0 : i32
    %c0_i32_0 = arith.constant 0 : i32
    %c0_i32_1 = arith.constant 0 : i32
    return %c0_i32, %c0_i32_0 : i32, i32
  }
  func.func @transform_17(%arg0: i32) -> (i32, i32) {
    %c0_i32 = arith.constant 0 : i32
    %c0_i32_0 = arith.constant 0 : i32
    %c0_i32_1 = arith.constant 0 : i32
    return %c0_i32, %c0_i32_0 : i32, i32
  }
  func.func @transform_18(%arg0: i32) -> (i32, i32) {
    %c0_i32 = arith.constant 0 : i32
    %c0_i32_0 = arith.constant 0 : i32
    %c0_i32_1 = arith.constant 0 : i32
    return %c0_i32, %c0_i32_0 : i32, i32
  }
  func.func @transform_19(%arg0: i32) -> (i32, i32) {
    %c0_i32 = arith.constant 0 : i32
    %c0_i32_0 = arith.constant 0 : i32
    %c0_i32_1 = arith.constant 0 : i32
    return %c0_i32, %c0_i32_0 : i32, i32
  }
  func.func @transform_20(%arg0: i32) -> (i32, i32) {
    %c0_i32 = arith.constant 0 : i32
    %c0_i32_0 = arith.constant 0 : i32
    return %arg0, %c0_i32 : i32, i32
  }
}

</mosaic_0001>

<llo_original>
// kernel: tpu_custom_call.1
$region0: #{tpu_custom_call.1}
  #allocation0 [shape = 'u32[]', space=smem, size = 0x4, offset = 0x4, fixed_abs, tag = 'smem constant byte address 0x4 - core index']
  #allocation1 [shape = 'u32[144,128]{1,0:T(1,128)}', space=vmem, size = 0x12000, scoped, tag = 'internal scratch']
  #allocation2 [shape = 'bf16[128,64]{1,0:T(16,128)(2,1)}', space=vmem, size = 0x8000, scoped, tag = 'scratch operand']
  #allocation3 [shape = 'f32[2,1024]{1,0:T(2,128)}', space=vmem, size = 0x2000, scoped, tag = 'scratch operand']
  %s0 = inlined_call_operand.vmem [shape: bf16[128,8], index: 0, kind: input, shape index: {}]
  %s1 = inlined_call_operand.hbm [shape: bf16[8,64], index: 1, kind: input, shape index: {}]
  %s2 = inlined_call_operand.hbm [shape: f32[1,64], index: 2, kind: input, shape index: {}]
  %s3 = inlined_call_operand.hbm [shape: bf16[64,64], index: 3, kind: input, shape index: {}]
  %s4 = inlined_call_operand.hbm [shape: f32[1,64], index: 4, kind: input, shape index: {}]
  %s5 = inlined_call_operand.hbm [shape: bf16[64,64], index: 5, kind: input, shape index: {}]
  %s6 = inlined_call_operand.hbm [shape: f32[1,64], index: 6, kind: input, shape index: {}]
  %s7 = inlined_call_operand.hbm [shape: bf16[64,128], index: 7, kind: input, shape index: {}]
  %s8 = inlined_call_operand.hbm [shape: f32[1,128], index: 8, kind: input, shape index: {}]
  %s9 = inlined_call_operand.hbm [shape: bf16[128,1024], index: 9, kind: input, shape index: {}]
  %s10 = inlined_call_operand.hbm [shape: f32[1,1024], index: 10, kind: input, shape index: {}]
  %s11 = inlined_call_operand.hbm [shape: bf16[64,512], index: 11, kind: input, shape index: {}]
  %s12 = inlined_call_operand.hbm [shape: bf16[1024,512], index: 12, kind: input, shape index: {}]
  %s13 = inlined_call_operand.hbm [shape: f32[1,512], index: 13, kind: input, shape index: {}]
  %s14 = inlined_call_operand.hbm [shape: bf16[512,256], index: 14, kind: input, shape index: {}]
  %s15 = inlined_call_operand.hbm [shape: f32[1,256], index: 15, kind: input, shape index: {}]
  %s16 = inlined_call_operand.vmem [shape: bf16[256,128], index: 16, kind: input, shape index: {}]
  %s17 = inlined_call_operand.vmem [shape: f32[1,128], index: 17, kind: input, shape index: {}]
  %s18 = inlined_call_operand.hbm [shape: bf16[128,128], index: 18, kind: input, shape index: {}]
  %s19 = inlined_call_operand.vmem [shape: f32[1,128], index: 19, kind: input, shape index: {}]
  %s20 = inlined_call_operand.hbm [shape: f32[128,128], index: 20, kind: output, shape index: {}]
  %s21 = sld [smem:[#allocation0]]
  $region154: #{tpu_custom_call.1} parent=0
    _
  %s23 = ssub.s32 1, %s21
  %s24 = scalar_select 0, %s23, %s21
  $region1: #{tpu_custom_call.1} parent=0
    #allocation4 [shape = 'u8[2048]{0}', space=vmem, size = 0x800, scoped, tag = 'input window, operand 1, single buffered']
    #allocation5 [shape = 's32[1]{0}', space=sflag, size = 0x4, scoped, tag = 'scoped memory for tpu_custom_call.1']
    #allocation6 [shape = 's32[1]{0}', space=sflag, size = 0x4, scoped, tag = 'scoped memory for tpu_custom_call.1']
    #allocation7 [shape = 'u8[512]{0}', space=vmem, size = 0x400, scoped, tag = 'input window, operand 2, single buffered']
    #allocation8 [shape = 's32[1]{0}', space=sflag, size = 0x4, scoped, tag = 'scoped memory for tpu_custom_call.1']
    #allocation9 [shape = 'u8[16384]{0}', space=vmem, size = 0x4000, scoped, tag = 'input window, operand 3, single buffered']
    #allocation10 [shape = 'u8[512]{0}', space=vmem, size = 0x400, scoped, tag = 'input window, operand 4, single buffered']
    #allocation11 [shape = 's32[1]{0}', space=sflag, size = 0x4, scoped, tag = 'scoped memory for tpu_custom_call.1']
    #allocation12 [shape = 'u8[16384]{0}', space=vmem, size = 0x4000, scoped, tag = 'input window, operand 5, single buffered']
    #allocation13 [shape = 'u8[512]{0}', space=vmem, size = 0x400, scoped, tag = 'input window, operand 6, single buffered']
    #allocation14 [shape = 's32[1]{0}', space=sflag, size = 0x4, scoped, tag = 'scoped memory for tpu_custom_call.1']
    #allocation15 [shape = 'u8[16384]{0}', space=vmem, size = 0x4000, scoped, tag = 'input window, operand 7, single buffered']
    #allocation16 [shape = 'u8[512]{0}', space=vmem, size = 0x400, scoped, tag = 'input window, operand 8, single buffered']
    #allocation17 [shape = 's32[1]{0}', space=sflag, size = 0x4, scoped, tag = 'scoped memory for tpu_custom_call.1']
    #allocation18 [shape = 'u8[262144]{0}', space=vmem, size = 0x40000, scoped, tag = 'input window, operand 9, single buffered']
    #allocation19 [shape = 'u8[4096]{0}', space=vmem, size = 0x1000, scoped, tag = 'input window, operand 10, single buffered']
    #allocation20 [shape = 's32[1]{0}', space=sflag, size = 0x4, scoped, tag = 'scoped memory for tpu_custom_call.1']
    #allocation21 [shape = 'u8[65536]{0}', space=vmem, size = 0x10000, scoped, tag = 'input window, operand 11, single buffered']
    #allocation22 [shape = 'u8[1048576]{0}', space=vmem, size = 0x100000, scoped, tag = 'input window, operand 12, single buffered']
    #allocation23 [shape = 's32[1]{0}', space=sflag, size = 0x4, scoped, tag = 'scoped memory for tpu_custom_call.1']
    #allocation24 [shape = 'u8[2048]{0}', space=vmem, size = 0x800, scoped, tag = 'input window, operand 13, single buffered']
    #allocation25 [shape = 'u8[262144]{0}', space=vmem, size = 0x40000, scoped, tag = 'input window, operand 14, single buffered']
    #allocation26 [shape = 's32[1]{0}', space=sflag, size = 0x4, scoped, tag = 'scoped memory for tpu_custom_call.1']
    #allocation27 [shape = 'u8[1024]{0}', space=vmem, size = 0x400, scoped, tag = 'input window, operand 15, single buffered']
    #allocation28 [shape = 'u8[32768]{0}', space=vmem, size = 0x8000, scoped, tag = 'input window, operand 18, single buffered']
    #allocation29 [shape = 's32[1]{0}', space=sflag, size = 0x4, scoped, tag = 'scoped memory for tpu_custom_call.1']
    #allocation30 [shape = 'u8[65536]{0}', space=vmem, size = 0x10000, scoped, tag = 'output window, operand 0, single buffered']
    %25 = vsyncpa [#allocation5], 0
    %26 = vsyncpa [#allocation8], 0
    %27 = vsyncpa [#allocation11], 0
    %28 = vsyncpa [#allocation14], 0
    %29 = vsyncpa [#allocation17], 0
    %30 = vsyncpa [#allocation20], 0
    %31 = vsyncpa [#allocation23], 0
    %32 = vsyncpa [#allocation26], 0
    %33 = vsyncpa [#allocation29], 0
    %34 = vsyncpa [#allocation6], 0
    // Predicated region
    $region2: #{tpu_custom_call.1} parent=1 // pred_check
      _
    $region3: #{tpu_custom_call.1} parent=1 // pred_check_branch
      %36 = sbr.rel (0) target = $region5
    $region4: #{tpu_custom_call.1} parent=1 // pred_region
      _
    $region5: #{tpu_custom_call.1} parent=1 // pred_fallthru
      _
    // Predicated region
    $region6: #{tpu_custom_call.1} parent=1 // pred_check
      _
    $region7: #{tpu_custom_call.1} parent=1 // pred_check_branch
      %38 = sbr.rel (0) target = $region9
    $region8: #{tpu_custom_call.1} parent=1 // pred_region
      %s40 = ssub.s32 64, 64
      %41 = vsyncadd [#allocation5], %s40
      %s43 = sshll.u32 [#allocation4], 4
      %s44 = int_to_ptr.vmem [resolvable:$true] %s43
      %46 = dma.hbm_to_vmem [thread:$0]  %s1, 64, %s44, [#allocation5]
    $region9: #{tpu_custom_call.1} parent=1 // pred_fallthru
      _
    // Predicated region
    $region10: #{tpu_custom_call.1} parent=1 // pred_check
      _
    $region11: #{tpu_custom_call.1} parent=1 // pred_check_branch
      %48 = sbr.rel (0) target = $region13
    $region12: #{tpu_custom_call.1} parent=1 // pred_region
      %s50 = ssub.s32 16, 16
      %51 = vsyncadd [#allocation8], %s50
      %s53 = sshll.u32 [#allocation7], 4
      %s54 = int_to_ptr.vmem [resolvable:$true] %s53
      %56 = dma.hbm_to_vmem [thread:$0]  %s2, 16, %s54, [#allocation8]
    $region13: #{tpu_custom_call.1} parent=1 // pred_fallthru
      _
    // Predicated region
    $region14: #{tpu_custom_call.1} parent=1 // pred_check
      _
    $region15: #{tpu_custom_call.1} parent=1 // pred_check_branch
      %58 = sbr.rel (0) target = $region17
    $region16: #{tpu_custom_call.1} parent=1 // pred_region
      %s60 = ssub.s32 512, 512
      %61 = vsyncadd [#allocation8], %s60
      %s62 = sshll.u32 [#allocation9], 4
      %s63 = int_to_ptr.vmem [resolvable:$true] %s62
      %68 = dma.hbm_to_vmem [thread:$0]  %s3, 512, %s63, [#allocation8], 64, 64, 4
    $region17: #{tpu_custom_call.1} parent=1 // pred_fallthru
      _
    // Predicated region
    $region18: #{tpu_custom_call.1} parent=1 // pred_check
      _
    $region19: #{tpu_custom_call.1} parent=1 // pred_check_branch
      %70 = sbr.rel (0) target = $region21
    $region20: #{tpu_custom_call.1} parent=1 // pred_region
      %s72 = ssub.s32 16, 16
      %73 = vsyncadd [#allocation11], %s72
      %s75 = sshll.u32 [#allocation10], 4
      %s76 = int_to_ptr.vmem [resolvable:$true] %s75
      %78 = dma.hbm_to_vmem [thread:$0]  %s4, 16, %s76, [#allocation11]
    $region21: #{tpu_custom_call.1} parent=1 // pred_fallthru
      _
    // Predicated region
    $region22: #{tpu_custom_call.1} parent=1 // pred_check
      _
    $region23: #{tpu_custom_call.1} parent=1 // pred_check_branch
      %80 = sbr.rel (0) target = $region25
    $region24: #{tpu_custom_call.1} parent=1 // pred_region
      %s82 = ssub.s32 512, 512
      %83 = vsyncadd [#allocation11], %s82
      %s84 = sshll.u32 [#allocation12], 4
      %s85 = int_to_ptr.vmem [resolvable:$true] %s84
      %90 = dma.hbm_to_vmem [thread:$0]  %s5, 512, %s85, [#allocation11], 64, 64, 4
    $region25: #{tpu_custom_call.1} parent=1 // pred_fallthru
      _
    // Predicated region
    $region26: #{tpu_custom_call.1} parent=1 // pred_check
      _
    $region27: #{tpu_custom_call.1} parent=1 // pred_check_branch
      %92 = sbr.rel (0) target = $region29
    $region28: #{tpu_custom_call.1} parent=1 // pred_region
      %s94 = ssub.s32 16, 16
      %95 = vsyncadd [#allocation14], %s94
      %s97 = sshll.u32 [#allocation13], 4
      %s98 = int_to_ptr.vmem [resolvable:$true] %s97
      %100 = dma.hbm_to_vmem [thread:$0]  %s6, 16, %s98, [#allocation14]
    $region29: #{tpu_custom_call.1} parent=1 // pred_fallthru
      _
    // Predicated region
    $region30: #{tpu_custom_call.1} parent=1 // pred_check
      _
    $region31: #{tpu_custom_call.1} parent=1 // pred_check_branch
      %102 = sbr.rel (0) target = $region33
    $region32: #{tpu_custom_call.1} parent=1 // pred_region
      %s104 = ssub.s32 512, 512
      %105 = vsyncadd [#allocation14], %s104
      %s106 = sshll.u32 [#allocation15], 4
      %s107 = int_to_ptr.vmem [resolvable:$true] %s106
      %112 = dma.hbm_to_vmem [thread:$0]  %s7, 512, %s107, [#allocation14], 64, 64, 4
    $region33: #{tpu_custom_call.1} parent=1 // pred_fallthru
      _
    // Predicated region
    $region34: #{tpu_custom_call.1} parent=1 // pred_check
      _
    $region35: #{tpu_custom_call.1} parent=1 // pred_check_branch
      %114 = sbr.rel (0) target = $region37
    $region36: #{tpu_custom_call.1} parent=1 // pred_region
      %s116 = ssub.s32 16, 16
      %117 = vsyncadd [#allocation17], %s116
      %s119 = sshll.u32 [#allocation16], 4
      %s120 = int_to_ptr.vmem [resolvable:$true] %s119
      %122 = dma.hbm_to_vmem [thread:$0]  %s8, 16, %s120, [#allocation17]
    $region37: #{tpu_custom_call.1} parent=1 // pred_fallthru
      _
    // Predicated region
    $region38: #{tpu_custom_call.1} parent=1 // pred_check
      _
    $region39: #{tpu_custom_call.1} parent=1 // pred_check_branch
      %124 = sbr.rel (0) target = $region41
    $region40: #{tpu_custom_call.1} parent=1 // pred_region
      %s126 = ssub.s32 8192, 8192
      %127 = vsyncadd [#allocation17], %s126
      %s128 = sshll.u32 [#allocation18], 4
      %s129 = int_to_ptr.vmem [resolvable:$true] %s128
      %134 = dma.hbm_to_vmem [thread:$0]  %s9, 8192, %s129, [#allocation17], 512, 512, 32
    $region41: #{tpu_custom_call.1} parent=1 // pred_fallthru
      _
    // Predicated region
    $region42: #{tpu_custom_call.1} parent=1 // pred_check
      _
    $region43: #{tpu_custom_call.1} parent=1 // pred_check_branch
      %136 = sbr.rel (0) target = $region45
    $region44: #{tpu_custom_call.1} parent=1 // pred_region
      %s138 = ssub.s32 128, 128
      %139 = vsyncadd [#allocation20], %s138
      %s141 = sshll.u32 [#allocation19], 4
      %s142 = int_to_ptr.vmem [resolvable:$true] %s141
      %144 = dma.hbm_to_vmem [thread:$0]  %s10, 128, %s142, [#allocation20]
    $region45: #{tpu_custom_call.1} parent=1 // pred_fallthru
      _
    // Predicated region
    $region46: #{tpu_custom_call.1} parent=1 // pred_check
      _
    $region47: #{tpu_custom_call.1} parent=1 // pred_check_branch
      %146 = sbr.rel (0) target = $region49
    $region48: #{tpu_custom_call.1} parent=1 // pred_region
      %s148 = ssub.s32 2048, 2048
      %149 = vsyncadd [#allocation20], %s148
      %s150 = sshll.u32 [#allocation21], 4
      %s151 = int_to_ptr.vmem [resolvable:$true] %s150
      %156 = dma.hbm_to_vmem [thread:$0]  %s11, 2048, %s151, [#allocation20], 256, 256, 16
    $region49: #{tpu_custom_call.1} parent=1 // pred_fallthru
      _
    // Predicated region
    $region50: #{tpu_custom_call.1} parent=1 // pred_check
      _
    $region51: #{tpu_custom_call.1} parent=1 // pred_check_branch
      %158 = sbr.rel (0) target = $region53
    $region52: #{tpu_custom_call.1} parent=1 // pred_region
      %s160 = ssub.s32 32768, 32768
      %161 = vsyncadd [#allocation23], %s160
      %s162 = sshll.u32 [#allocation22], 4
      %s163 = int_to_ptr.vmem [resolvable:$true] %s162
      %168 = dma.hbm_to_vmem [thread:$0]  %s12, 32768, %s163, [#allocation23], 256, 256, 16
    $region53: #{tpu_custom_call.1} parent=1 // pred_fallthru
      _
    // Predicated region
    $region54: #{tpu_custom_call.1} parent=1 // pred_check
      _
    $region55: #{tpu_custom_call.1} parent=1 // pred_check_branch
      %170 = sbr.rel (0) target = $region57
    $region56: #{tpu_custom_call.1} parent=1 // pred_region
      %s172 = ssub.s32 64, 64
      %173 = vsyncadd [#allocation23], %s172
      %s175 = sshll.u32 [#allocation24], 4
      %s176 = int_to_ptr.vmem [resolvable:$true] %s175
      %178 = dma.hbm_to_vmem [thread:$0]  %s13, 64, %s176, [#allocation23]
    $region57: #{tpu_custom_call.1} parent=1 // pred_fallthru
      _
    // Predicated region
    $region58: #{tpu_custom_call.1} parent=1 // pred_check
      _
    $region59: #{tpu_custom_call.1} parent=1 // pred_check_branch
      %180 = sbr.rel (0) target = $region61
    $region60: #{tpu_custom_call.1} parent=1 // pred_region
      %s182 = ssub.s32 8192, 8192
      %183 = vsyncadd [#allocation26], %s182
      %s184 = sshll.u32 [#allocation25], 4
      %s185 = int_to_ptr.vmem [resolvable:$true] %s184
      %190 = dma.hbm_to_vmem [thread:$0]  %s14, 8192, %s185, [#allocation26], 128, 128, 8
    $region61: #{tpu_custom_call.1} parent=1 // pred_fallthru
      _
    // Predicated region
    $region62: #{tpu_custom_call.1} parent=1 // pred_check
      _
    $region63: #{tpu_custom_call.1} parent=1 // pred_check_branch
      %192 = sbr.rel (0) target = $region65
    $region64: #{tpu_custom_call.1} parent=1 // pred_region
      %s194 = ssub.s32 32, 32
      %195 = vsyncadd [#allocation26], %s194
      %s197 = sshll.u32 [#allocation27], 4
      %s198 = int_to_ptr.vmem [resolvable:$true] %s197
      %200 = dma.hbm_to_vmem [thread:$0]  %s15, 32, %s198, [#allocation26]
    $region65: #{tpu_custom_call.1} parent=1 // pred_fallthru
      _
    // Predicated region
    $region66: #{tpu_custom_call.1} parent=1 // pred_check
      _
    $region67: #{tpu_custom_call.1} parent=1 // pred_check_branch
      %202 = sbr.rel (0) target = $region69
    $region68: #{tpu_custom_call.1} parent=1 // pred_region
      _
    $region69: #{tpu_custom_call.1} parent=1 // pred_fallthru
      _
    // Predicated region
    $region70: #{tpu_custom_call.1} parent=1 // pred_check
      _
    $region71: #{tpu_custom_call.1} parent=1 // pred_check_branch
      %204 = sbr.rel (0) target = $region73
    $region72: #{tpu_custom_call.1} parent=1 // pred_region
      _
    $region73: #{tpu_custom_call.1} parent=1 // pred_fallthru
      _
    // Predicated region
    $region74: #{tpu_custom_call.1} parent=1 // pred_check
      _
    $region75: #{tpu_custom_call.1} parent=1 // pred_check_branch
      %206 = sbr.rel (0) target = $region77
    $region76: #{tpu_custom_call.1} parent=1 // pred_region
      %s208 = ssub.s32 1024, 1024
      %209 = vsyncadd [#allocation29], %s208
      %s210 = sshll.u32 [#allocation28], 4
      %s211 = int_to_ptr.vmem [resolvable:$true] %s210
      %216 = dma.hbm_to_vmem [thread:$0]  %s18, 1024, %s211, [#allocation29], 64, 64, 4
    $region77: #{tpu_custom_call.1} parent=1 // pred_fallthru
      _
    // Predicated region
    $region78: #{tpu_custom_call.1} parent=1 // pred_check
      _
    $region79: #{tpu_custom_call.1} parent=1 // pred_check_branch
      %218 = sbr.rel (0) target = $region81
    $region80: #{tpu_custom_call.1} parent=1 // pred_region
      _
    $region81: #{tpu_custom_call.1} parent=1 // pred_fallthru
      _
    // Predicated region
    $region82: #{tpu_custom_call.1} parent=1 // pred_check
      _
    $region83: #{tpu_custom_call.1} parent=1 // pred_check_branch
      %220 = sbr.rel (0) target = $region85
    $region84: #{tpu_custom_call.1} parent=1 // pred_region
      %221 = dma.done [#allocation5], 64
    $region85: #{tpu_custom_call.1} parent=1 // pred_fallthru
      _
    // Predicated region
    $region86: #{tpu_custom_call.1} parent=1 // pred_check
      _
    $region87: #{tpu_custom_call.1} parent=1 // pred_check_branch
      %223 = sbr.rel (0) target = $region89
    $region88: #{tpu_custom_call.1} parent=1 // pred_region
      %224 = dma.done [#allocation8], 16
    $region89: #{tpu_custom_call.1} parent=1 // pred_fallthru
      _
    // Predicated region
    $region90: #{tpu_custom_call.1} parent=1 // pred_check
      _
    $region91: #{tpu_custom_call.1} parent=1 // pred_check_branch
      %226 = sbr.rel (0) target = $region93
    $region92: #{tpu_custom_call.1} parent=1 // pred_region
      %227 = dma.done [#allocation8], 512
    $region93: #{tpu_custom_call.1} parent=1 // pred_fallthru
      _
    // Predicated region
    $region94: #{tpu_custom_call.1} parent=1 // pred_check
      _
    $region95: #{tpu_custom_call.1} parent=1 // pred_check_branch
      %229 = sbr.rel (0) target = $region97
    $region96: #{tpu_custom_call.1} parent=1 // pred_region
      %230 = dma.done [#allocation11], 16
    $region97: #{tpu_custom_call.1} parent=1 // pred_fallthru
      _
    // Predicated region
    $region98: #{tpu_custom_call.1} parent=1 // pred_check
      _
    $region99: #{tpu_custom_call.1} parent=1 // pred_check_branch
      %232 = sbr.rel (0) target = $region101
    $region100: #{tpu_custom_call.1} parent=1 // pred_region
      %233 = dma.done [#allocation11], 512
    $region101: #{tpu_custom_call.1} parent=1 // pred_fallthru
      _
    // Predicated region
    $region102: #{tpu_custom_call.1} parent=1 // pred_check
      _
    $region103: #{tpu_custom_call.1} parent=1 // pred_check_branch
      %235 = sbr.rel (0) target = $region105
    $region104: #{tpu_custom_call.1} parent=1 // pred_region
      %236 = dma.done [#allocation14], 16
    $region105: #{tpu_custom_call.1} parent=1 // pred_fallthru
      _
    // Predicated region
    $region106: #{tpu_custom_call.1} parent=1 // pred_check
      _
    $region107: #{tpu_custom_call.1} parent=1 // pred_check_branch
      %238 = sbr.rel (0) target = $region109
    $region108: #{tpu_custom_call.1} parent=1 // pred_region
      %239 = dma.done [#allocation14], 512
    $region109: #{tpu_custom_call.1} parent=1 // pred_fallthru
      _
    // Predicated region
    $region110: #{tpu_custom_call.1} parent=1 // pred_check
      _
    $region111: #{tpu_custom_call.1} parent=1 // pred_check_branch
      %241 = sbr.rel (0) target = $region113
    $region112: #{tpu_custom_call.1} parent=1 // pred_region
      %242 = dma.done [#allocation17], 16
    $region113: #{tpu_custom_call.1} parent=1 // pred_fallthru
      _
    // Predicated region
    $region114: #{tpu_custom_call.1} parent=1 // pred_check
      _
    $region115: #{tpu_custom_call.1} parent=1 // pred_check_branch
      %244 = sbr.rel (0) target = $region117
    $region116: #{tpu_custom_call.1} parent=1 // pred_region
      %245 = dma.done [#allocation17], 8192
    $region117: #{tpu_custom_call.1} parent=1 // pred_fallthru
      _
    // Predicated region
    $region118: #{tpu_custom_call.1} parent=1 // pred_check
      _
    $region119: #{tpu_custom_call.1} parent=1 // pred_check_branch
      %247 = sbr.rel (0) target = $region121
    $region120: #{tpu_custom_call.1} parent=1 // pred_region
      %248 = dma.done [#allocation20], 128
    $region121: #{tpu_custom_call.1} parent=1 // pred_fallthru
      _
    // Predicated region
    $region122: #{tpu_custom_call.1} parent=1 // pred_check
      _
    $region123: #{tpu_custom_call.1} parent=1 // pred_check_branch
      %250 = sbr.rel (0) target = $region125
    $region124: #{tpu_custom_call.1} parent=1 // pred_region
      %251 = dma.done [#allocation20], 2048
    $region125: #{tpu_custom_call.1} parent=1 // pred_fallthru
      _
    // Predicated region
    $region126: #{tpu_custom_call.1} parent=1 // pred_check
      _
    $region127: #{tpu_custom_call.1} parent=1 // pred_check_branch
      %253 = sbr.rel (0) target = $region129
    $region128: #{tpu_custom_call.1} parent=1 // pred_region
      %254 = dma.done [#allocation23], 32768
    $region129: #{tpu_custom_call.1} parent=1 // pred_fallthru
      _
    // Predicated region
    $region130: #{tpu_custom_call.1} parent=1 // pred_check
      _
    $region131: #{tpu_custom_call.1} parent=1 // pred_check_branch
      %256 = sbr.rel (0) target = $region133
    $region132: #{tpu_custom_call.1} parent=1 // pred_region
      %257 = dma.done [#allocation23], 64
    $region133: #{tpu_custom_call.1} parent=1 // pred_fallthru
      _
    // Predicated region
    $region134: #{tpu_custom_call.1} parent=1 // pred_check
      _
    $region135: #{tpu_custom_call.1} parent=1 // pred_check_branch
      %259 = sbr.rel (0) target = $region137
    $region136: #{tpu_custom_call.1} parent=1 // pred_region
      %260 = dma.done [#allocation26], 8192
    $region137: #{tpu_custom_call.1} parent=1 // pred_fallthru
      _
    // Predicated region
    $region138: #{tpu_custom_call.1} parent=1 // pred_check
      _
    $region139: #{tpu_custom_call.1} parent=1 // pred_check_branch
      %262 = sbr.rel (0) target = $region141
    $region140: #{tpu_custom_call.1} parent=1 // pred_region
      %263 = dma.done [#allocation26], 32
    $region141: #{tpu_custom_call.1} parent=1 // pred_fallthru
      _
    // Predicated region
    $region142: #{tpu_custom_call.1} parent=1 // pred_check
      _
    $region143: #{tpu_custom_call.1} parent=1 // pred_check_branch
      %265 = sbr.rel (0) target = $region145
    $region144: #{tpu_custom_call.1} parent=1 // pred_region
      %266 = dma.done [#allocation29], 1024
    $region145: #{tpu_custom_call.1} parent=1 // pred_fallthru
      _
    %268 = vst [vmem:[#allocation3] sm:$0xff] 0.0
    %269 = vst [vmem:[#allocation3 + $0x8] sm:$0xff] 0.0
    %v270 = vld [vmem:[%s0] sm:$0xf]
    %v271 = vld [vmem:[%s0 + $0x4] sm:$0xf]
    %v272 = vld [vmem:[%s0 + $0x8] sm:$0xf]
    %v273 = vld [vmem:[%s0 + $0xc] sm:$0xf]
    %v274 = vld [vmem:[%s0 + $0x10] sm:$0xf]
    %v275 = vld [vmem:[%s0 + $0x14] sm:$0xf]
    %v276 = vld [vmem:[%s0 + $0x18] sm:$0xf]
    %v277 = vld [vmem:[%s0 + $0x1c] sm:$0xf]
    %v278 = vld [vmem:[%s0 + $0x20] sm:$0xf]
    %v279 = vld [vmem:[%s0 + $0x24] sm:$0xf]
    %v280 = vld [vmem:[%s0 + $0x28] sm:$0xf]
    %v281 = vld [vmem:[%s0 + $0x2c] sm:$0xf]
    %v282 = vld [vmem:[%s0 + $0x30] sm:$0xf]
    %v283 = vld [vmem:[%s0 + $0x34] sm:$0xf]
    %v284 = vld [vmem:[%s0 + $0x38] sm:$0xf]
    %v285 = vld [vmem:[%s0 + $0x3c] sm:$0xf]
    %v286 = vld [vmem:[#allocation4] sm:$0xf]
    %v287 = vld [vmem:[#allocation7] sm:$0x1]
    %v289 = vlaneseq
    %v290 = vshrl.u32 %v289, 7
    %v291 = vsub.s32 0, %v290
    %v292 = vrot.slane %v287, %v291
    %v310 = vunpack.c.l.b16 %v270
    %v311 = vunpack.c.l.b16 %v271
    %v312 = vunpack.c.l.b16 %v272
    %v313 = vunpack.c.l.b16 %v273
    %v314 = vunpack.c.l.b16 %v274
    %v315 = vunpack.c.l.b16 %v275
    %v316 = vunpack.c.l.b16 %v276
    %v317 = vunpack.c.l.b16 %v277
    %v318 = vunpack.c.l.b16 %v278
    %v319 = vunpack.c.l.b16 %v279
    %v320 = vunpack.c.l.b16 %v280
    %v321 = vunpack.c.l.b16 %v281
    %v322 = vunpack.c.l.b16 %v282
    %v323 = vunpack.c.l.b16 %v283
    %v324 = vunpack.c.l.b16 %v284
    %v325 = vunpack.c.l.b16 %v285
    %v326 = vpack.c.b16 %v311, %v310
    %v327 = vpack.c.b16 %v313, %v312
    %v328 = vpack.c.b16 %v315, %v314
    %v329 = vpack.c.b16 %v317, %v316
    %v330 = vpack.c.b16 %v319, %v318
    %v331 = vpack.c.b16 %v321, %v320
    %v332 = vpack.c.b16 %v323, %v322
    %v333 = vpack.c.b16 %v325, %v324
    %vm334 = vcmask 64512
    %v336 = vsel %vm334, %v326, 0
    %v339 = vsel %vm334, %v327, 0
    %v342 = vsel %vm334, %v328, 0
    %v345 = vsel %vm334, %v329, 0
    %v348 = vsel %vm334, %v330, 0
    %v351 = vsel %vm334, %v331, 0
    %v354 = vsel %vm334, %v332, 0
    %v357 = vsel %vm334, %v333, 0
    %vm359 = vcmask 1043456
    %v361 = vsel %vm359, %v286, 0
    %363 = vmatprep.subr.bf16.mxu0 0
    %364 = vmatpush1.bf16.msra.mxu0 %v361
    %365 = vmatprep.subr.bf16.mxu0 0
    %366 = vmatpush1.bf16.msra.mxu0 0
    %367 = vmatprep.subr.bf16.mxu0 0
    %368 = vmatpush1.bf16.msra.mxu0 0
    %369 = vmatprep.subr.bf16.mxu0 0
    %370 = vmatpush1.bf16.msra.mxu0 0
    %371 = vmatprep.subr.bf16.mxu0 0
    %372 = vmatpush1.bf16.msra.mxu0 0
    %373 = vmatprep.subr.bf16.mxu0 0
    %374 = vmatpush1.bf16.msra.mxu0 0
    %375 = vmatprep.subr.bf16.mxu0 0
    %376 = vmatpush1.bf16.msra.mxu0 0
    %377 = vmatprep.subr.bf16.mxu0 0
    %378 = vmatpush1.bf16.msra.mxu0 0
    %379 = vmatprep.subr.bf16.mxu0 0
    %380 = vmatpush1.bf16.msra.mxu0 0
    %381 = vmatprep.subr.bf16.mxu0 0
    %382 = vmatpush1.bf16.msra.mxu0 0
    %383 = vmatprep.subr.bf16.mxu0 0
    %384 = vmatpush1.bf16.msra.mxu0 0
    %385 = vmatprep.subr.bf16.mxu0 0
    %386 = vmatpush1.bf16.msra.mxu0 0
    %387 = vmatprep.subr.bf16.mxu0 0
    %388 = vmatpush1.bf16.msra.mxu0 0
    %389 = vmatprep.subr.bf16.mxu0 0
    %390 = vmatpush1.bf16.msra.mxu0 0
    %391 = vmatprep.subr.bf16.mxu0 0
    %392 = vmatpush1.bf16.msra.mxu0 0
    %393 = vmatprep.subr.bf16.mxu0 0
    %394 = vmatpush1.bf16.msra.mxu0 0
    %395 = vmatprep.mubr.bf16.mxu0 0
    %396 = vmatmul.mubr.bf16.gmra.mrb[0].mxu0 %v336
    %v397 = vpop.f32.mrb[0].mxu0
    %v398 = vadd.f32 %v292, %v397
    %v399 = vpop.f32.mrb[0].mxu0
    %v400 = vpop.f32.mrb[0].mxu0
    %v401 = vadd.f32 %v292, %v400
    %v402 = vpop.f32.mrb[0].mxu0
    %403 = vmatprep.mubr.bf16.mxu0 0
    %404 = vmatmul.mubr.bf16.gmra.mrb[0].mxu0 %v339
    %v405 = vpop.f32.mrb[0].mxu0
    %v406 = vadd.f32 %v292, %v405
    %v407 = vpop.f32.mrb[0].mxu0
    %v408 = vpop.f32.mrb[0].mxu0
    %v409 = vadd.f32 %v292, %v408
    %v410 = vpop.f32.mrb[0].mxu0
    %411 = vmatprep.mubr.bf16.mxu0 0
    %412 = vmatmul.mubr.bf16.gmra.mrb[0].mxu0 %v342
    %v413 = vpop.f32.mrb[0].mxu0
    %v414 = vadd.f32 %v292, %v413
    %v415 = vpop.f32.mrb[0].mxu0
    %v416 = vpop.f32.mrb[0].mxu0
    %v417 = vadd.f32 %v292, %v416
    %v418 = vpop.f32.mrb[0].mxu0
    %419 = vmatprep.mubr.bf16.mxu0 0
    %420 = vmatmul.mubr.bf16.gmra.mrb[0].mxu0 %v345
    %v421 = vpop.f32.mrb[0].mxu0
    %v422 = vadd.f32 %v292, %v421
    %v423 = vpop.f32.mrb[0].mxu0
    %v424 = vpop.f32.mrb[0].mxu0
    %v425 = vadd.f32 %v292, %v424
    %v426 = vpop.f32.mrb[0].mxu0
    %427 = vmatprep.mubr.bf16.mxu0 0
    %428 = vmatmul.mubr.bf16.gmra.mrb[0].mxu0 %v348
    %v429 = vpop.f32.mrb[0].mxu0
    %v430 = vadd.f32 %v292, %v429
    %v431 = vpop.f32.mrb[0].mxu0
    %v432 = vpop.f32.mrb[0].mxu0
    %v433 = vadd.f32 %v292, %v432
    %v434 = vpop.f32.mrb[0].mxu0
    %435 = vmatprep.mubr.bf16.mxu0 0
    %436 = vmatmul.mubr.bf16.gmra.mrb[0].mxu0 %v351
    %v437 = vpop.f32.mrb[0].mxu0
    %v438 = vadd.f32 %v292, %v437
    %v439 = vpop.f32.mrb[0].mxu0
    %v440 = vpop.f32.mrb[0].mxu0
    %v441 = vadd.f32 %v292, %v440
    %v442 = vpop.f32.mrb[0].mxu0
    %443 = vmatprep.mubr.bf16.mxu0 0
    %444 = vmatmul.mubr.bf16.gmra.mrb[0].mxu0 %v354
    %v445 = vpop.f32.mrb[0].mxu0
    %v446 = vadd.f32 %v292, %v445
    %v447 = vpop.f32.mrb[0].mxu0
    %v448 = vpop.f32.mrb[0].mxu0
    %v449 = vadd.f32 %v292, %v448
    %v450 = vpop.f32.mrb[0].mxu0
    %451 = vmatprep.mubr.bf16.mxu0 0
    %452 = vmatmul.mubr.bf16.gmra.mrb[0].mxu0 %v357
    %v453 = vpop.f32.mrb[0].mxu0
    %v454 = vadd.f32 %v292, %v453
    %v455 = vpop.f32.mrb[0].mxu0
    %v456 = vpop.f32.mrb[0].mxu0
    %v457 = vadd.f32 %v292, %v456
    %v458 = vpop.f32.mrb[0].mxu0
    %459 = vdwg.mxu0
    %v460 = vmax.f32 %v398, 0.0
    %v461 = vmax.f32 %v401, 0.0
    %v462 = vmax.f32 %v406, 0.0
    %v463 = vmax.f32 %v409, 0.0
    %v464 = vmax.f32 %v414, 0.0
    %v465 = vmax.f32 %v417, 0.0
    %v466 = vmax.f32 %v422, 0.0
    %v467 = vmax.f32 %v425, 0.0
    %v468 = vmax.f32 %v430, 0.0
    %v469 = vmax.f32 %v433, 0.0
    %v470 = vmax.f32 %v438, 0.0
    %v471 = vmax.f32 %v441, 0.0
    %v472 = vmax.f32 %v446, 0.0
    %v473 = vmax.f32 %v449, 0.0
    %v474 = vmax.f32 %v454, 0.0
    %v475 = vmax.f32 %v457, 0.0
    %v476 = vpack.c.bf16 %v461, %v460
    %v477 = vpack.c.bf16 %v463, %v462
    %v478 = vpack.c.bf16 %v465, %v464
    %v479 = vpack.c.bf16 %v467, %v466
    %v480 = vpack.c.bf16 %v469, %v468
    %v481 = vpack.c.bf16 %v471, %v470
    %v482 = vpack.c.bf16 %v473, %v472
    %v483 = vpack.c.bf16 %v475, %v474
    %v484 = vld [vmem:[#allocation9] sm:$0xf]
    %v485 = vld [vmem:[#allocation9 + $0x4] sm:$0xf]
    %v486 = vld [vmem:[#allocation9 + $0x8] sm:$0xf]
    %v487 = vld [vmem:[#allocation9 + $0xc] sm:$0xf]
    %v488 = vld [vmem:[#allocation9 + $0x10] sm:$0xf]
    %v489 = vld [vmem:[#allocation9 + $0x14] sm:$0xf]
    %v490 = vld [vmem:[#allocation9 + $0x18] sm:$0xf]
    %v491 = vld [vmem:[#allocation9 + $0x1c] sm:$0xf]
    %v492 = vld [vmem:[#allocation10] sm:$0x1]
    %v494 = vlaneseq
    %v495 = vshrl.u32 %v494, 7
    %v496 = vsub.s32 0, %v495
    %v497 = vrot.slane %v492, %v496
    %v507 = vunpack.c.l.b16 %v484
    %v508 = vunpack.c.l.b16 %v485
    %v509 = vunpack.c.l.b16 %v486
    %v510 = vunpack.c.l.b16 %v487
    %v511 = vunpack.c.l.b16 %v488
    %v512 = vunpack.c.l.b16 %v489
    %v513 = vunpack.c.l.b16 %v490
    %v514 = vunpack.c.l.b16 %v491
    %v515 = vpack.c.b16 %v508, %v507
    %v516 = vpack.c.b16 %v510, %v509
    %v517 = vpack.c.b16 %v512, %v511
    %v518 = vpack.c.b16 %v514, %v513
    %vm523 = vcmask 523264
    %v525 = vsel %vm523, %v476, 0
    %v528 = vsel %vm523, %v477, 0
    %v531 = vsel %vm523, %v478, 0
    %v534 = vsel %vm523, %v479, 0
    %v537 = vsel %vm523, %v480, 0
    %v540 = vsel %vm523, %v481, 0
    %v543 = vsel %vm523, %v482, 0
    %v546 = vsel %vm523, %v483, 0
    %548 = vmatprep.subr.bf16.mxu0 0
    %549 = vmatpush1.bf16.msra.mxu0 %v515
    %550 = vmatprep.subr.bf16.mxu0 0
    %551 = vmatpush1.bf16.msra.mxu0 %v516
    %552 = vmatprep.subr.bf16.mxu0 0
    %553 = vmatpush1.bf16.msra.mxu0 %v517
    %554 = vmatprep.subr.bf16.mxu0 0
    %555 = vmatpush1.bf16.msra.mxu0 %v518
    %556 = vmatprep.subr.bf16.mxu0 0
    %557 = vmatpush1.bf16.msra.mxu0 0
    %558 = vmatprep.subr.bf16.mxu0 0
    %559 = vmatpush1.bf16.msra.mxu0 0
    %560 = vmatprep.subr.bf16.mxu0 0
    %561 = vmatpush1.bf16.msra.mxu0 0
    %562 = vmatprep.subr.bf16.mxu0 0
    %563 = vmatpush1.bf16.msra.mxu0 0
    %564 = vmatprep.subr.bf16.mxu0 0
    %565 = vmatpush1.bf16.msra.mxu0 0
    %566 = vmatprep.subr.bf16.mxu0 0
    %567 = vmatpush1.bf16.msra.mxu0 0
    %568 = vmatprep.subr.bf16.mxu0 0
    %569 = vmatpush1.bf16.msra.mxu0 0
    %570 = vmatprep.subr.bf16.mxu0 0
    %571 = vmatpush1.bf16.msra.mxu0 0
    %572 = vmatprep.subr.bf16.mxu0 0
    %573 = vmatpush1.bf16.msra.mxu0 0
    %574 = vmatprep.subr.bf16.mxu0 0
    %575 = vmatpush1.bf16.msra.mxu0 0
    %576 = vmatprep.subr.bf16.mxu0 0
    %577 = vmatpush1.bf16.msra.mxu0 0
    %578 = vmatprep.subr.bf16.mxu0 0
    %579 = vmatpush1.bf16.msra.mxu0 0
    %580 = vmatprep.mubr.bf16.mxu0 0
    %581 = vmatmul.mubr.bf16.gmra.mrb[0].mxu0 %v525
    %v582 = vpop.f32.mrb[0].mxu0
    %v583 = vadd.f32 %v497, %v582
    %v584 = vpop.f32.mrb[0].mxu0
    %v585 = vpop.f32.mrb[0].mxu0
    %v586 = vadd.f32 %v497, %v585
    %v587 = vpop.f32.mrb[0].mxu0
    %588 = vmatprep.mubr.bf16.mxu0 0
    %589 = vmatmul.mubr.bf16.gmra.mrb[0].mxu0 %v528
    %v590 = vpop.f32.mrb[0].mxu0
    %v591 = vadd.f32 %v497, %v590
    %v592 = vpop.f32.mrb[0].mxu0
    %v593 = vpop.f32.mrb[0].mxu0
    %v594 = vadd.f32 %v497, %v593
    %v595 = vpop.f32.mrb[0].mxu0
    %596 = vmatprep.mubr.bf16.mxu0 0
    %597 = vmatmul.mubr.bf16.gmra.mrb[0].mxu0 %v531
    %v598 = vpop.f32.mrb[0].mxu0
    %v599 = vadd.f32 %v497, %v598
    %v600 = vpop.f32.mrb[0].mxu0
    %v601 = vpop.f32.mrb[0].mxu0
    %v602 = vadd.f32 %v497, %v601
    %v603 = vpop.f32.mrb[0].mxu0
    %604 = vmatprep.mubr.bf16.mxu0 0
    %605 = vmatmul.mubr.bf16.gmra.mrb[0].mxu0 %v534
    %v606 = vpop.f32.mrb[0].mxu0
    %v607 = vadd.f32 %v497, %v606
    %v608 = vpop.f32.mrb[0].mxu0
    %v609 = vpop.f32.mrb[0].mxu0
    %v610 = vadd.f32 %v497, %v609
    %v611 = vpop.f32.mrb[0].mxu0
    %612 = vmatprep.mubr.bf16.mxu0 0
    %613 = vmatmul.mubr.bf16.gmra.mrb[0].mxu0 %v537
    %v614 = vpop.f32.mrb[0].mxu0
    %v615 = vadd.f32 %v497, %v614
    %v616 = vpop.f32.mrb[0].mxu0
    %v617 = vpop.f32.mrb[0].mxu0
    %v618 = vadd.f32 %v497, %v617
    %v619 = vpop.f32.mrb[0].mxu0
    %620 = vmatprep.mubr.bf16.mxu0 0
    %621 = vmatmul.mubr.bf16.gmra.mrb[0].mxu0 %v540
    %v622 = vpop.f32.mrb[0].mxu0
    %v623 = vadd.f32 %v497, %v622
    %v624 = vpop.f32.mrb[0].mxu0
    %v625 = vpop.f32.mrb[0].mxu0
    %v626 = vadd.f32 %v497, %v625
    %v627 = vpop.f32.mrb[0].mxu0
    %628 = vmatprep.mubr.bf16.mxu0 0
    %629 = vmatmul.mubr.bf16.gmra.mrb[0].mxu0 %v543
    %v630 = vpop.f32.mrb[0].mxu0
    %v631 = vadd.f32 %v497, %v630
    %v632 = vpop.f32.mrb[0].mxu0
    %v633 = vpop.f32.mrb[0].mxu0
    %v634 = vadd.f32 %v497, %v633
    %v635 = vpop.f32.mrb[0].mxu0
    %636 = vmatprep.mubr.bf16.mxu0 0
    %637 = vmatmul.mubr.bf16.gmra.mrb[0].mxu0 %v546
    %v638 = vpop.f32.mrb[0].mxu0
    %v639 = vadd.f32 %v497, %v638
    %v640 = vpop.f32.mrb[0].mxu0
    %v641 = vpop.f32.mrb[0].mxu0
    %v642 = vadd.f32 %v497, %v641
    %v643 = vpop.f32.mrb[0].mxu0
    %644 = vdwg.mxu0
    %v645 = vmax.f32 %v583, 0.0
    %v646 = vmax.f32 %v586, 0.0
    %v647 = vmax.f32 %v591, 0.0
    %v648 = vmax.f32 %v594, 0.0
    %v649 = vmax.f32 %v599, 0.0
    %v650 = vmax.f32 %v602, 0.0
    %v651 = vmax.f32 %v607, 0.0
    %v652 = vmax.f32 %v610, 0.0
    %v653 = vmax.f32 %v615, 0.0
    %v654 = vmax.f32 %v618, 0.0
    %v655 = vmax.f32 %v623, 0.0
    %v656 = vmax.f32 %v626, 0.0
    %v657 = vmax.f32 %v631, 0.0
    %v658 = vmax.f32 %v634, 0.0
    %v659 = vmax.f32 %v639, 0.0
    %v660 = vmax.f32 %v642, 0.0
    %v661 = vpack.c.bf16 %v646, %v645
    %v662 = vpack.c.bf16 %v648, %v647
    %v663 = vpack.c.bf16 %v650, %v649
    %v664 = vpack.c.bf16 %v652, %v651
    %v665 = vpack.c.bf16 %v654, %v653
    %v666 = vpack.c.bf16 %v656, %v655
    %v667 = vpack.c.bf16 %v658, %v657
    %v668 = vpack.c.bf16 %v660, %v659
    %669 = vst.msk [vmem:[#allocation2] sm:$0xff] %vm523, %v661
    %670 = vst.msk [vmem:[#allocation2 + $0x8] sm:$0xff] %vm523, %v662
    %671 = vst.msk [vmem:[#allocation2 + $0x10] sm:$0xff] %vm523, %v663
    %672 = vst.msk [vmem:[#allocation2 + $0x18] sm:$0xff] %vm523, %v664
    %673 = vst.msk [vmem:[#allocation2 + $0x20] sm:$0xff] %vm523, %v665
    %674 = vst.msk [vmem:[#allocation2 + $0x28] sm:$0xff] %vm523, %v666
    %675 = vst.msk [vmem:[#allocation2 + $0x30] sm:$0xff] %vm523, %v667
    %676 = vst.msk [vmem:[#allocation2 + $0x38] sm:$0xff] %vm523, %v668
    %v677 = vld [vmem:[#allocation12] sm:$0xf]
    %v678 = vld [vmem:[#allocation12 + $0x4] sm:$0xf]
    %v679 = vld [vmem:[#allocation12 + $0x8] sm:$0xf]
    %v680 = vld [vmem:[#allocation12 + $0xc] sm:$0xf]
    %v681 = vld [vmem:[#allocation12 + $0x10] sm:$0xf]
    %v682 = vld [vmem:[#allocation12 + $0x14] sm:$0xf]
    %v683 = vld [vmem:[#allocation12 + $0x18] sm:$0xf]
    %v684 = vld [vmem:[#allocation12 + $0x1c] sm:$0xf]
    %v685 = vld [vmem:[#allocation13] sm:$0x1]
    %v687 = vlaneseq
    %v688 = vshrl.u32 %v687, 7
    %v689 = vsub.s32 0, %v688
    %v690 = vrot.slane %v685, %v689
    %v700 = vunpack.c.l.b16 %v677
    %v701 = vunpack.c.l.b16 %v678
    %v702 = vunpack.c.l.b16 %v679
    %v703 = vunpack.c.l.b16 %v680
    %v704 = vunpack.c.l.b16 %v681
    %v705 = vunpack.c.l.b16 %v682
    %v706 = vunpack.c.l.b16 %v683
    %v707 = vunpack.c.l.b16 %v684
    %v708 = vpack.c.b16 %v701, %v700
    %v709 = vpack.c.b16 %v703, %v702
    %v710 = vpack.c.b16 %v705, %v704
    %v711 = vpack.c.b16 %v707, %v706
    %v717 = vsel %vm523, %v661, 0
    %v720 = vsel %vm523, %v662, 0
    %v723 = vsel %vm523, %v663, 0
    %v726 = vsel %vm523, %v664, 0
    %v729 = vsel %vm523, %v665, 0
    %v732 = vsel %vm523, %v666, 0
    %v735 = vsel %vm523, %v667, 0
    %v738 = vsel %vm523, %v668, 0
    %740 = vmatprep.subr.bf16.mxu0 0
    %741 = vmatpush1.bf16.msra.mxu0 %v708
    %742 = vmatprep.subr.bf16.mxu0 0
    %743 = vmatpush1.bf16.msra.mxu0 %v709
    %744 = vmatprep.subr.bf16.mxu0 0
    %745 = vmatpush1.bf16.msra.mxu0 %v710
    %746 = vmatprep.subr.bf16.mxu0 0
    %747 = vmatpush1.bf16.msra.mxu0 %v711
    %748 = vmatprep.subr.bf16.mxu0 0
    %749 = vmatpush1.bf16.msra.mxu0 0
    %750 = vmatprep.subr.bf16.mxu0 0
    %751 = vmatpush1.bf16.msra.mxu0 0
    %752 = vmatprep.subr.bf16.mxu0 0
    %753 = vmatpush1.bf16.msra.mxu0 0
    %754 = vmatprep.subr.bf16.mxu0 0
    %755 = vmatpush1.bf16.msra.mxu0 0
    %756 = vmatprep.subr.bf16.mxu0 0
    %757 = vmatpush1.bf16.msra.mxu0 0
    %758 = vmatprep.subr.bf16.mxu0 0
    %759 = vmatpush1.bf16.msra.mxu0 0
    %760 = vmatprep.subr.bf16.mxu0 0
    %761 = vmatpush1.bf16.msra.mxu0 0
    %762 = vmatprep.subr.bf16.mxu0 0
    %763 = vmatpush1.bf16.msra.mxu0 0
    %764 = vmatprep.subr.bf16.mxu0 0
    %765 = vmatpush1.bf16.msra.mxu0 0
    %766 = vmatprep.subr.bf16.mxu0 0
    %767 = vmatpush1.bf16.msra.mxu0 0
    %768 = vmatprep.subr.bf16.mxu0 0
    %769 = vmatpush1.bf16.msra.mxu0 0
    %770 = vmatprep.subr.bf16.mxu0 0
    %771 = vmatpush1.bf16.msra.mxu0 0
    %772 = vmatprep.mubr.bf16.mxu0 0
    %773 = vmatmul.mubr.bf16.gmra.mrb[0].mxu0 %v717
    %v774 = vpop.f32.mrb[0].mxu0
    %v775 = vadd.f32 %v690, %v774
    %v776 = vpop.f32.mrb[0].mxu0
    %v777 = vpop.f32.mrb[0].mxu0
    %v778 = vadd.f32 %v690, %v777
    %v779 = vpop.f32.mrb[0].mxu0
    %780 = vmatprep.mubr.bf16.mxu0 0
    %781 = vmatmul.mubr.bf16.gmra.mrb[0].mxu0 %v720
    %v782 = vpop.f32.mrb[0].mxu0
    %v783 = vadd.f32 %v690, %v782
    %v784 = vpop.f32.mrb[0].mxu0
    %v785 = vpop.f32.mrb[0].mxu0
    %v786 = vadd.f32 %v690, %v785
    %v787 = vpop.f32.mrb[0].mxu0
    %788 = vmatprep.mubr.bf16.mxu0 0
    %789 = vmatmul.mubr.bf16.gmra.mrb[0].mxu0 %v723
    %v790 = vpop.f32.mrb[0].mxu0
    %v791 = vadd.f32 %v690, %v790
    %v792 = vpop.f32.mrb[0].mxu0
    %v793 = vpop.f32.mrb[0].mxu0
    %v794 = vadd.f32 %v690, %v793
    %v795 = vpop.f32.mrb[0].mxu0
    %796 = vmatprep.mubr.bf16.mxu0 0
    %797 = vmatmul.mubr.bf16.gmra.mrb[0].mxu0 %v726
    %v798 = vpop.f32.mrb[0].mxu0
    %v799 = vadd.f32 %v690, %v798
    %v800 = vpop.f32.mrb[0].mxu0
    %v801 = vpop.f32.mrb[0].mxu0
    %v802 = vadd.f32 %v690, %v801
    %v803 = vpop.f32.mrb[0].mxu0
    %804 = vmatprep.mubr.bf16.mxu0 0
    %805 = vmatmul.mubr.bf16.gmra.mrb[0].mxu0 %v729
    %v806 = vpop.f32.mrb[0].mxu0
    %v807 = vadd.f32 %v690, %v806
    %v808 = vpop.f32.mrb[0].mxu0
    %v809 = vpop.f32.mrb[0].mxu0
    %v810 = vadd.f32 %v690, %v809
    %v811 = vpop.f32.mrb[0].mxu0
    %812 = vmatprep.mubr.bf16.mxu0 0
    %813 = vmatmul.mubr.bf16.gmra.mrb[0].mxu0 %v732
    %v814 = vpop.f32.mrb[0].mxu0
    %v815 = vadd.f32 %v690, %v814
    %v816 = vpop.f32.mrb[0].mxu0
    %v817 = vpop.f32.mrb[0].mxu0
    %v818 = vadd.f32 %v690, %v817
    %v819 = vpop.f32.mrb[0].mxu0
    %820 = vmatprep.mubr.bf16.mxu0 0
    %821 = vmatmul.mubr.bf16.gmra.mrb[0].mxu0 %v735
    %v822 = vpop.f32.mrb[0].mxu0
    %v823 = vadd.f32 %v690, %v822
    %v824 = vpop.f32.mrb[0].mxu0
    %v825 = vpop.f32.mrb[0].mxu0
    %v826 = vadd.f32 %v690, %v825
    %v827 = vpop.f32.mrb[0].mxu0
    %828 = vmatprep.mubr.bf16.mxu0 0
    %829 = vmatmul.mubr.bf16.gmra.mrb[0].mxu0 %v738
    %v830 = vpop.f32.mrb[0].mxu0
    %v831 = vadd.f32 %v690, %v830
    %v832 = vpop.f32.mrb[0].mxu0
    %v833 = vpop.f32.mrb[0].mxu0
    %v834 = vadd.f32 %v690, %v833
    %v835 = vpop.f32.mrb[0].mxu0
    %836 = vdwg.mxu0
    %v837 = vmax.f32 %v775, 0.0
    %v838 = vmax.f32 %v778, 0.0
    %v839 = vmax.f32 %v783, 0.0
    %v840 = vmax.f32 %v786, 0.0
    %v841 = vmax.f32 %v791, 0.0
    %v842 = vmax.f32 %v794, 0.0
    %v843 = vmax.f32 %v799, 0.0
    %v844 = vmax.f32 %v802, 0.0
    %v845 = vmax.f32 %v807, 0.0
    %v846 = vmax.f32 %v810, 0.0
    %v847 = vmax.f32 %v815, 0.0
    %v848 = vmax.f32 %v818, 0.0
    %v849 = vmax.f32 %v823, 0.0
    %v850 = vmax.f32 %v826, 0.0
    %v851 = vmax.f32 %v831, 0.0
    %v852 = vmax.f32 %v834, 0.0
    %v853 = vpack.c.bf16 %v838, %v837
    %v854 = vpack.c.bf16 %v840, %v839
    %v855 = vpack.c.bf16 %v842, %v841
    %v856 = vpack.c.bf16 %v844, %v843
    %v857 = vpack.c.bf16 %v846, %v845
    %v858 = vpack.c.bf16 %v848, %v847
    %v859 = vpack.c.bf16 %v850, %v849
    %v860 = vpack.c.bf16 %v852, %v851
    %v861 = vld [vmem:[#allocation15] sm:$0xf]
    %v862 = vld [vmem:[#allocation15 + $0x4] sm:$0xf]
    %v863 = vld [vmem:[#allocation15 + $0x8] sm:$0xf]
    %v864 = vld [vmem:[#allocation15 + $0xc] sm:$0xf]
    %v865 = vld [vmem:[#allocation15 + $0x10] sm:$0xf]
    %v866 = vld [vmem:[#allocation15 + $0x14] sm:$0xf]
    %v867 = vld [vmem:[#allocation15 + $0x18] sm:$0xf]
    %v868 = vld [vmem:[#allocation15 + $0x1c] sm:$0xf]
    %v869 = vld [vmem:[#allocation16] sm:$0x1]
    %v871 = vlaneseq
    %v872 = vshrl.u32 %v871, 7
    %v873 = vsub.s32 0, %v872
    %v874 = vrot.slane %v869, %v873
    %v884 = vunpack.c.l.b16 %v861
    %v885 = vunpack.c.l.b16 %v862
    %v886 = vunpack.c.l.b16 %v863
    %v887 = vunpack.c.l.b16 %v864
    %v888 = vunpack.c.l.b16 %v865
    %v889 = vunpack.c.l.b16 %v866
    %v890 = vunpack.c.l.b16 %v867
    %v891 = vunpack.c.l.b16 %v868
    %v892 = vpack.c.b16 %v885, %v884
    %v893 = vpack.c.b16 %v887, %v886
    %v894 = vpack.c.b16 %v889, %v888
    %v895 = vpack.c.b16 %v891, %v890
    %v901 = vsel %vm523, %v853, 0
    %v904 = vsel %vm523, %v854, 0
    %v907 = vsel %vm523, %v855, 0
    %v910 = vsel %vm523, %v856, 0
    %v913 = vsel %vm523, %v857, 0
    %v916 = vsel %vm523, %v858, 0
    %v919 = vsel %vm523, %v859, 0
    %v922 = vsel %vm523, %v860, 0
    %924 = vmatprep.subr.bf16.mxu0 0
    %925 = vmatpush1.bf16.msra.mxu0 %v892
    %926 = vmatprep.subr.bf16.mxu0 0
    %927 = vmatpush1.bf16.msra.mxu0 %v893
    %928 = vmatprep.subr.bf16.mxu0 0
    %929 = vmatpush1.bf16.msra.mxu0 %v894
    %930 = vmatprep.subr.bf16.mxu0 0
    %931 = vmatpush1.bf16.msra.mxu0 %v895
    %932 = vmatprep.subr.bf16.mxu0 0
    %933 = vmatpush1.bf16.msra.mxu0 0
    %934 = vmatprep.subr.bf16.mxu0 0
    %935 = vmatpush1.bf16.msra.mxu0 0
    %936 = vmatprep.subr.bf16.mxu0 0
    %937 = vmatpush1.bf16.msra.mxu0 0
    %938 = vmatprep.subr.bf16.mxu0 0
    %939 = vmatpush1.bf16.msra.mxu0 0
    %940 = vmatprep.subr.bf16.mxu0 0
    %941 = vmatpush1.bf16.msra.mxu0 0
    %942 = vmatprep.subr.bf16.mxu0 0
    %943 = vmatpush1.bf16.msra.mxu0 0
    %944 = vmatprep.subr.bf16.mxu0 0
    %945 = vmatpush1.bf16.msra.mxu0 0
    %946 = vmatprep.subr.bf16.mxu0 0
    %947 = vmatpush1.bf16.msra.mxu0 0
    %948 = vmatprep.subr.bf16.mxu0 0
    %949 = vmatpush1.bf16.msra.mxu0 0
    %950 = vmatprep.subr.bf16.mxu0 0
    %951 = vmatpush1.bf16.msra.mxu0 0
    %952 = vmatprep.subr.bf16.mxu0 0
    %953 = vmatpush1.bf16.msra.mxu0 0
    %954 = vmatprep.subr.bf16.mxu0 0
    %955 = vmatpush1.bf16.msra.mxu0 0
    %956 = vmatprep.mubr.bf16.mxu0 0
    %957 = vmatmul.mubr.bf16.gmra.mrb[0].mxu0 %v901
    %v958 = vpop.f32.mrb[0].mxu0
    %v959 = vadd.f32 %v874, %v958
    %v960 = vpop.f32.mrb[0].mxu0
    %v961 = vpop.f32.mrb[0].mxu0
    %v962 = vadd.f32 %v874, %v961
    %v963 = vpop.f32.mrb[0].mxu0
    %964 = vmatprep.mubr.bf16.mxu0 0
    %965 = vmatmul.mubr.bf16.gmra.mrb[0].mxu0 %v904
    %v966 = vpop.f32.mrb[0].mxu0
    %v967 = vadd.f32 %v874, %v966
    %v968 = vpop.f32.mrb[0].mxu0
    %v969 = vpop.f32.mrb[0].mxu0
    %v970 = vadd.f32 %v874, %v969
    %v971 = vpop.f32.mrb[0].mxu0
    %972 = vmatprep.mubr.bf16.mxu0 0
    %973 = vmatmul.mubr.bf16.gmra.mrb[0].mxu0 %v907
    %v974 = vpop.f32.mrb[0].mxu0
    %v975 = vadd.f32 %v874, %v974
    %v976 = vpop.f32.mrb[0].mxu0
    %v977 = vpop.f32.mrb[0].mxu0
    %v978 = vadd.f32 %v874, %v977
    %v979 = vpop.f32.mrb[0].mxu0
    %980 = vmatprep.mubr.bf16.mxu0 0
    %981 = vmatmul.mubr.bf16.gmra.mrb[0].mxu0 %v910
    %v982 = vpop.f32.mrb[0].mxu0
    %v983 = vadd.f32 %v874, %v982
    %v984 = vpop.f32.mrb[0].mxu0
    %v985 = vpop.f32.mrb[0].mxu0
    %v986 = vadd.f32 %v874, %v985
    %v987 = vpop.f32.mrb[0].mxu0
    %988 = vmatprep.mubr.bf16.mxu0 0
    %989 = vmatmul.mubr.bf16.gmra.mrb[0].mxu0 %v913
    %v990 = vpop.f32.mrb[0].mxu0
    %v991 = vadd.f32 %v874, %v990
    %v992 = vpop.f32.mrb[0].mxu0
    %v993 = vpop.f32.mrb[0].mxu0
    %v994 = vadd.f32 %v874, %v993
    %v995 = vpop.f32.mrb[0].mxu0
    %996 = vmatprep.mubr.bf16.mxu0 0
    %997 = vmatmul.mubr.bf16.gmra.mrb[0].mxu0 %v916
    %v998 = vpop.f32.mrb[0].mxu0
    %v999 = vadd.f32 %v874, %v998
    %v1000 = vpop.f32.mrb[0].mxu0
    %v1001 = vpop.f32.mrb[0].mxu0
    %v1002 = vadd.f32 %v874, %v1001
    %v1003 = vpop.f32.mrb[0].mxu0
    %1004 = vmatprep.mubr.bf16.mxu0 0
    %1005 = vmatmul.mubr.bf16.gmra.mrb[0].mxu0 %v919
    %v1006 = vpop.f32.mrb[0].mxu0
    %v1007 = vadd.f32 %v874, %v1006
    %v1008 = vpop.f32.mrb[0].mxu0
    %v1009 = vpop.f32.mrb[0].mxu0
    %v1010 = vadd.f32 %v874, %v1009
    %v1011 = vpop.f32.mrb[0].mxu0
    %1012 = vmatprep.mubr.bf16.mxu0 0
    %1013 = vmatmul.mubr.bf16.gmra.mrb[0].mxu0 %v922
    %v1014 = vpop.f32.mrb[0].mxu0
    %v1015 = vadd.f32 %v874, %v1014
    %v1016 = vpop.f32.mrb[0].mxu0
    %v1017 = vpop.f32.mrb[0].mxu0
    %v1018 = vadd.f32 %v874, %v1017
    %v1019 = vpop.f32.mrb[0].mxu0
    %1020 = vdwg.mxu0
    %v1021 = vmax.f32 %v959, 0.0
    %v1022 = vmax.f32 %v962, 0.0
    %v1023 = vmax.f32 %v967, 0.0
    %v1024 = vmax.f32 %v970, 0.0
    %v1025 = vmax.f32 %v975, 0.0
    %v1026 = vmax.f32 %v978, 0.0
    %v1027 = vmax.f32 %v983, 0.0
    %v1028 = vmax.f32 %v986, 0.0
    %v1029 = vmax.f32 %v991, 0.0
    %v1030 = vmax.f32 %v994, 0.0
    %v1031 = vmax.f32 %v999, 0.0
    %v1032 = vmax.f32 %v1002, 0.0
    %v1033 = vmax.f32 %v1007, 0.0
    %v1034 = vmax.f32 %v1010, 0.0
    %v1035 = vmax.f32 %v1015, 0.0
    %v1036 = vmax.f32 %v1018, 0.0
    %v1037 = vpack.c.bf16 %v1022, %v1021
    %v1038 = vpack.c.bf16 %v1024, %v1023
    %v1039 = vpack.c.bf16 %v1026, %v1025
    %v1040 = vpack.c.bf16 %v1028, %v1027
    %v1041 = vpack.c.bf16 %v1030, %v1029
    %v1042 = vpack.c.bf16 %v1032, %v1031
    %v1043 = vpack.c.bf16 %v1034, %v1033
    %v1044 = vpack.c.bf16 %v1036, %v1035
    %v1045 = vld [vmem:[#allocation18] sm:$0xff]
    %v1046 = vld [vmem:[#allocation18 + $0x8] sm:$0xff]
    %v1047 = vld [vmem:[#allocation18 + $0x10] sm:$0xff]
    %v1048 = vld [vmem:[#allocation18 + $0x18] sm:$0xff]
    %v1049 = vld [vmem:[#allocation18 + $0x20] sm:$0xff]
    %v1050 = vld [vmem:[#allocation18 + $0x28] sm:$0xff]
    %v1051 = vld [vmem:[#allocation18 + $0x30] sm:$0xff]
    %v1052 = vld [vmem:[#allocation18 + $0x38] sm:$0xff]
    %v1053 = vld [vmem:[#allocation18 + $0x40] sm:$0xff]
    %v1054 = vld [vmem:[#allocation18 + $0x48] sm:$0xff]
    %v1055 = vld [vmem:[#allocation18 + $0x50] sm:$0xff]
    %v1056 = vld [vmem:[#allocation18 + $0x58] sm:$0xff]
    %v1057 = vld [vmem:[#allocation18 + $0x60] sm:$0xff]
    %v1058 = vld [vmem:[#allocation18 + $0x68] sm:$0xff]
    %v1059 = vld [vmem:[#allocation18 + $0x70] sm:$0xff]
    %v1060 = vld [vmem:[#allocation18 + $0x78] sm:$0xff]
    %v1061 = vld [vmem:[#allocation18 + $0x80] sm:$0xff]
    %v1062 = vld [vmem:[#allocation18 + $0x88] sm:$0xff]
    %v1063 = vld [vmem:[#allocation18 + $0x90] sm:$0xff]
    %v1064 = vld [vmem:[#allocation18 + $0x98] sm:$0xff]
    %v1065 = vld [vmem:[#allocation18 + $0xa0] sm:$0xff]
    %v1066 = vld [vmem:[#allocation18 + $0xa8] sm:$0xff]
    %v1067 = vld [vmem:[#allocation18 + $0xb0] sm:$0xff]
    %v1068 = vld [vmem:[#allocation18 + $0xb8] sm:$0xff]
    %v1069 = vld [vmem:[#allocation18 + $0xc0] sm:$0xff]
    %v1070 = vld [vmem:[#allocation18 + $0xc8] sm:$0xff]
    %v1071 = vld [vmem:[#allocation18 + $0xd0] sm:$0xff]
    %v1072 = vld [vmem:[#allocation18 + $0xd8] sm:$0xff]
    %v1073 = vld [vmem:[#allocation18 + $0xe0] sm:$0xff]
    %v1074 = vld [vmem:[#allocation18 + $0xe8] sm:$0xff]
    %v1075 = vld [vmem:[#allocation18 + $0xf0] sm:$0xff]
    %v1076 = vld [vmem:[#allocation18 + $0xf8] sm:$0xff]
    %v1077 = vld [vmem:[#allocation18 + $0x100] sm:$0xff]
    %v1078 = vld [vmem:[#allocation18 + $0x108] sm:$0xff]
    %v1079 = vld [vmem:[#allocation18 + $0x110] sm:$0xff]
    %v1080 = vld [vmem:[#allocation18 + $0x118] sm:$0xff]
    %v1081 = vld [vmem:[#allocation18 + $0x120] sm:$0xff]
    %v1082 = vld [vmem:[#allocation18 + $0x128] sm:$0xff]
    %v1083 = vld [vmem:[#allocation18 + $0x130] sm:$0xff]
    %v1084 = vld [vmem:[#allocation18 + $0x138] sm:$0xff]
    %v1085 = vld [vmem:[#allocation18 + $0x140] sm:$0xff]
    %v1086 = vld [vmem:[#allocation18 + $0x148] sm:$0xff]
    %v1087 = vld [vmem:[#allocation18 + $0x150] sm:$0xff]
    %v1088 = vld [vmem:[#allocation18 + $0x158] sm:$0xff]
    %v1089 = vld [vmem:[#allocation18 + $0x160] sm:$0xff]
    %v1090 = vld [vmem:[#allocation18 + $0x168] sm:$0xff]
    %v1091 = vld [vmem:[#allocation18 + $0x170] sm:$0xff]
    %v1092 = vld [vmem:[#allocation18 + $0x178] sm:$0xff]
    %v1093 = vld [vmem:[#allocation18 + $0x180] sm:$0xff]
    %v1094 = vld [vmem:[#allocation18 + $0x188] sm:$0xff]
    %v1095 = vld [vmem:[#allocation18 + $0x190] sm:$0xff]
    %v1096 = vld [vmem:[#allocation18 + $0x198] sm:$0xff]
    %v1097 = vld [vmem:[#allocation18 + $0x1a0] sm:$0xff]
    %v1098 = vld [vmem:[#allocation18 + $0x1a8] sm:$0xff]
    %v1099 = vld [vmem:[#allocation18 + $0x1b0] sm:$0xff]
    %v1100 = vld [vmem:[#allocation18 + $0x1b8] sm:$0xff]
    %v1101 = vld [vmem:[#allocation18 + $0x1c0] sm:$0xff]
    %v1102 = vld [vmem:[#allocation18 + $0x1c8] sm:$0xff]
    %v1103 = vld [vmem:[#allocation18 + $0x1d0] sm:$0xff]
    %v1104 = vld [vmem:[#allocation18 + $0x1d8] sm:$0xff]
    %v1105 = vld [vmem:[#allocation18 + $0x1e0] sm:$0xff]
    %v1106 = vld [vmem:[#allocation18 + $0x1e8] sm:$0xff]
    %v1107 = vld [vmem:[#allocation18 + $0x1f0] sm:$0xff]
    %v1108 = vld [vmem:[#allocation18 + $0x1f8] sm:$0xff]
    %v1109 = vld [vmem:[#allocation19] sm:$0xff]
    %v1111 = vlaneseq
    %v1112 = vshrl.u32 %v1111, 7
    %v1113 = vsub.s32 0, %v1112
    %v1114 = vrot.slane %v1109, %v1113
    %v1115 = vlaneseq
    %v1116 = vshrl.u32 %v1115, 7
    %v1117 = vsub.s32 1, %v1116
    %v1118 = vrot.slane %v1109, %v1117
    %v1119 = vlaneseq
    %v1120 = vshrl.u32 %v1119, 7
    %v1121 = vsub.s32 2, %v1120
    %v1122 = vrot.slane %v1109, %v1121
    %v1123 = vlaneseq
    %v1124 = vshrl.u32 %v1123, 7
    %v1125 = vsub.s32 3, %v1124
    %v1126 = vrot.slane %v1109, %v1125
    %v1127 = vlaneseq
    %v1128 = vshrl.u32 %v1127, 7
    %v1129 = vsub.s32 4, %v1128
    %v1130 = vrot.slane %v1109, %v1129
    %v1131 = vlaneseq
    %v1132 = vshrl.u32 %v1131, 7
    %v1133 = vsub.s32 5, %v1132
    %v1134 = vrot.slane %v1109, %v1133
    %v1135 = vlaneseq
    %v1136 = vshrl.u32 %v1135, 7
    %v1137 = vsub.s32 6, %v1136
    %v1138 = vrot.slane %v1109, %v1137
    %v1139 = vlaneseq
    %v1140 = vshrl.u32 %v1139, 7
    %v1141 = vsub.s32 7, %v1140
    %v1142 = vrot.slane %v1109, %v1141
    %v1215 = vunpack.c.l.b16 %v1045
    %v1216 = vunpack.c.h.b16 %v1045
    %v1217 = vunpack.c.l.b16 %v1046
    %v1218 = vunpack.c.h.b16 %v1046
    %v1219 = vunpack.c.l.b16 %v1047
    %v1220 = vunpack.c.h.b16 %v1047
    %v1221 = vunpack.c.l.b16 %v1048
    %v1222 = vunpack.c.h.b16 %v1048
    %v1223 = vunpack.c.l.b16 %v1049
    %v1224 = vunpack.c.h.b16 %v1049
    %v1225 = vunpack.c.l.b16 %v1050
    %v1226 = vunpack.c.h.b16 %v1050
    %v1227 = vunpack.c.l.b16 %v1051
    %v1228 = vunpack.c.h.b16 %v1051
    %v1229 = vunpack.c.l.b16 %v1052
    %v1230 = vunpack.c.h.b16 %v1052
    %v1231 = vunpack.c.l.b16 %v1053
    %v1232 = vunpack.c.h.b16 %v1053
    %v1233 = vunpack.c.l.b16 %v1054
    %v1234 = vunpack.c.h.b16 %v1054
    %v1235 = vunpack.c.l.b16 %v1055
    %v1236 = vunpack.c.h.b16 %v1055
    %v1237 = vunpack.c.l.b16 %v1056
    %v1238 = vunpack.c.h.b16 %v1056
    %v1239 = vunpack.c.l.b16 %v1057
    %v1240 = vunpack.c.h.b16 %v1057
    %v1241 = vunpack.c.l.b16 %v1058
    %v1242 = vunpack.c.h.b16 %v1058
    %v1243 = vunpack.c.l.b16 %v1059
    %v1244 = vunpack.c.h.b16 %v1059
    %v1245 = vunpack.c.l.b16 %v1060
    %v1246 = vunpack.c.h.b16 %v1060
    %v1247 = vunpack.c.l.b16 %v1061
    %v1248 = vunpack.c.h.b16 %v1061
    %v1249 = vunpack.c.l.b16 %v1062
    %v1250 = vunpack.c.h.b16 %v1062
    %v1251 = vunpack.c.l.b16 %v1063
    %v1252 = vunpack.c.h.b16 %v1063
    %v1253 = vunpack.c.l.b16 %v1064
    %v1254 = vunpack.c.h.b16 %v1064
    %v1255 = vunpack.c.l.b16 %v1065
    %v1256 = vunpack.c.h.b16 %v1065
    %v1257 = vunpack.c.l.b16 %v1066
    %v1258 = vunpack.c.h.b16 %v1066
    %v1259 = vunpack.c.l.b16 %v1067
    %v1260 = vunpack.c.h.b16 %v1067
    %v1261 = vunpack.c.l.b16 %v1068
    %v1262 = vunpack.c.h.b16 %v1068
    %v1263 = vunpack.c.l.b16 %v1069
    %v1264 = vunpack.c.h.b16 %v1069
    %v1265 = vunpack.c.l.b16 %v1070
    %v1266 = vunpack.c.h.b16 %v1070
    %v1267 = vunpack.c.l.b16 %v1071
    %v1268 = vunpack.c.h.b16 %v1071
    %v1269 = vunpack.c.l.b16 %v1072
    %v1270 = vunpack.c.h.b16 %v1072
    %v1271 = vunpack.c.l.b16 %v1073
    %v1272 = vunpack.c.h.b16 %v1073
    %v1273 = vunpack.c.l.b16 %v1074
    %v1274 = vunpack.c.h.b16 %v1074
    %v1275 = vunpack.c.l.b16 %v1075
    %v1276 = vunpack.c.h.b16 %v1075
    %v1277 = vunpack.c.l.b16 %v1076
    %v1278 = vunpack.c.h.b16 %v1076
    %v1279 = vunpack.c.l.b16 %v1077
    %v1280 = vunpack.c.h.b16 %v1077
    %v1281 = vunpack.c.l.b16 %v1078
    %v1282 = vunpack.c.h.b16 %v1078
    %v1283 = vunpack.c.l.b16 %v1079
    %v1284 = vunpack.c.h.b16 %v1079
    %v1285 = vunpack.c.l.b16 %v1080
    %v1286 = vunpack.c.h.b16 %v1080
    %v1287 = vunpack.c.l.b16 %v1081
    %v1288 = vunpack.c.h.b16 %v1081
    %v1289 = vunpack.c.l.b16 %v1082
    %v1290 = vunpack.c.h.b16 %v1082
    %v1291 = vunpack.c.l.b16 %v1083
    %v1292 = vunpack.c.h.b16 %v1083
    %v1293 = vunpack.c.l.b16 %v1084
    %v1294 = vunpack.c.h.b16 %v1084
    %v1295 = vunpack.c.l.b16 %v1085
    %v1296 = vunpack.c.h.b16 %v1085
    %v1297 = vunpack.c.l.b16 %v1086
    %v1298 = vunpack.c.h.b16 %v1086
    %v1299 = vunpack.c.l.b16 %v1087
    %v1300 = vunpack.c.h.b16 %v1087
    %v1301 = vunpack.c.l.b16 %v1088
    %v1302 = vunpack.c.h.b16 %v1088
    %v1303 = vunpack.c.l.b16 %v1089
    %v1304 = vunpack.c.h.b16 %v1089
    %v1305 = vunpack.c.l.b16 %v1090
    %v1306 = vunpack.c.h.b16 %v1090
    %v1307 = vunpack.c.l.b16 %v1091
    %v1308 = vunpack.c.h.b16 %v1091
    %v1309 = vunpack.c.l.b16 %v1092
    %v1310 = vunpack.c.h.b16 %v1092
    %v1311 = vunpack.c.l.b16 %v1093
    %v1312 = vunpack.c.h.b16 %v1093
    %v1313 = vunpack.c.l.b16 %v1094
    %v1314 = vunpack.c.h.b16 %v1094
    %v1315 = vunpack.c.l.b16 %v1095
    %v1316 = vunpack.c.h.b16 %v1095
    %v1317 = vunpack.c.l.b16 %v1096
    %v1318 = vunpack.c.h.b16 %v1096
    %v1319 = vunpack.c.l.b16 %v1097
    %v1320 = vunpack.c.h.b16 %v1097
    %v1321 = vunpack.c.l.b16 %v1098
    %v1322 = vunpack.c.h.b16 %v1098
    %v1323 = vunpack.c.l.b16 %v1099
    %v1324 = vunpack.c.h.b16 %v1099
    %v1325 = vunpack.c.l.b16 %v1100
    %v1326 = vunpack.c.h.b16 %v1100
    %v1327 = vunpack.c.l.b16 %v1101
    %v1328 = vunpack.c.h.b16 %v1101
    %v1329 = vunpack.c.l.b16 %v1102
    %v1330 = vunpack.c.h.b16 %v1102
    %v1331 = vunpack.c.l.b16 %v1103
    %v1332 = vunpack.c.h.b16 %v1103
    %v1333 = vunpack.c.l.b16 %v1104
    %v1334 = vunpack.c.h.b16 %v1104
    %v1335 = vunpack.c.l.b16 %v1105
    %v1336 = vunpack.c.h.b16 %v1105
    %v1337 = vunpack.c.l.b16 %v1106
    %v1338 = vunpack.c.h.b16 %v1106
    %v1339 = vunpack.c.l.b16 %v1107
    %v1340 = vunpack.c.h.b16 %v1107
    %v1341 = vunpack.c.l.b16 %v1108
    %v1342 = vunpack.c.h.b16 %v1108
    %v1343 = vpack.c.b16 %v1223, %v1215
    %v1344 = vpack.c.b16 %v1224, %v1216
    %v1345 = vpack.c.b16 %v1225, %v1217
    %v1346 = vpack.c.b16 %v1226, %v1218
    %v1347 = vpack.c.b16 %v1227, %v1219
    %v1348 = vpack.c.b16 %v1228, %v1220
    %v1349 = vpack.c.b16 %v1229, %v1221
    %v1350 = vpack.c.b16 %v1230, %v1222
    %v1351 = vpack.c.b16 %v1239, %v1231
    %v1352 = vpack.c.b16 %v1240, %v1232
    %v1353 = vpack.c.b16 %v1241, %v1233
    %v1354 = vpack.c.b16 %v1242, %v1234
    %v1355 = vpack.c.b16 %v1243, %v1235
    %v1356 = vpack.c.b16 %v1244, %v1236
    %v1357 = vpack.c.b16 %v1245, %v1237
    %v1358 = vpack.c.b16 %v1246, %v1238
    %v1359 = vpack.c.b16 %v1255, %v1247
    %v1360 = vpack.c.b16 %v1256, %v1248
    %v1361 = vpack.c.b16 %v1257, %v1249
    %v1362 = vpack.c.b16 %v1258, %v1250
    %v1363 = vpack.c.b16 %v1259, %v1251
    %v1364 = vpack.c.b16 %v1260, %v1252
    %v1365 = vpack.c.b16 %v1261, %v1253
    %v1366 = vpack.c.b16 %v1262, %v1254
    %v1367 = vpack.c.b16 %v1271, %v1263
    %v1368 = vpack.c.b16 %v1272, %v1264
    %v1369 = vpack.c.b16 %v1273, %v1265
    %v1370 = vpack.c.b16 %v1274, %v1266
    %v1371 = vpack.c.b16 %v1275, %v1267
    %v1372 = vpack.c.b16 %v1276, %v1268
    %v1373 = vpack.c.b16 %v1277, %v1269
    %v1374 = vpack.c.b16 %v1278, %v1270
    %v1375 = vpack.c.b16 %v1287, %v1279
    %v1376 = vpack.c.b16 %v1288, %v1280
    %v1377 = vpack.c.b16 %v1289, %v1281
    %v1378 = vpack.c.b16 %v1290, %v1282
    %v1379 = vpack.c.b16 %v1291, %v1283
    %v1380 = vpack.c.b16 %v1292, %v1284
    %v1381 = vpack.c.b16 %v1293, %v1285
    %v1382 = vpack.c.b16 %v1294, %v1286
    %v1383 = vpack.c.b16 %v1303, %v1295
    %v1384 = vpack.c.b16 %v1304, %v1296
    %v1385 = vpack.c.b16 %v1305, %v1297
    %v1386 = vpack.c.b16 %v1306, %v1298
    %v1387 = vpack.c.b16 %v1307, %v1299
    %v1388 = vpack.c.b16 %v1308, %v1300
    %v1389 = vpack.c.b16 %v1309, %v1301
    %v1390 = vpack.c.b16 %v1310, %v1302
    %v1391 = vpack.c.b16 %v1319, %v1311
    %v1392 = vpack.c.b16 %v1320, %v1312
    %v1393 = vpack.c.b16 %v1321, %v1313
    %v1394 = vpack.c.b16 %v1322, %v1314
    %v1395 = vpack.c.b16 %v1323, %v1315
    %v1396 = vpack.c.b16 %v1324, %v1316
    %v1397 = vpack.c.b16 %v1325, %v1317
    %v1398 = vpack.c.b16 %v1326, %v1318
    %v1399 = vpack.c.b16 %v1335, %v1327
    %v1400 = vpack.c.b16 %v1336, %v1328
    %v1401 = vpack.c.b16 %v1337, %v1329
    %v1402 = vpack.c.b16 %v1338, %v1330
    %v1403 = vpack.c.b16 %v1339, %v1331
    %v1404 = vpack.c.b16 %v1340, %v1332
    %v1405 = vpack.c.b16 %v1341, %v1333
    %v1406 = vpack.c.b16 %v1342, %v1334
    %1471 = vmatprep.subr.bf16.mxu0 %v1344
    %1472 = vmatpush1.bf16.msra.mxu0 %v1343
    %1473 = vmatprep.subr.bf16.mxu0 %v1352
    %1474 = vmatpush1.bf16.msra.mxu0 %v1351
    %1475 = vmatprep.subr.bf16.mxu0 %v1360
    %1476 = vmatpush1.bf16.msra.mxu0 %v1359
    %1477 = vmatprep.subr.bf16.mxu0 %v1368
    %1478 = vmatpush1.bf16.msra.mxu0 %v1367
    %1479 = vmatprep.subr.bf16.mxu0 %v1376
    %1480 = vmatpush1.bf16.msra.mxu0 %v1375
    %1481 = vmatprep.subr.bf16.mxu0 %v1384
    %1482 = vmatpush1.bf16.msra.mxu0 %v1383
    %1483 = vmatprep.subr.bf16.mxu0 %v1392
    %1484 = vmatpush1.bf16.msra.mxu0 %v1391
    %1485 = vmatprep.subr.bf16.mxu0 %v1400
    %1486 = vmatpush1.bf16.msra.mxu0 %v1399
    %1487 = vmatprep.subr.bf16.mxu0 0
    %1488 = vmatpush1.bf16.msra.mxu0 0
    %1489 = vmatprep.subr.bf16.mxu0 0
    %1490 = vmatpush1.bf16.msra.mxu0 0
    %1491 = vmatprep.subr.bf16.mxu0 0
    %1492 = vmatpush1.bf16.msra.mxu0 0
    %1493 = vmatprep.subr.bf16.mxu0 0
    %1494 = vmatpush1.bf16.msra.mxu0 0
    %1495 = vmatprep.subr.bf16.mxu0 0
    %1496 = vmatpush1.bf16.msra.mxu0 0
    %1497 = vmatprep.subr.bf16.mxu0 0
    %1498 = vmatpush1.bf16.msra.mxu0 0
    %1499 = vmatprep.subr.bf16.mxu0 0
    %1500 = vmatpush1.bf16.msra.mxu0 0
    %1501 = vmatprep.subr.bf16.mxu0 0
    %1502 = vmatpush1.bf16.msra.mxu0 0
    %1503 = vmatprep.mubr.bf16.mxu0 0
    %1504 = vmatmul.mubr.bf16.gmra.mrb[0].mxu0 %v1037
    %v1505 = vpop.f32.mrb[0].mxu0
    %v1506 = vadd.f32 %v1114, %v1505
    %v1507 = vpop.f32.mrb[0].mxu0
    %v1508 = vadd.f32 %v1118, %v1507
    %v1509 = vpop.f32.mrb[0].mxu0
    %v1510 = vadd.f32 %v1114, %v1509
    %v1511 = vpop.f32.mrb[0].mxu0
    %v1512 = vadd.f32 %v1118, %v1511
    %1513 = vmatprep.mubr.bf16.mxu0 0
    %1514 = vmatmul.mubr.bf16.gmra.mrb[0].mxu0 %v1038
    %v1515 = vpop.f32.mrb[0].mxu0
    %v1516 = vadd.f32 %v1114, %v1515
    %v1517 = vpop.f32.mrb[0].mxu0
    %v1518 = vadd.f32 %v1118, %v1517
    %v1519 = vpop.f32.mrb[0].mxu0
    %v1520 = vadd.f32 %v1114, %v1519
    %v1521 = vpop.f32.mrb[0].mxu0
    %v1522 = vadd.f32 %v1118, %v1521
    %1523 = vmatprep.mubr.bf16.mxu0 0
    %1524 = vmatmul.mubr.bf16.gmra.mrb[0].mxu0 %v1039
    %v1525 = vpop.f32.mrb[0].mxu0
    %v1526 = vadd.f32 %v1114, %v1525
    %v1527 = vpop.f32.mrb[0].mxu0
    %v1528 = vadd.f32 %v1118, %v1527
    %v1529 = vpop.f32.mrb[0].mxu0
    %v1530 = vadd.f32 %v1114, %v1529
    %v1531 = vpop.f32.mrb[0].mxu0
    %v1532 = vadd.f32 %v1118, %v1531
    %1533 = vmatprep.mubr.bf16.mxu0 0
    %1534 = vmatmul.mubr.bf16.gmra.mrb[0].mxu0 %v1040
    %v1535 = vpop.f32.mrb[0].mxu0
    %v1536 = vadd.f32 %v1114, %v1535
    %v1537 = vpop.f32.mrb[0].mxu0
    %v1538 = vadd.f32 %v1118, %v1537
    %v1539 = vpop.f32.mrb[0].mxu0
    %v1540 = vadd.f32 %v1114, %v1539
    %v1541 = vpop.f32.mrb[0].mxu0
    %v1542 = vadd.f32 %v1118, %v1541
    %1543 = vmatprep.mubr.bf16.mxu0 0
    %1544 = vmatmul.mubr.bf16.gmra.mrb[0].mxu0 %v1041
    %v1545 = vpop.f32.mrb[0].mxu0
    %v1546 = vadd.f32 %v1114, %v1545
    %v1547 = vpop.f32.mrb[0].mxu0
    %v1548 = vadd.f32 %v1118, %v1547
    %v1549 = vpop.f32.mrb[0].mxu0
    %v1550 = vadd.f32 %v1114, %v1549
    %v1551 = vpop.f32.mrb[0].mxu0
    %v1552 = vadd.f32 %v1118, %v1551
    %1553 = vmatprep.mubr.bf16.mxu0 0
    %1554 = vmatmul.mubr.bf16.gmra.mrb[0].mxu0 %v1042
    %v1555 = vpop.f32.mrb[0].mxu0
    %v1556 = vadd.f32 %v1114, %v1555
    %v1557 = vpop.f32.mrb[0].mxu0
    %v1558 = vadd.f32 %v1118, %v1557
    %v1559 = vpop.f32.mrb[0].mxu0
    %v1560 = vadd.f32 %v1114, %v1559
    %v1561 = vpop.f32.mrb[0].mxu0
    %v1562 = vadd.f32 %v1118, %v1561
    %1563 = vmatprep.mubr.bf16.mxu0 0
    %1564 = vmatmul.mubr.bf16.gmra.mrb[0].mxu0 %v1043
    %v1565 = vpop.f32.mrb[0].mxu0
    %v1566 = vadd.f32 %v1114, %v1565
    %v1567 = vpop.f32.mrb[0].mxu0
    %v1568 = vadd.f32 %v1118, %v1567
    %v1569 = vpop.f32.mrb[0].mxu0
    %v1570 = vadd.f32 %v1114, %v1569
    %v1571 = vpop.f32.mrb[0].mxu0
    %v1572 = vadd.f32 %v1118, %v1571
    %1573 = vmatprep.mubr.bf16.mxu0 0
    %1574 = vmatmul.mubr.bf16.gmra.mrb[0].mxu0 %v1044
    %v1575 = vpop.f32.mrb[0].mxu0
    %v1576 = vadd.f32 %v1114, %v1575
    %v1577 = vpop.f32.mrb[0].mxu0
    %v1578 = vadd.f32 %v1118, %v1577
    %v1579 = vpop.f32.mrb[0].mxu0
    %v1580 = vadd.f32 %v1114, %v1579
    %v1581 = vpop.f32.mrb[0].mxu0
    %v1582 = vadd.f32 %v1118, %v1581
    %1583 = vdwg.mxu0
    %1584 = vmatprep.subr.bf16.mxu0 %v1346
    %1585 = vmatpush1.bf16.msra.mxu0 %v1345
    %1586 = vmatprep.subr.bf16.mxu0 %v1354
    %1587 = vmatpush1.bf16.msra.mxu0 %v1353
    %1588 = vmatprep.subr.bf16.mxu0 %v1362
    %1589 = vmatpush1.bf16.msra.mxu0 %v1361
    %1590 = vmatprep.subr.bf16.mxu0 %v1370
    %1591 = vmatpush1.bf16.msra.mxu0 %v1369
    %1592 = vmatprep.subr.bf16.mxu0 %v1378
    %1593 = vmatpush1.bf16.msra.mxu0 %v1377
    %1594 = vmatprep.subr.bf16.mxu0 %v1386
    %1595 = vmatpush1.bf16.msra.mxu0 %v1385
    %1596 = vmatprep.subr.bf16.mxu0 %v1394
    %1597 = vmatpush1.bf16.msra.mxu0 %v1393
    %1598 = vmatprep.subr.bf16.mxu0 %v1402
    %1599 = vmatpush1.bf16.msra.mxu0 %v1401
    %1600 = vmatprep.subr.bf16.mxu0 0
    %1601 = vmatpush1.bf16.msra.mxu0 0
    %1602 = vmatprep.subr.bf16.mxu0 0
    %1603 = vmatpush1.bf16.msra.mxu0 0
    %1604 = vmatprep.subr.bf16.mxu0 0
    %1605 = vmatpush1.bf16.msra.mxu0 0
    %1606 = vmatprep.subr.bf16.mxu0 0
    %1607 = vmatpush1.bf16.msra.mxu0 0
    %1608 = vmatprep.subr.bf16.mxu0 0
    %1609 = vmatpush1.bf16.msra.mxu0 0
    %1610 = vmatprep.subr.bf16.mxu0 0
    %1611 = vmatpush1.bf16.msra.mxu0 0
    %1612 = vmatprep.subr.bf16.mxu0 0
    %1613 = vmatpush1.bf16.msra.mxu0 0
    %1614 = vmatprep.subr.bf16.mxu0 0
    %1615 = vmatpush1.bf16.msra.mxu0 0
    %1616 = vmatprep.mubr.bf16.mxu0 0
    %1617 = vmatmul.mubr.bf16.gmra.mrb[0].mxu0 %v1037
    %v1618 = vpop.f32.mrb[0].mxu0
    %v1619 = vadd.f32 %v1122, %v1618
    %v1620 = vpop.f32.mrb[0].mxu0
    %v1621 = vadd.f32 %v1126, %v1620
    %v1622 = vpop.f32.mrb[0].mxu0
    %v1623 = vadd.f32 %v1122, %v1622
    %v1624 = vpop.f32.mrb[0].mxu0
    %v1625 = vadd.f32 %v1126, %v1624
    %1626 = vmatprep.mubr.bf16.mxu0 0
    %1627 = vmatmul.mubr.bf16.gmra.mrb[0].mxu0 %v1038
    %v1628 = vpop.f32.mrb[0].mxu0
    %v1629 = vadd.f32 %v1122, %v1628
    %v1630 = vpop.f32.mrb[0].mxu0
    %v1631 = vadd.f32 %v1126, %v1630
    %v1632 = vpop.f32.mrb[0].mxu0
    %v1633 = vadd.f32 %v1122, %v1632
    %v1634 = vpop.f32.mrb[0].mxu0
    %v1635 = vadd.f32 %v1126, %v1634
    %1636 = vmatprep.mubr.bf16.mxu0 0
    %1637 = vmatmul.mubr.bf16.gmra.mrb[0].mxu0 %v1039
    %v1638 = vpop.f32.mrb[0].mxu0
    %v1639 = vadd.f32 %v1122, %v1638
    %v1640 = vpop.f32.mrb[0].mxu0
    %v1641 = vadd.f32 %v1126, %v1640
    %v1642 = vpop.f32.mrb[0].mxu0
    %v1643 = vadd.f32 %v1122, %v1642
    %v1644 = vpop.f32.mrb[0].mxu0
    %v1645 = vadd.f32 %v1126, %v1644
    %1646 = vmatprep.mubr.bf16.mxu0 0
    %1647 = vmatmul.mubr.bf16.gmra.mrb[0].mxu0 %v1040
    %v1648 = vpop.f32.mrb[0].mxu0
    %v1649 = vadd.f32 %v1122, %v1648
    %v1650 = vpop.f32.mrb[0].mxu0
    %v1651 = vadd.f32 %v1126, %v1650
    %v1652 = vpop.f32.mrb[0].mxu0
    %v1653 = vadd.f32 %v1122, %v1652
    %v1654 = vpop.f32.mrb[0].mxu0
    %v1655 = vadd.f32 %v1126, %v1654
    %1656 = vmatprep.mubr.bf16.mxu0 0
    %1657 = vmatmul.mubr.bf16.gmra.mrb[0].mxu0 %v1041
    %v1658 = vpop.f32.mrb[0].mxu0
    %v1659 = vadd.f32 %v1122, %v1658
    %v1660 = vpop.f32.mrb[0].mxu0
    %v1661 = vadd.f32 %v1126, %v1660
    %v1662 = vpop.f32.mrb[0].mxu0
    %v1663 = vadd.f32 %v1122, %v1662
    %v1664 = vpop.f32.mrb[0].mxu0
    %v1665 = vadd.f32 %v1126, %v1664
    %1666 = vmatprep.mubr.bf16.mxu0 0
    %1667 = vmatmul.mubr.bf16.gmra.mrb[0].mxu0 %v1042
    %v1668 = vpop.f32.mrb[0].mxu0
    %v1669 = vadd.f32 %v1122, %v1668
    %v1670 = vpop.f32.mrb[0].mxu0
    %v1671 = vadd.f32 %v1126, %v1670
    %v1672 = vpop.f32.mrb[0].mxu0
    %v1673 = vadd.f32 %v1122, %v1672
    %v1674 = vpop.f32.mrb[0].mxu0
    %v1675 = vadd.f32 %v1126, %v1674
    %1676 = vmatprep.mubr.bf16.mxu0 0
    %1677 = vmatmul.mubr.bf16.gmra.mrb[0].mxu0 %v1043
    %v1678 = vpop.f32.mrb[0].mxu0
    %v1679 = vadd.f32 %v1122, %v1678
    %v1680 = vpop.f32.mrb[0].mxu0
    %v1681 = vadd.f32 %v1126, %v1680
    %v1682 = vpop.f32.mrb[0].mxu0
    %v1683 = vadd.f32 %v1122, %v1682
    %v1684 = vpop.f32.mrb[0].mxu0
    %v1685 = vadd.f32 %v1126, %v1684
    %1686 = vmatprep.mubr.bf16.mxu0 0
    %1687 = vmatmul.mubr.bf16.gmra.mrb[0].mxu0 %v1044
    %v1688 = vpop.f32.mrb[0].mxu0
    %v1689 = vadd.f32 %v1122, %v1688
    %v1690 = vpop.f32.mrb[0].mxu0
    %v1691 = vadd.f32 %v1126, %v1690
    %v1692 = vpop.f32.mrb[0].mxu0
    %v1693 = vadd.f32 %v1122, %v1692
    %v1694 = vpop.f32.mrb[0].mxu0
    %v1695 = vadd.f32 %v1126, %v1694
    %1696 = vdwg.mxu0
    %1697 = vmatprep.subr.bf16.mxu0 %v1348
    %1698 = vmatpush1.bf16.msra.mxu0 %v1347
    %1699 = vmatprep.subr.bf16.mxu0 %v1356
    %1700 = vmatpush1.bf16.msra.mxu0 %v1355
    %1701 = vmatprep.subr.bf16.mxu0 %v1364
    %1702 = vmatpush1.bf16.msra.mxu0 %v1363
    %1703 = vmatprep.subr.bf16.mxu0 %v1372
    %1704 = vmatpush1.bf16.msra.mxu0 %v1371
    %1705 = vmatprep.subr.bf16.mxu0 %v1380
    %1706 = vmatpush1.bf16.msra.mxu0 %v1379
    %1707 = vmatprep.subr.bf16.mxu0 %v1388
    %1708 = vmatpush1.bf16.msra.mxu0 %v1387
    %1709 = vmatprep.subr.bf16.mxu0 %v1396
    %1710 = vmatpush1.bf16.msra.mxu0 %v1395
    %1711 = vmatprep.subr.bf16.mxu0 %v1404
    %1712 = vmatpush1.bf16.msra.mxu0 %v1403
    %1713 = vmatprep.subr.bf16.mxu0 0
    %1714 = vmatpush1.bf16.msra.mxu0 0
    %1715 = vmatprep.subr.bf16.mxu0 0
    %1716 = vmatpush1.bf16.msra.mxu0 0
    %1717 = vmatprep.subr.bf16.mxu0 0
    %1718 = vmatpush1.bf16.msra.mxu0 0
    %1719 = vmatprep.subr.bf16.mxu0 0
    %1720 = vmatpush1.bf16.msra.mxu0 0
    %1721 = vmatprep.subr.bf16.mxu0 0
    %1722 = vmatpush1.bf16.msra.mxu0 0
    %1723 = vmatprep.subr.bf16.mxu0 0
    %1724 = vmatpush1.bf16.msra.mxu0 0
    %1725 = vmatprep.subr.bf16.mxu0 0
    %1726 = vmatpush1.bf16.msra.mxu0 0
    %1727 = vmatprep.subr.bf16.mxu0 0
    %1728 = vmatpush1.bf16.msra.mxu0 0
    %1729 = vmatprep.mubr.bf16.mxu0 0
    %1730 = vmatmul.mubr.bf16.gmra.mrb[0].mxu0 %v1037
    %v1731 = vpop.f32.mrb[0].mxu0
    %v1732 = vadd.f32 %v1130, %v1731
    %v1733 = vpop.f32.mrb[0].mxu0
    %v1734 = vadd.f32 %v1134, %v1733
    %v1735 = vpop.f32.mrb[0].mxu0
    %v1736 = vadd.f32 %v1130, %v1735
    %v1737 = vpop.f32.mrb[0].mxu0
    %v1738 = vadd.f32 %v1134, %v1737
    %1739 = vmatprep.mubr.bf16.mxu0 0
    %1740 = vmatmul.mubr.bf16.gmra.mrb[0].mxu0 %v1038
    %v1741 = vpop.f32.mrb[0].mxu0
    %v1742 = vadd.f32 %v1130, %v1741
    %v1743 = vpop.f32.mrb[0].mxu0
    %v1744 = vadd.f32 %v1134, %v1743
    %v1745 = vpop.f32.mrb[0].mxu0
    %v1746 = vadd.f32 %v1130, %v1745
    %v1747 = vpop.f32.mrb[0].mxu0
    %v1748 = vadd.f32 %v1134, %v1747
    %1749 = vmatprep.mubr.bf16.mxu0 0
    %1750 = vmatmul.mubr.bf16.gmra.mrb[0].mxu0 %v1039
    %v1751 = vpop.f32.mrb[0].mxu0
    %v1752 = vadd.f32 %v1130, %v1751
    %v1753 = vpop.f32.mrb[0].mxu0
    %v1754 = vadd.f32 %v1134, %v1753
    %v1755 = vpop.f32.mrb[0].mxu0
    %v1756 = vadd.f32 %v1130, %v1755
    %v1757 = vpop.f32.mrb[0].mxu0
    %v1758 = vadd.f32 %v1134, %v1757
    %1759 = vmatprep.mubr.bf16.mxu0 0
    %1760 = vmatmul.mubr.bf16.gmra.mrb[0].mxu0 %v1040
    %v1761 = vpop.f32.mrb[0].mxu0
    %v1762 = vadd.f32 %v1130, %v1761
    %v1763 = vpop.f32.mrb[0].mxu0
    %v1764 = vadd.f32 %v1134, %v1763
    %v1765 = vpop.f32.mrb[0].mxu0
    %v1766 = vadd.f32 %v1130, %v1765
    %v1767 = vpop.f32.mrb[0].mxu0
    %v1768 = vadd.f32 %v1134, %v1767
    %1769 = vmatprep.mubr.bf16.mxu0 0
    %1770 = vmatmul.mubr.bf16.gmra.mrb[0].mxu0 %v1041
    %v1771 = vpop.f32.mrb[0].mxu0
    %v1772 = vadd.f32 %v1130, %v1771
    %v1773 = vpop.f32.mrb[0].mxu0
    %v1774 = vadd.f32 %v1134, %v1773
    %v1775 = vpop.f32.mrb[0].mxu0
    %v1776 = vadd.f32 %v1130, %v1775
    %v1777 = vpop.f32.mrb[0].mxu0
    %v1778 = vadd.f32 %v1134, %v1777
    %1779 = vmatprep.mubr.bf16.mxu0 0
    %1780 = vmatmul.mubr.bf16.gmra.mrb[0].mxu0 %v1042
    %v1781 = vpop.f32.mrb[0].mxu0
    %v1782 = vadd.f32 %v1130, %v1781
    %v1783 = vpop.f32.mrb[0].mxu0
    %v1784 = vadd.f32 %v1134, %v1783
    %v1785 = vpop.f32.mrb[0].mxu0
    %v1786 = vadd.f32 %v1130, %v1785
    %v1787 = vpop.f32.mrb[0].mxu0
    %v1788 = vadd.f32 %v1134, %v1787
    %1789 = vmatprep.mubr.bf16.mxu0 0
    %1790 = vmatmul.mubr.bf16.gmra.mrb[0].mxu0 %v1043
    %v1791 = vpop.f32.mrb[0].mxu0
    %v1792 = vadd.f32 %v1130, %v1791
    %v1793 = vpop.f32.mrb[0].mxu0
    %v1794 = vadd.f32 %v1134, %v1793
    %v1795 = vpop.f32.mrb[0].mxu0
    %v1796 = vadd.f32 %v1130, %v1795
    %v1797 = vpop.f32.mrb[0].mxu0
    %v1798 = vadd.f32 %v1134, %v1797
    %1799 = vmatprep.mubr.bf16.mxu0 0
    %1800 = vmatmul.mubr.bf16.gmra.mrb[0].mxu0 %v1044
    %v1801 = vpop.f32.mrb[0].mxu0
    %v1802 = vadd.f32 %v1130, %v1801
    %v1803 = vpop.f32.mrb[0].mxu0
    %v1804 = vadd.f32 %v1134, %v1803
    %v1805 = vpop.f32.mrb[0].mxu0
    %v1806 = vadd.f32 %v1130, %v1805
    %v1807 = vpop.f32.mrb[0].mxu0
    %v1808 = vadd.f32 %v1134, %v1807
    %1809 = vdwg.mxu0
    %1810 = vmatprep.subr.bf16.mxu0 %v1350
    %1811 = vmatpush1.bf16.msra.mxu0 %v1349
    %1812 = vmatprep.subr.bf16.mxu0 %v1358
    %1813 = vmatpush1.bf16.msra.mxu0 %v1357
    %1814 = vmatprep.subr.bf16.mxu0 %v1366
    %1815 = vmatpush1.bf16.msra.mxu0 %v1365
    %1816 = vmatprep.subr.bf16.mxu0 %v1374
    %1817 = vmatpush1.bf16.msra.mxu0 %v1373
    %1818 = vmatprep.subr.bf16.mxu0 %v1382
    %1819 = vmatpush1.bf16.msra.mxu0 %v1381
    %1820 = vmatprep.subr.bf16.mxu0 %v1390
    %1821 = vmatpush1.bf16.msra.mxu0 %v1389
    %1822 = vmatprep.subr.bf16.mxu0 %v1398
    %1823 = vmatpush1.bf16.msra.mxu0 %v1397
    %1824 = vmatprep.subr.bf16.mxu0 %v1406
    %1825 = vmatpush1.bf16.msra.mxu0 %v1405
    %1826 = vmatprep.subr.bf16.mxu0 0
    %1827 = vmatpush1.bf16.msra.mxu0 0
    %1828 = vmatprep.subr.bf16.mxu0 0
    %1829 = vmatpush1.bf16.msra.mxu0 0
    %1830 = vmatprep.subr.bf16.mxu0 0
    %1831 = vmatpush1.bf16.msra.mxu0 0
    %1832 = vmatprep.subr.bf16.mxu0 0
    %1833 = vmatpush1.bf16.msra.mxu0 0
    %1834 = vmatprep.subr.bf16.mxu0 0
    %1835 = vmatpush1.bf16.msra.mxu0 0
    %1836 = vmatprep.subr.bf16.mxu0 0
    %1837 = vmatpush1.bf16.msra.mxu0 0
    %1838 = vmatprep.subr.bf16.mxu0 0
    %1839 = vmatpush1.bf16.msra.mxu0 0
    %1840 = vmatprep.subr.bf16.mxu0 0
    %1841 = vmatpush1.bf16.msra.mxu0 0
    %1842 = vmatprep.mubr.bf16.mxu0 0
    %1843 = vmatmul.mubr.bf16.gmra.mrb[0].mxu0 %v1037
    %v1844 = vpop.f32.mrb[0].mxu0
    %v1845 = vadd.f32 %v1138, %v1844
    %v1846 = vpop.f32.mrb[0].mxu0
    %v1847 = vadd.f32 %v1142, %v1846
    %v1848 = vpop.f32.mrb[0].mxu0
    %v1849 = vadd.f32 %v1138, %v1848
    %v1850 = vpop.f32.mrb[0].mxu0
    %v1851 = vadd.f32 %v1142, %v1850
    %1852 = vmatprep.mubr.bf16.mxu0 0
    %1853 = vmatmul.mubr.bf16.gmra.mrb[0].mxu0 %v1038
    %v1854 = vpop.f32.mrb[0].mxu0
    %v1855 = vadd.f32 %v1138, %v1854
    %v1856 = vpop.f32.mrb[0].mxu0
    %v1857 = vadd.f32 %v1142, %v1856
    %v1858 = vpop.f32.mrb[0].mxu0
    %v1859 = vadd.f32 %v1138, %v1858
    %v1860 = vpop.f32.mrb[0].mxu0
    %v1861 = vadd.f32 %v1142, %v1860
    %1862 = vmatprep.mubr.bf16.mxu0 0
    %1863 = vmatmul.mubr.bf16.gmra.mrb[0].mxu0 %v1039
    %v1864 = vpop.f32.mrb[0].mxu0
    %v1865 = vadd.f32 %v1138, %v1864
    %v1866 = vpop.f32.mrb[0].mxu0
    %v1867 = vadd.f32 %v1142, %v1866
    %v1868 = vpop.f32.mrb[0].mxu0
    %v1869 = vadd.f32 %v1138, %v1868
    %v1870 = vpop.f32.mrb[0].mxu0
    %v1871 = vadd.f32 %v1142, %v1870
    %1872 = vmatprep.mubr.bf16.mxu0 0
    %1873 = vmatmul.mubr.bf16.gmra.mrb[0].mxu0 %v1040
    %v1874 = vpop.f32.mrb[0].mxu0
    %v1875 = vadd.f32 %v1138, %v1874
    %v1876 = vpop.f32.mrb[0].mxu0
    %v1877 = vadd.f32 %v1142, %v1876
    %v1878 = vpop.f32.mrb[0].mxu0
    %v1879 = vadd.f32 %v1138, %v1878
    %v1880 = vpop.f32.mrb[0].mxu0
    %v1881 = vadd.f32 %v1142, %v1880
    %1882 = vmatprep.mubr.bf16.mxu0 0
    %1883 = vmatmul.mubr.bf16.gmra.mrb[0].mxu0 %v1041
    %v1884 = vpop.f32.mrb[0].mxu0
    %v1885 = vadd.f32 %v1138, %v1884
    %v1886 = vpop.f32.mrb[0].mxu0
    %v1887 = vadd.f32 %v1142, %v1886
    %v1888 = vpop.f32.mrb[0].mxu0
    %v1889 = vadd.f32 %v1138, %v1888
    %v1890 = vpop.f32.mrb[0].mxu0
    %v1891 = vadd.f32 %v1142, %v1890
    %1892 = vmatprep.mubr.bf16.mxu0 0
    %1893 = vmatmul.mubr.bf16.gmra.mrb[0].mxu0 %v1042
    %v1894 = vpop.f32.mrb[0].mxu0
    %v1895 = vadd.f32 %v1138, %v1894
    %v1896 = vpop.f32.mrb[0].mxu0
    %v1897 = vadd.f32 %v1142, %v1896
    %v1898 = vpop.f32.mrb[0].mxu0
    %v1899 = vadd.f32 %v1138, %v1898
    %v1900 = vpop.f32.mrb[0].mxu0
    %v1901 = vadd.f32 %v1142, %v1900
    %1902 = vmatprep.mubr.bf16.mxu0 0
    %1903 = vmatmul.mubr.bf16.gmra.mrb[0].mxu0 %v1043
    %v1904 = vpop.f32.mrb[0].mxu0
    %v1905 = vadd.f32 %v1138, %v1904
    %v1906 = vpop.f32.mrb[0].mxu0
    %v1907 = vadd.f32 %v1142, %v1906
    %v1908 = vpop.f32.mrb[0].mxu0
    %v1909 = vadd.f32 %v1138, %v1908
    %v1910 = vpop.f32.mrb[0].mxu0
    %v1911 = vadd.f32 %v1142, %v1910
    %1912 = vmatprep.mubr.bf16.mxu0 0
    %1913 = vmatmul.mubr.bf16.gmra.mrb[0].mxu0 %v1044
    %v1914 = vpop.f32.mrb[0].mxu0
    %v1915 = vadd.f32 %v1138, %v1914
    %v1916 = vpop.f32.mrb[0].mxu0
    %v1917 = vadd.f32 %v1142, %v1916
    %v1918 = vpop.f32.mrb[0].mxu0
    %v1919 = vadd.f32 %v1138, %v1918
    %v1920 = vpop.f32.mrb[0].mxu0
    %v1921 = vadd.f32 %v1142, %v1920
    %1922 = vdwg.mxu0
    %v1923 = vmax.f32 %v1506, 0.0
    %v1924 = vmax.f32 %v1508, 0.0
    %v1925 = vmax.f32 %v1619, 0.0
    %v1926 = vmax.f32 %v1621, 0.0
    %v1927 = vmax.f32 %v1732, 0.0
    %v1928 = vmax.f32 %v1734, 0.0
    %v1929 = vmax.f32 %v1845, 0.0
    %v1930 = vmax.f32 %v1847, 0.0
    %v1931 = vmax.f32 %v1510, 0.0
    %v1932 = vmax.f32 %v1512, 0.0
    %v1933 = vmax.f32 %v1623, 0.0
    %v1934 = vmax.f32 %v1625, 0.0
    %v1935 = vmax.f32 %v1736, 0.0
    %v1936 = vmax.f32 %v1738, 0.0
    %v1937 = vmax.f32 %v1849, 0.0
    %v1938 = vmax.f32 %v1851, 0.0
    %v1939 = vmax.f32 %v1516, 0.0
    %v1940 = vmax.f32 %v1518, 0.0
    %v1941 = vmax.f32 %v1629, 0.0
    %v1942 = vmax.f32 %v1631, 0.0
    %v1943 = vmax.f32 %v1742, 0.0
    %v1944 = vmax.f32 %v1744, 0.0
    %v1945 = vmax.f32 %v1855, 0.0
    %v1946 = vmax.f32 %v1857, 0.0
    %v1947 = vmax.f32 %v1520, 0.0
    %v1948 = vmax.f32 %v1522, 0.0
    %v1949 = vmax.f32 %v1633, 0.0
    %v1950 = vmax.f32 %v1635, 0.0
    %v1951 = vmax.f32 %v1746, 0.0
    %v1952 = vmax.f32 %v1748, 0.0
    %v1953 = vmax.f32 %v1859, 0.0
    %v1954 = vmax.f32 %v1861, 0.0
    %v1955 = vmax.f32 %v1526, 0.0
    %v1956 = vmax.f32 %v1528, 0.0
    %v1957 = vmax.f32 %v1639, 0.0
    %v1958 = vmax.f32 %v1641, 0.0
    %v1959 = vmax.f32 %v1752, 0.0
    %v1960 = vmax.f32 %v1754, 0.0
    %v1961 = vmax.f32 %v1865, 0.0
    %v1962 = vmax.f32 %v1867, 0.0
    %v1963 = vmax.f32 %v1530, 0.0
    %v1964 = vmax.f32 %v1532, 0.0
    %v1965 = vmax.f32 %v1643, 0.0
    %v1966 = vmax.f32 %v1645, 0.0
    %v1967 = vmax.f32 %v1756, 0.0
    %v1968 = vmax.f32 %v1758, 0.0
    %v1969 = vmax.f32 %v1869, 0.0
    %v1970 = vmax.f32 %v1871, 0.0
    %v1971 = vmax.f32 %v1536, 0.0
    %v1972 = vmax.f32 %v1538, 0.0
    %v1973 = vmax.f32 %v1649, 0.0
    %v1974 = vmax.f32 %v1651, 0.0
    %v1975 = vmax.f32 %v1762, 0.0
    %v1976 = vmax.f32 %v1764, 0.0
    %v1977 = vmax.f32 %v1875, 0.0
    %v1978 = vmax.f32 %v1877, 0.0
    %v1979 = vmax.f32 %v1540, 0.0
    %v1980 = vmax.f32 %v1542, 0.0
    %v1981 = vmax.f32 %v1653, 0.0
    %v1982 = vmax.f32 %v1655, 0.0
    %v1983 = vmax.f32 %v1766, 0.0
    %v1984 = vmax.f32 %v1768, 0.0
    %v1985 = vmax.f32 %v1879, 0.0
    %v1986 = vmax.f32 %v1881, 0.0
    %v1987 = vmax.f32 %v1546, 0.0
    %v1988 = vmax.f32 %v1548, 0.0
    %v1989 = vmax.f32 %v1659, 0.0
    %v1990 = vmax.f32 %v1661, 0.0
    %v1991 = vmax.f32 %v1772, 0.0
    %v1992 = vmax.f32 %v1774, 0.0
    %v1993 = vmax.f32 %v1885, 0.0
    %v1994 = vmax.f32 %v1887, 0.0
    %v1995 = vmax.f32 %v1550, 0.0
    %v1996 = vmax.f32 %v1552, 0.0
    %v1997 = vmax.f32 %v1663, 0.0
    %v1998 = vmax.f32 %v1665, 0.0
    %v1999 = vmax.f32 %v1776, 0.0
    %v2000 = vmax.f32 %v1778, 0.0
    %v2001 = vmax.f32 %v1889, 0.0
    %v2002 = vmax.f32 %v1891, 0.0
    %v2003 = vmax.f32 %v1556, 0.0
    %v2004 = vmax.f32 %v1558, 0.0
    %v2005 = vmax.f32 %v1669, 0.0
    %v2006 = vmax.f32 %v1671, 0.0
    %v2007 = vmax.f32 %v1782, 0.0
    %v2008 = vmax.f32 %v1784, 0.0
    %v2009 = vmax.f32 %v1895, 0.0
    %v2010 = vmax.f32 %v1897, 0.0
    %v2011 = vmax.f32 %v1560, 0.0
    %v2012 = vmax.f32 %v1562, 0.0
    %v2013 = vmax.f32 %v1673, 0.0
    %v2014 = vmax.f32 %v1675, 0.0
    %v2015 = vmax.f32 %v1786, 0.0
    %v2016 = vmax.f32 %v1788, 0.0
    %v2017 = vmax.f32 %v1899, 0.0
    %v2018 = vmax.f32 %v1901, 0.0
    %v2019 = vmax.f32 %v1566, 0.0
    %v2020 = vmax.f32 %v1568, 0.0
    %v2021 = vmax.f32 %v1679, 0.0
    %v2022 = vmax.f32 %v1681, 0.0
    %v2023 = vmax.f32 %v1792, 0.0
    %v2024 = vmax.f32 %v1794, 0.0
    %v2025 = vmax.f32 %v1905, 0.0
    %v2026 = vmax.f32 %v1907, 0.0
    %v2027 = vmax.f32 %v1570, 0.0
    %v2028 = vmax.f32 %v1572, 0.0
    %v2029 = vmax.f32 %v1683, 0.0
    %v2030 = vmax.f32 %v1685, 0.0
    %v2031 = vmax.f32 %v1796, 0.0
    %v2032 = vmax.f32 %v1798, 0.0
    %v2033 = vmax.f32 %v1909, 0.0
    %v2034 = vmax.f32 %v1911, 0.0
    %v2035 = vmax.f32 %v1576, 0.0
    %v2036 = vmax.f32 %v1578, 0.0
    %v2037 = vmax.f32 %v1689, 0.0
    %v2038 = vmax.f32 %v1691, 0.0
    %v2039 = vmax.f32 %v1802, 0.0
    %v2040 = vmax.f32 %v1804, 0.0
    %v2041 = vmax.f32 %v1915, 0.0
    %v2042 = vmax.f32 %v1917, 0.0
    %v2043 = vmax.f32 %v1580, 0.0
    %v2044 = vmax.f32 %v1582, 0.0
    %v2045 = vmax.f32 %v1693, 0.0
    %v2046 = vmax.f32 %v1695, 0.0
    %v2047 = vmax.f32 %v1806, 0.0
    %v2048 = vmax.f32 %v1808, 0.0
    %v2049 = vmax.f32 %v1919, 0.0
    %v2050 = vmax.f32 %v1921, 0.0
    %v2051 = vmax.f32 %v1923, %v1931
    %v2052 = vmax.f32 %v2051, %v1939
    %v2053 = vmax.f32 %v2052, %v1947
    %v2054 = vmax.f32 %v2053, %v1955
    %v2055 = vmax.f32 %v2054, %v1963
    %v2056 = vmax.f32 %v2055, %v1971
    %v2057 = vmax.f32 %v2056, %v1979
    %v2058 = vrot.slane %v2057, 4
    %v2059 = vmax.f32 %v2057, %v2058
    %v2060 = vrot.slane %v2059, 2
    %v2061 = vmax.f32 %v2059, %v2060
    %v2062 = vrot.slane %v2061, 1
    %v2063 = vmax.f32 %v2061, %v2062
    %v2064 = vmax.f32 %v1924, %v1932
    %v2065 = vmax.f32 %v2064, %v1940
    %v2066 = vmax.f32 %v2065, %v1948
    %v2067 = vmax.f32 %v2066, %v1956
    %v2068 = vmax.f32 %v2067, %v1964
    %v2069 = vmax.f32 %v2068, %v1972
    %v2070 = vmax.f32 %v2069, %v1980
    %v2071 = vrot.slane %v2070, 4
    %v2072 = vmax.f32 %v2070, %v2071
    %v2073 = vrot.slane %v2072, 2
    %v2074 = vmax.f32 %v2072, %v2073
    %v2075 = vrot.slane %v2074, 1
    %v2076 = vmax.f32 %v2074, %v2075
    %v2077 = vmax.f32 %v1925, %v1933
    %v2078 = vmax.f32 %v2077, %v1941
    %v2079 = vmax.f32 %v2078, %v1949
    %v2080 = vmax.f32 %v2079, %v1957
    %v2081 = vmax.f32 %v2080, %v1965
    %v2082 = vmax.f32 %v2081, %v1973
    %v2083 = vmax.f32 %v2082, %v1981
    %v2084 = vrot.slane %v2083, 4
    %v2085 = vmax.f32 %v2083, %v2084
    %v2086 = vrot.slane %v2085, 2
    %v2087 = vmax.f32 %v2085, %v2086
    %v2088 = vrot.slane %v2087, 1
    %v2089 = vmax.f32 %v2087, %v2088
    %v2090 = vmax.f32 %v1926, %v1934
    %v2091 = vmax.f32 %v2090, %v1942
    %v2092 = vmax.f32 %v2091, %v1950
    %v2093 = vmax.f32 %v2092, %v1958
    %v2094 = vmax.f32 %v2093, %v1966
    %v2095 = vmax.f32 %v2094, %v1974
    %v2096 = vmax.f32 %v2095, %v1982
    %v2097 = vrot.slane %v2096, 4
    %v2098 = vmax.f32 %v2096, %v2097
    %v2099 = vrot.slane %v2098, 2
    %v2100 = vmax.f32 %v2098, %v2099
    %v2101 = vrot.slane %v2100, 1
    %v2102 = vmax.f32 %v2100, %v2101
    %v2103 = vmax.f32 %v1927, %v1935
    %v2104 = vmax.f32 %v2103, %v1943
    %v2105 = vmax.f32 %v2104, %v1951
    %v2106 = vmax.f32 %v2105, %v1959
    %v2107 = vmax.f32 %v2106, %v1967
    %v2108 = vmax.f32 %v2107, %v1975
    %v2109 = vmax.f32 %v2108, %v1983
    %v2110 = vrot.slane %v2109, 4
    %v2111 = vmax.f32 %v2109, %v2110
    %v2112 = vrot.slane %v2111, 2
    %v2113 = vmax.f32 %v2111, %v2112
    %v2114 = vrot.slane %v2113, 1
    %v2115 = vmax.f32 %v2113, %v2114
    %v2116 = vmax.f32 %v1928, %v1936
    %v2117 = vmax.f32 %v2116, %v1944
    %v2118 = vmax.f32 %v2117, %v1952
    %v2119 = vmax.f32 %v2118, %v1960
    %v2120 = vmax.f32 %v2119, %v1968
    %v2121 = vmax.f32 %v2120, %v1976
    %v2122 = vmax.f32 %v2121, %v1984
    %v2123 = vrot.slane %v2122, 4
    %v2124 = vmax.f32 %v2122, %v2123
    %v2125 = vrot.slane %v2124, 2
    %v2126 = vmax.f32 %v2124, %v2125
    %v2127 = vrot.slane %v2126, 1
    %v2128 = vmax.f32 %v2126, %v2127
    %v2129 = vmax.f32 %v1929, %v1937
    %v2130 = vmax.f32 %v2129, %v1945
    %v2131 = vmax.f32 %v2130, %v1953
    %v2132 = vmax.f32 %v2131, %v1961
    %v2133 = vmax.f32 %v2132, %v1969
    %v2134 = vmax.f32 %v2133, %v1977
    %v2135 = vmax.f32 %v2134, %v1985
    %v2136 = vrot.slane %v2135, 4
    %v2137 = vmax.f32 %v2135, %v2136
    %v2138 = vrot.slane %v2137, 2
    %v2139 = vmax.f32 %v2137, %v2138
    %v2140 = vrot.slane %v2139, 1
    %v2141 = vmax.f32 %v2139, %v2140
    %v2142 = vmax.f32 %v1930, %v1938
    %v2143 = vmax.f32 %v2142, %v1946
    %v2144 = vmax.f32 %v2143, %v1954
    %v2145 = vmax.f32 %v2144, %v1962
    %v2146 = vmax.f32 %v2145, %v1970
    %v2147 = vmax.f32 %v2146, %v1978
    %v2148 = vmax.f32 %v2147, %v1986
    %v2149 = vrot.slane %v2148, 4
    %v2150 = vmax.f32 %v2148, %v2149
    %v2151 = vrot.slane %v2150, 2
    %v2152 = vmax.f32 %v2150, %v2151
    %v2153 = vrot.slane %v2152, 1
    %v2154 = vmax.f32 %v2152, %v2153
    %v2155 = vld [vmem:[#allocation3] ss:$2 sm:$0xff]
    %v2164 = vcombine.low %v2063, %v2076
    %v2165 = vcombine.low %v2089, %v2102
    %v2166 = vcombine.low %v2115, %v2128
    %v2167 = vcombine.low %v2141, %v2154
    %v2169 = vunpack.c.l.s4 1966171168
    %v2170 = vunpack.c.0.s8 %v2169
    %v2171 = vlaneseq
    %v2172 = vshrl.u32 %v2171, 7
    %v2173 = vsub.s32 %v2170, %v2172
    %v2174 = vrot.slane %v2164, %v2173
    %v2176 = vunpack.c.l.s4 1966171168
    %v2177 = vunpack.c.0.s8 %v2176
    %v2178 = vlaneseq
    %v2179 = vshrl.u32 %v2178, 7
    %v2180 = vsub.s32 %v2177, %v2179
    %v2181 = vrot.slane %v2165, %v2180
    %v2183 = vunpack.c.l.s4 1966171168
    %v2184 = vunpack.c.0.s8 %v2183
    %v2185 = vlaneseq
    %v2186 = vshrl.u32 %v2185, 7
    %v2187 = vsub.s32 %v2184, %v2186
    %v2188 = vrot.slane %v2166, %v2187
    %v2190 = vunpack.c.l.s4 1966171168
    %v2191 = vunpack.c.0.s8 %v2190
    %v2192 = vlaneseq
    %v2193 = vshrl.u32 %v2192, 7
    %v2194 = vsub.s32 %v2191, %v2193
    %v2195 = vrot.slane %v2167, %v2194
    %v2196 = vcombine.low %v2174, %v2181
    %v2197 = vcombine.low %v2188, %v2195
    %v2199 = vunpack.c.l.s4 1966171168
    %v2200 = vunpack.c.0.s8 %v2199
    %v2201 = vlaneseq
    %v2202 = vshrl.u32 %v2201, 7
    %v2203 = vsub.s32 %v2200, %v2202
    %v2204 = vrot.slane %v2196, %v2203
    %v2206 = vunpack.c.l.s4 1966171168
    %v2207 = vunpack.c.0.s8 %v2206
    %v2208 = vlaneseq
    %v2209 = vshrl.u32 %v2208, 7
    %v2210 = vsub.s32 %v2207, %v2209
    %v2211 = vrot.slane %v2197, %v2210
    %v2212 = vcombine.low %v2204, %v2211
    %v2214 = vmax.f32 %v2155, %v2212
    %2215 = vst [vmem:[#allocation3] ss:$2 sm:$0xff] %v2214
    %v2216 = vmax.f32 %v1987, %v1995
    %v2217 = vmax.f32 %v2216, %v2003
    %v2218 = vmax.f32 %v2217, %v2011
    %v2219 = vmax.f32 %v2218, %v2019
    %v2220 = vmax.f32 %v2219, %v2027
    %v2221 = vmax.f32 %v2220, %v2035
    %v2222 = vmax.f32 %v2221, %v2043
    %v2223 = vrot.slane %v2222, 4
    %v2224 = vmax.f32 %v2222, %v2223
    %v2225 = vrot.slane %v2224, 2
    %v2226 = vmax.f32 %v2224, %v2225
    %v2227 = vrot.slane %v2226, 1
    %v2228 = vmax.f32 %v2226, %v2227
    %v2229 = vmax.f32 %v1988, %v1996
    %v2230 = vmax.f32 %v2229, %v2004
    %v2231 = vmax.f32 %v2230, %v2012
    %v2232 = vmax.f32 %v2231, %v2020
    %v2233 = vmax.f32 %v2232, %v2028
    %v2234 = vmax.f32 %v2233, %v2036
    %v2235 = vmax.f32 %v2234, %v2044
    %v2236 = vrot.slane %v2235, 4
    %v2237 = vmax.f32 %v2235, %v2236
    %v2238 = vrot.slane %v2237, 2
    %v2239 = vmax.f32 %v2237, %v2238
    %v2240 = vrot.slane %v2239, 1
    %v2241 = vmax.f32 %v2239, %v2240
    %v2242 = vmax.f32 %v1989, %v1997
    %v2243 = vmax.f32 %v2242, %v2005
    %v2244 = vmax.f32 %v2243, %v2013
    %v2245 = vmax.f32 %v2244, %v2021
    %v2246 = vmax.f32 %v2245, %v2029
    %v2247 = vmax.f32 %v2246, %v2037
    %v2248 = vmax.f32 %v2247, %v2045
    %v2249 = vrot.slane %v2248, 4
    %v2250 = vmax.f32 %v2248, %v2249
    %v2251 = vrot.slane %v2250, 2
    %v2252 = vmax.f32 %v2250, %v2251
    %v2253 = vrot.slane %v2252, 1
    %v2254 = vmax.f32 %v2252, %v2253
    %v2255 = vmax.f32 %v1990, %v1998
    %v2256 = vmax.f32 %v2255, %v2006
    %v2257 = vmax.f32 %v2256, %v2014
    %v2258 = vmax.f32 %v2257, %v2022
    %v2259 = vmax.f32 %v2258, %v2030
    %v2260 = vmax.f32 %v2259, %v2038
    %v2261 = vmax.f32 %v2260, %v2046
    %v2262 = vrot.slane %v2261, 4
    %v2263 = vmax.f32 %v2261, %v2262
    %v2264 = vrot.slane %v2263, 2
    %v2265 = vmax.f32 %v2263, %v2264
    %v2266 = vrot.slane %v2265, 1
    %v2267 = vmax.f32 %v2265, %v2266
    %v2268 = vmax.f32 %v1991, %v1999
    %v2269 = vmax.f32 %v2268, %v2007
    %v2270 = vmax.f32 %v2269, %v2015
    %v2271 = vmax.f32 %v2270, %v2023
    %v2272 = vmax.f32 %v2271, %v2031
    %v2273 = vmax.f32 %v2272, %v2039
    %v2274 = vmax.f32 %v2273, %v2047
    %v2275 = vrot.slane %v2274, 4
    %v2276 = vmax.f32 %v2274, %v2275
    %v2277 = vrot.slane %v2276, 2
    %v2278 = vmax.f32 %v2276, %v2277
    %v2279 = vrot.slane %v2278, 1
    %v2280 = vmax.f32 %v2278, %v2279
    %v2281 = vmax.f32 %v1992, %v2000
    %v2282 = vmax.f32 %v2281, %v2008
    %v2283 = vmax.f32 %v2282, %v2016
    %v2284 = vmax.f32 %v2283, %v2024
    %v2285 = vmax.f32 %v2284, %v2032
    %v2286 = vmax.f32 %v2285, %v2040
    %v2287 = vmax.f32 %v2286, %v2048
    %v2288 = vrot.slane %v2287, 4
    %v2289 = vmax.f32 %v2287, %v2288
    %v2290 = vrot.slane %v2289, 2
    %v2291 = vmax.f32 %v2289, %v2290
    %v2292 = vrot.slane %v2291, 1
    %v2293 = vmax.f32 %v2291, %v2292
    %v2294 = vmax.f32 %v1993, %v2001
    %v2295 = vmax.f32 %v2294, %v2009
    %v2296 = vmax.f32 %v2295, %v2017
    %v2297 = vmax.f32 %v2296, %v2025
    %v2298 = vmax.f32 %v2297, %v2033
    %v2299 = vmax.f32 %v2298, %v2041
    %v2300 = vmax.f32 %v2299, %v2049
    %v2301 = vrot.slane %v2300, 4
    %v2302 = vmax.f32 %v2300, %v2301
    %v2303 = vrot.slane %v2302, 2
    %v2304 = vmax.f32 %v2302, %v2303
    %v2305 = vrot.slane %v2304, 1
    %v2306 = vmax.f32 %v2304, %v2305
    %v2307 = vmax.f32 %v1994, %v2002
    %v2308 = vmax.f32 %v2307, %v2010
    %v2309 = vmax.f32 %v2308, %v2018
    %v2310 = vmax.f32 %v2309, %v2026
    %v2311 = vmax.f32 %v2310, %v2034
    %v2312 = vmax.f32 %v2311, %v2042
    %v2313 = vmax.f32 %v2312, %v2050
    %v2314 = vrot.slane %v2313, 4
    %v2315 = vmax.f32 %v2313, %v2314
    %v2316 = vrot.slane %v2315, 2
    %v2317 = vmax.f32 %v2315, %v2316
    %v2318 = vrot.slane %v2317, 1
    %v2319 = vmax.f32 %v2317, %v2318
    %s2320 = scalar_lea.vmem [#allocation3], 1
    %v2321 = vld [vmem:[%s2320] ss:$2 sm:$0xff]
    %v2330 = vcombine.low %v2228, %v2241
    %v2331 = vcombine.low %v2254, %v2267
    %v2332 = vcombine.low %v2280, %v2293
    %v2333 = vcombine.low %v2306, %v2319
    %v2335 = vunpack.c.l.s4 1966171168
    %v2336 = vunpack.c.0.s8 %v2335
    %v2337 = vlaneseq
    %v2338 = vshrl.u32 %v2337, 7
    %v2339 = vsub.s32 %v2336, %v2338
    %v2340 = vrot.slane %v2330, %v2339
    %v2342 = vunpack.c.l.s4 1966171168
    %v2343 = vunpack.c.0.s8 %v2342
    %v2344 = vlaneseq
    %v2345 = vshrl.u32 %v2344, 7
    %v2346 = vsub.s32 %v2343, %v2345
    %v2347 = vrot.slane %v2331, %v2346
    %v2349 = vunpack.c.l.s4 1966171168
    %v2350 = vunpack.c.0.s8 %v2349
    %v2351 = vlaneseq
    %v2352 = vshrl.u32 %v2351, 7
    %v2353 = vsub.s32 %v2350, %v2352
    %v2354 = vrot.slane %v2332, %v2353
    %v2356 = vunpack.c.l.s4 1966171168
    %v2357 = vunpack.c.0.s8 %v2356
    %v2358 = vlaneseq
    %v2359 = vshrl.u32 %v2358, 7
    %v2360 = vsub.s32 %v2357, %v2359
    %v2361 = vrot.slane %v2333, %v2360
    %v2362 = vcombine.low %v2340, %v2347
    %v2363 = vcombine.low %v2354, %v2361
    %v2365 = vunpack.c.l.s4 1966171168
    %v2366 = vunpack.c.0.s8 %v2365
    %v2367 = vlaneseq
    %v2368 = vshrl.u32 %v2367, 7
    %v2369 = vsub.s32 %v2366, %v2368
    %v2370 = vrot.slane %v2362, %v2369
    %v2372 = vunpack.c.l.s4 1966171168
    %v2373 = vunpack.c.0.s8 %v2372
    %v2374 = vlaneseq
    %v2375 = vshrl.u32 %v2374, 7
    %v2376 = vsub.s32 %v2373, %v2375
    %v2377 = vrot.slane %v2363, %v2376
    %v2378 = vcombine.low %v2370, %v2377
    %v2380 = vmax.f32 %v2321, %v2378
    %2381 = vst [vmem:[%s2320] ss:$2 sm:$0xff] %v2380
    %v2382 = vld [vmem:[#allocation3] sm:$0xff]
    %v2383 = vld [vmem:[#allocation3 + $0x8] sm:$0xff]
    %v2386 = vcombine.high %v2382, %v2382
    %v2388 = vunpack.c.l.s4 1983009808
    %v2389 = vunpack.c.0.s8 %v2388
    %v2390 = vlaneseq
    %v2391 = vshrl.u32 %v2390, 7
    %v2392 = vsub.s32 %v2389, %v2391
    %v2393 = vrot.slane %v2382, %v2392
    %v2395 = vunpack.c.l.s4 1983009808
    %v2396 = vunpack.c.0.s8 %v2395
    %v2397 = vlaneseq
    %v2398 = vshrl.u32 %v2397, 7
    %v2399 = vsub.s32 %v2396, %v2398
    %v2400 = vrot.slane %v2386, %v2399
    %v2401 = vcombine.high %v2393, %v2393
    %v2402 = vcombine.high %v2400, %v2400
    %v2403 = vcombine.high %v2383, %v2383
    %v2405 = vunpack.c.l.s4 1983009808
    %v2406 = vunpack.c.0.s8 %v2405
    %v2407 = vlaneseq
    %v2408 = vshrl.u32 %v2407, 7
    %v2409 = vsub.s32 %v2406, %v2408
    %v2410 = vrot.slane %v2383, %v2409
    %v2412 = vunpack.c.l.s4 1983009808
    %v2413 = vunpack.c.0.s8 %v2412
    %v2414 = vlaneseq
    %v2415 = vshrl.u32 %v2414, 7
    %v2416 = vsub.s32 %v2413, %v2415
    %v2417 = vrot.slane %v2403, %v2416
    %v2418 = vcombine.high %v2410, %v2410
    %v2419 = vcombine.high %v2417, %v2417
    %v2428 = vpack.c.bf16 %v2393, %v2393
    %v2429 = vpack.c.bf16 %v2401, %v2401
    %v2430 = vpack.c.bf16 %v2400, %v2400
    %v2431 = vpack.c.bf16 %v2402, %v2402
    %v2432 = vpack.c.bf16 %v2410, %v2410
    %v2433 = vpack.c.bf16 %v2418, %v2418
    %v2434 = vpack.c.bf16 %v2417, %v2417
    %v2435 = vpack.c.bf16 %v2419, %v2419
    %v2436 = vld [vmem:[#allocation22] sm:$0xff]
    %v2437 = vld [vmem:[#allocation22 + $0x8] sm:$0xff]
    %v2438 = vld [vmem:[#allocation22 + $0x10] sm:$0xff]
    %v2439 = vld [vmem:[#allocation22 + $0x18] sm:$0xff]
    %v2440 = vld [vmem:[#allocation22 + $0x20] sm:$0xff]
    %v2441 = vld [vmem:[#allocation22 + $0x28] sm:$0xff]
    %v2442 = vld [vmem:[#allocation22 + $0x30] sm:$0xff]
    %v2443 = vld [vmem:[#allocation22 + $0x38] sm:$0xff]
    %v2444 = vld [vmem:[#allocation22 + $0x40] sm:$0xff]
    %v2445 = vld [vmem:[#allocation22 + $0x48] sm:$0xff]
    %v2446 = vld [vmem:[#allocation22 + $0x50] sm:$0xff]
    %v2447 = vld [vmem:[#allocation22 + $0x58] sm:$0xff]
    %v2448 = vld [vmem:[#allocation22 + $0x60] sm:$0xff]
    %v2449 = vld [vmem:[#allocation22 + $0x68] sm:$0xff]
    %v2450 = vld [vmem:[#allocation22 + $0x70] sm:$0xff]
    %v2451 = vld [vmem:[#allocation22 + $0x78] sm:$0xff]
    %v2452 = vld [vmem:[#allocation22 + $0x80] sm:$0xff]
    %v2453 = vld [vmem:[#allocation22 + $0x88] sm:$0xff]
    %v2454 = vld [vmem:[#allocation22 + $0x90] sm:$0xff]
    %v2455 = vld [vmem:[#allocation22 + $0x98] sm:$0xff]
    %v2456 = vld [vmem:[#allocation22 + $0xa0] sm:$0xff]
    %v2457 = vld [vmem:[#allocation22 + $0xa8] sm:$0xff]
    %v2458 = vld [vmem:[#allocation22 + $0xb0] sm:$0xff]
    %v2459 = vld [vmem:[#allocation22 + $0xb8] sm:$0xff]
    %v2460 = vld [vmem:[#allocation22 + $0xc0] sm:$0xff]
    %v2461 = vld [vmem:[#allocation22 + $0xc8] sm:$0xff]
    %v2462 = vld [vmem:[#allocation22 + $0xd0] sm:$0xff]
    %v2463 = vld [vmem:[#allocation22 + $0xd8] sm:$0xff]
    %v2464 = vld [vmem:[#allocation22 + $0xe0] sm:$0xff]
    %v2465 = vld [vmem:[#allocation22 + $0xe8] sm:$0xff]
    %v2466 = vld [vmem:[#allocation22 + $0xf0] sm:$0xff]
    %v2467 = vld [vmem:[#allocation22 + $0xf8] sm:$0xff]
    %v2468 = vld [vmem:[#allocation22 + $0x100] sm:$0xff]
    %v2469 = vld [vmem:[#allocation22 + $0x108] sm:$0xff]
    %v2470 = vld [vmem:[#allocation22 + $0x110] sm:$0xff]
    %v2471 = vld [vmem:[#allocation22 + $0x118] sm:$0xff]
    %v2472 = vld [vmem:[#allocation22 + $0x120] sm:$0xff]
    %v2473 = vld [vmem:[#allocation22 + $0x128] sm:$0xff]
    %v2474 = vld [vmem:[#allocation22 + $0x130] sm:$0xff]
    %v2475 = vld [vmem:[#allocation22 + $0x138] sm:$0xff]
    %v2476 = vld [vmem:[#allocation22 + $0x140] sm:$0xff]
    %v2477 = vld [vmem:[#allocation22 + $0x148] sm:$0xff]
    %v2478 = vld [vmem:[#allocation22 + $0x150] sm:$0xff]
    %v2479 = vld [vmem:[#allocation22 + $0x158] sm:$0xff]
    %v2480 = vld [vmem:[#allocation22 + $0x160] sm:$0xff]
    %v2481 = vld [vmem:[#allocation22 + $0x168] sm:$0xff]
    %v2482 = vld [vmem:[#allocation22 + $0x170] sm:$0xff]
    %v2483 = vld [vmem:[#allocation22 + $0x178] sm:$0xff]
    %v2484 = vld [vmem:[#allocation22 + $0x180] sm:$0xff]
    %v2485 = vld [vmem:[#allocation22 + $0x188] sm:$0xff]
    %v2486 = vld [vmem:[#allocation22 + $0x190] sm:$0xff]
    %v2487 = vld [vmem:[#allocation22 + $0x198] sm:$0xff]
    %v2488 = vld [vmem:[#allocation22 + $0x1a0] sm:$0xff]
    %v2489 = vld [vmem:[#allocation22 + $0x1a8] sm:$0xff]
    %v2490 = vld [vmem:[#allocation22 + $0x1b0] sm:$0xff]
    %v2491 = vld [vmem:[#allocation22 + $0x1b8] sm:$0xff]
    %v2492 = vld [vmem:[#allocation22 + $0x1c0] sm:$0xff]
    %v2493 = vld [vmem:[#allocation22 + $0x1c8] sm:$0xff]
    %v2494 = vld [vmem:[#allocation22 + $0x1d0] sm:$0xff]
    %v2495 = vld [vmem:[#allocation22 + $0x1d8] sm:$0xff]
    %v2496 = vld [vmem:[#allocation22 + $0x1e0] sm:$0xff]
    %v2497 = vld [vmem:[#allocation22 + $0x1e8] sm:$0xff]
    %v2498 = vld [vmem:[#allocation22 + $0x1f0] sm:$0xff]
    %v2499 = vld [vmem:[#allocation22 + $0x1f8] sm:$0xff]
    %v2500 = vld [vmem:[#allocation22 + $0x200] sm:$0xff]
    %v2501 = vld [vmem:[#allocation22 + $0x208] sm:$0xff]
    %v2502 = vld [vmem:[#allocation22 + $0x210] sm:$0xff]
    %v2503 = vld [vmem:[#allocation22 + $0x218] sm:$0xff]
    %v2504 = vld [vmem:[#allocation22 + $0x220] sm:$0xff]
    %v2505 = vld [vmem:[#allocation22 + $0x228] sm:$0xff]
    %v2506 = vld [vmem:[#allocation22 + $0x230] sm:$0xff]
    %v2507 = vld [vmem:[#allocation22 + $0x238] sm:$0xff]
    %v2508 = vld [vmem:[#allocation22 + $0x240] sm:$0xff]
    %v2509 = vld [vmem:[#allocation22 + $0x248] sm:$0xff]
    %v2510 = vld [vmem:[#allocation22 + $0x250] sm:$0xff]
    %v2511 = vld [vmem:[#allocation22 + $0x258] sm:$0xff]
    %v2512 = vld [vmem:[#allocation22 + $0x260] sm:$0xff]
    %v2513 = vld [vmem:[#allocation22 + $0x268] sm:$0xff]
    %v2514 = vld [vmem:[#allocation22 + $0x270] sm:$0xff]
    %v2515 = vld [vmem:[#allocation22 + $0x278] sm:$0xff]
    %v2516 = vld [vmem:[#allocation22 + $0x280] sm:$0xff]
    %v2517 = vld [vmem:[#allocation22 + $0x288] sm:$0xff]
    %v2518 = vld [vmem:[#allocation22 + $0x290] sm:$0xff]
    %v2519 = vld [vmem:[#allocation22 + $0x298] sm:$0xff]
    %v2520 = vld [vmem:[#allocation22 + $0x2a0] sm:$0xff]
    %v2521 = vld [vmem:[#allocation22 + $0x2a8] sm:$0xff]
    %v2522 = vld [vmem:[#allocation22 + $0x2b0] sm:$0xff]
    %v2523 = vld [vmem:[#allocation22 + $0x2b8] sm:$0xff]
    %v2524 = vld [vmem:[#allocation22 + $0x2c0] sm:$0xff]
    %v2525 = vld [vmem:[#allocation22 + $0x2c8] sm:$0xff]
    %v2526 = vld [vmem:[#allocation22 + $0x2d0] sm:$0xff]
    %v2527 = vld [vmem:[#allocation22 + $0x2d8] sm:$0xff]
    %v2528 = vld [vmem:[#allocation22 + $0x2e0] sm:$0xff]
    %v2529 = vld [vmem:[#allocation22 + $0x2e8] sm:$0xff]
    %v2530 = vld [vmem:[#allocation22 + $0x2f0] sm:$0xff]
    %v2531 = vld [vmem:[#allocation22 + $0x2f8] sm:$0xff]
    %v2532 = vld [vmem:[#allocation22 + $0x300] sm:$0xff]
    %v2533 = vld [vmem:[#allocation22 + $0x308] sm:$0xff]
    %v2534 = vld [vmem:[#allocation22 + $0x310] sm:$0xff]
    %v2535 = vld [vmem:[#allocation22 + $0x318] sm:$0xff]
    %v2536 = vld [vmem:[#allocation22 + $0x320] sm:$0xff]
    %v2537 = vld [vmem:[#allocation22 + $0x328] sm:$0xff]
    %v2538 = vld [vmem:[#allocation22 + $0x330] sm:$0xff]
    %v2539 = vld [vmem:[#allocation22 + $0x338] sm:$0xff]
    %v2540 = vld [vmem:[#allocation22 + $0x340] sm:$0xff]
    %v2541 = vld [vmem:[#allocation22 + $0x348] sm:$0xff]
    %v2542 = vld [vmem:[#allocation22 + $0x350] sm:$0xff]
    %v2543 = vld [vmem:[#allocation22 + $0x358] sm:$0xff]
    %v2544 = vld [vmem:[#allocation22 + $0x360] sm:$0xff]
    %v2545 = vld [vmem:[#allocation22 + $0x368] sm:$0xff]
    %v2546 = vld [vmem:[#allocation22 + $0x370] sm:$0xff]
    %v2547 = vld [vmem:[#allocation22 + $0x378] sm:$0xff]
    %v2548 = vld [vmem:[#allocation22 + $0x380] sm:$0xff]
    %v2549 = vld [vmem:[#allocation22 + $0x388] sm:$0xff]
    %v2550 = vld [vmem:[#allocation22 + $0x390] sm:$0xff]
    %v2551 = vld [vmem:[#allocation22 + $0x398] sm:$0xff]
    %v2552 = vld [vmem:[#allocation22 + $0x3a0] sm:$0xff]
    %v2553 = vld [vmem:[#allocation22 + $0x3a8] sm:$0xff]
    %v2554 = vld [vmem:[#allocation22 + $0x3b0] sm:$0xff]
    %v2555 = vld [vmem:[#allocation22 + $0x3b8] sm:$0xff]
    %v2556 = vld [vmem:[#allocation22 + $0x3c0] sm:$0xff]
    %v2557 = vld [vmem:[#allocation22 + $0x3c8] sm:$0xff]
    %v2558 = vld [vmem:[#allocation22 + $0x3d0] sm:$0xff]
    %v2559 = vld [vmem:[#allocation22 + $0x3d8] sm:$0xff]
    %v2560 = vld [vmem:[#allocation22 + $0x3e0] sm:$0xff]
    %v2561 = vld [vmem:[#allocation22 + $0x3e8] sm:$0xff]
    %v2562 = vld [vmem:[#allocation22 + $0x3f0] sm:$0xff]
    %v2563 = vld [vmem:[#allocation22 + $0x3f8] sm:$0xff]
    %v2564 = vld [vmem:[#allocation22 + $0x400] sm:$0xff]
    %v2565 = vld [vmem:[#allocation22 + $0x408] sm:$0xff]
    %v2566 = vld [vmem:[#allocation22 + $0x410] sm:$0xff]
    %v2567 = vld [vmem:[#allocation22 + $0x418] sm:$0xff]
    %v2568 = vld [vmem:[#allocation22 + $0x420] sm:$0xff]
    %v2569 = vld [vmem:[#allocation22 + $0x428] sm:$0xff]
    %v2570 = vld [vmem:[#allocation22 + $0x430] sm:$0xff]
    %v2571 = vld [vmem:[#allocation22 + $0x438] sm:$0xff]
    %v2572 = vld [vmem:[#allocation22 + $0x440] sm:$0xff]
    %v2573 = vld [vmem:[#allocation22 + $0x448] sm:$0xff]
    %v2574 = vld [vmem:[#allocation22 + $0x450] sm:$0xff]
    %v2575 = vld [vmem:[#allocation22 + $0x458] sm:$0xff]
    %v2576 = vld [vmem:[#allocation22 + $0x460] sm:$0xff]
    %v2577 = vld [vmem:[#allocation22 + $0x468] sm:$0xff]
    %v2578 = vld [vmem:[#allocation22 + $0x470] sm:$0xff]
    %v2579 = vld [vmem:[#allocation22 + $0x478] sm:$0xff]
    %v2580 = vld [vmem:[#allocation22 + $0x480] sm:$0xff]
    %v2581 = vld [vmem:[#allocation22 + $0x488] sm:$0xff]
    %v2582 = vld [vmem:[#allocation22 + $0x490] sm:$0xff]
    %v2583 = vld [vmem:[#allocation22 + $0x498] sm:$0xff]
    %v2584 = vld [vmem:[#allocation22 + $0x4a0] sm:$0xff]
    %v2585 = vld [vmem:[#allocation22 + $0x4a8] sm:$0xff]
    %v2586 = vld [vmem:[#allocation22 + $0x4b0] sm:$0xff]
    %v2587 = vld [vmem:[#allocation22 + $0x4b8] sm:$0xff]
    %v2588 = vld [vmem:[#allocation22 + $0x4c0] sm:$0xff]
    %v2589 = vld [vmem:[#allocation22 + $0x4c8] sm:$0xff]
    %v2590 = vld [vmem:[#allocation22 + $0x4d0] sm:$0xff]
    %v2591 = vld [vmem:[#allocation22 + $0x4d8] sm:$0xff]
    %v2592 = vld [vmem:[#allocation22 + $0x4e0] sm:$0xff]
    %v2593 = vld [vmem:[#allocation22 + $0x4e8] sm:$0xff]
    %v2594 = vld [vmem:[#allocation22 + $0x4f0] sm:$0xff]
    %v2595 = vld [vmem:[#allocation22 + $0x4f8] sm:$0xff]
    %v2596 = vld [vmem:[#allocation22 + $0x500] sm:$0xff]
    %v2597 = vld [vmem:[#allocation22 + $0x508] sm:$0xff]
    %v2598 = vld [vmem:[#allocation22 + $0x510] sm:$0xff]
    %v2599 = vld [vmem:[#allocation22 + $0x518] sm:$0xff]
    %v2600 = vld [vmem:[#allocation22 + $0x520] sm:$0xff]
    %v2601 = vld [vmem:[#allocation22 + $0x528] sm:$0xff]
    %v2602 = vld [vmem:[#allocation22 + $0x530] sm:$0xff]
    %v2603 = vld [vmem:[#allocation22 + $0x538] sm:$0xff]
    %v2604 = vld [vmem:[#allocation22 + $0x540] sm:$0xff]
    %v2605 = vld [vmem:[#allocation22 + $0x548] sm:$0xff]
    %v2606 = vld [vmem:[#allocation22 + $0x550] sm:$0xff]
    %v2607 = vld [vmem:[#allocation22 + $0x558] sm:$0xff]
    %v2608 = vld [vmem:[#allocation22 + $0x560] sm:$0xff]
    %v2609 = vld [vmem:[#allocation22 + $0x568] sm:$0xff]
    %v2610 = vld [vmem:[#allocation22 + $0x570] sm:$0xff]
    %v2611 = vld [vmem:[#allocation22 + $0x578] sm:$0xff]
    %v2612 = vld [vmem:[#allocation22 + $0x580] sm:$0xff]
    %v2613 = vld [vmem:[#allocation22 + $0x588] sm:$0xff]
    %v2614 = vld [vmem:[#allocation22 + $0x590] sm:$0xff]
    %v2615 = vld [vmem:[#allocation22 + $0x598] sm:$0xff]
    %v2616 = vld [vmem:[#allocation22 + $0x5a0] sm:$0xff]
    %v2617 = vld [vmem:[#allocation22 + $0x5a8] sm:$0xff]
    %v2618 = vld [vmem:[#allocation22 + $0x5b0] sm:$0xff]
    %v2619 = vld [vmem:[#allocation22 + $0x5b8] sm:$0xff]
    %v2620 = vld [vmem:[#allocation22 + $0x5c0] sm:$0xff]
    %v2621 = vld [vmem:[#allocation22 + $0x5c8] sm:$0xff]
    %v2622 = vld [vmem:[#allocation22 + $0x5d0] sm:$0xff]
    %v2623 = vld [vmem:[#allocation22 + $0x5d8] sm:$0xff]
    %v2624 = vld [vmem:[#allocation22 + $0x5e0] sm:$0xff]
    %v2625 = vld [vmem:[#allocation22 + $0x5e8] sm:$0xff]
    %v2626 = vld [vmem:[#allocation22 + $0x5f0] sm:$0xff]
    %v2627 = vld [vmem:[#allocation22 + $0x5f8] sm:$0xff]
    %v2628 = vld [vmem:[#allocation22 + $0x600] sm:$0xff]
    %v2629 = vld [vmem:[#allocation22 + $0x608] sm:$0xff]
    %v2630 = vld [vmem:[#allocation22 + $0x610] sm:$0xff]
    %v2631 = vld [vmem:[#allocation22 + $0x618] sm:$0xff]
    %v2632 = vld [vmem:[#allocation22 + $0x620] sm:$0xff]
    %v2633 = vld [vmem:[#allocation22 + $0x628] sm:$0xff]
    %v2634 = vld [vmem:[#allocation22 + $0x630] sm:$0xff]
    %v2635 = vld [vmem:[#allocation22 + $0x638] sm:$0xff]
    %v2636 = vld [vmem:[#allocation22 + $0x640] sm:$0xff]
    %v2637 = vld [vmem:[#allocation22 + $0x648] sm:$0xff]
    %v2638 = vld [vmem:[#allocation22 + $0x650] sm:$0xff]
    %v2639 = vld [vmem:[#allocation22 + $0x658] sm:$0xff]
    %v2640 = vld [vmem:[#allocation22 + $0x660] sm:$0xff]
    %v2641 = vld [vmem:[#allocation22 + $0x668] sm:$0xff]
    %v2642 = vld [vmem:[#allocation22 + $0x670] sm:$0xff]
    %v2643 = vld [vmem:[#allocation22 + $0x678] sm:$0xff]
    %v2644 = vld [vmem:[#allocation22 + $0x680] sm:$0xff]
    %v2645 = vld [vmem:[#allocation22 + $0x688] sm:$0xff]
    %v2646 = vld [vmem:[#allocation22 + $0x690] sm:$0xff]
    %v2647 = vld [vmem:[#allocation22 + $0x698] sm:$0xff]
    %v2648 = vld [vmem:[#allocation22 + $0x6a0] sm:$0xff]
    %v2649 = vld [vmem:[#allocation22 + $0x6a8] sm:$0xff]
    %v2650 = vld [vmem:[#allocation22 + $0x6b0] sm:$0xff]
    %v2651 = vld [vmem:[#allocation22 + $0x6b8] sm:$0xff]
    %v2652 = vld [vmem:[#allocation22 + $0x6c0] sm:$0xff]
    %v2653 = vld [vmem:[#allocation22 + $0x6c8] sm:$0xff]
    %v2654 = vld [vmem:[#allocation22 + $0x6d0] sm:$0xff]
    %v2655 = vld [vmem:[#allocation22 + $0x6d8] sm:$0xff]
    %v2656 = vld [vmem:[#allocation22 + $0x6e0] sm:$0xff]
    %v2657 = vld [vmem:[#allocation22 + $0x6e8] sm:$0xff]
    %v2658 = vld [vmem:[#allocation22 + $0x6f0] sm:$0xff]
    %v2659 = vld [vmem:[#allocation22 + $0x6f8] sm:$0xff]
    %v2660 = vld [vmem:[#allocation22 + $0x700] sm:$0xff]
    %v2661 = vld [vmem:[#allocation22 + $0x708] sm:$0xff]
    %v2662 = vld [vmem:[#allocation22 + $0x710] sm:$0xff]
    %v2663 = vld [vmem:[#allocation22 + $0x718] sm:$0xff]
    %v2664 = vld [vmem:[#allocation22 + $0x720] sm:$0xff]
    %v2665 = vld [vmem:[#allocation22 + $0x728] sm:$0xff]
    %v2666 = vld [vmem:[#allocation22 + $0x730] sm:$0xff]
    %v2667 = vld [vmem:[#allocation22 + $0x738] sm:$0xff]
    %v2668 = vld [vmem:[#allocation22 + $0x740] sm:$0xff]
    %v2669 = vld [vmem:[#allocation22 + $0x748] sm:$0xff]
    %v2670 = vld [vmem:[#allocation22 + $0x750] sm:$0xff]
    %v2671 = vld [vmem:[#allocation22 + $0x758] sm:$0xff]
    %v2672 = vld [vmem:[#allocation22 + $0x760] sm:$0xff]
    %v2673 = vld [vmem:[#allocation22 + $0x768] sm:$0xff]
    %v2674 = vld [vmem:[#allocation22 + $0x770] sm:$0xff]
    %v2675 = vld [vmem:[#allocation22 + $0x778] sm:$0xff]
    %v2676 = vld [vmem:[#allocation22 + $0x780] sm:$0xff]
    %v2677 = vld [vmem:[#allocation22 + $0x788] sm:$0xff]
    %v2678 = vld [vmem:[#allocation22 + $0x790] sm:$0xff]
    %v2679 = vld [vmem:[#allocation22 + $0x798] sm:$0xff]
    %v2680 = vld [vmem:[#allocation22 + $0x7a0] sm:$0xff]
    %v2681 = vld [vmem:[#allocation22 + $0x7a8] sm:$0xff]
    %v2682 = vld [vmem:[#allocation22 + $0x7b0] sm:$0xff]
    %v2683 = vld [vmem:[#allocation22 + $0x7b8] sm:$0xff]
    %v2684 = vld [vmem:[#allocation22 + $0x7c0] sm:$0xff]
    %v2685 = vld [vmem:[#allocation22 + $0x7c8] sm:$0xff]
    %v2686 = vld [vmem:[#allocation22 + $0x7d0] sm:$0xff]
    %v2687 = vld [vmem:[#allocation22 + $0x7d8] sm:$0xff]
    %v2688 = vld [vmem:[#allocation22 + $0x7e0] sm:$0xff]
    %v2689 = vld [vmem:[#allocation22 + $0x7e8] sm:$0xff]
    %v2690 = vld [vmem:[#allocation22 + $0x7f0] sm:$0xff]
    %v2691 = vld [vmem:[#allocation22 + $0x7f8] sm:$0xff]
    %v2692 = vld [vmem:[#allocation24] sm:$0xf]
    %v2694 = vlaneseq
    %v2695 = vshrl.u32 %v2694, 7
    %v2696 = vsub.s32 0, %v2695
    %v2697 = vrot.slane %v2692, %v2696
    %v2698 = vlaneseq
    %v2699 = vshrl.u32 %v2698, 7
    %v2700 = vsub.s32 1, %v2699
    %v2701 = vrot.slane %v2692, %v2700
    %v2702 = vlaneseq
    %v2703 = vshrl.u32 %v2702, 7
    %v2704 = vsub.s32 2, %v2703
    %v2705 = vrot.slane %v2692, %v2704
    %v2706 = vlaneseq
    %v2707 = vshrl.u32 %v2706, 7
    %v2708 = vsub.s32 3, %v2707
    %v2709 = vrot.slane %v2692, %v2708
    %v2970 = vunpack.c.l.b16 %v2436
    %v2971 = vunpack.c.h.b16 %v2436
    %v2972 = vunpack.c.l.b16 %v2437
    %v2973 = vunpack.c.h.b16 %v2437
    %v2974 = vunpack.c.l.b16 %v2438
    %v2975 = vunpack.c.h.b16 %v2438
    %v2976 = vunpack.c.l.b16 %v2439
    %v2977 = vunpack.c.h.b16 %v2439
    %v2978 = vunpack.c.l.b16 %v2440
    %v2979 = vunpack.c.h.b16 %v2440
    %v2980 = vunpack.c.l.b16 %v2441
    %v2981 = vunpack.c.h.b16 %v2441
    %v2982 = vunpack.c.l.b16 %v2442
    %v2983 = vunpack.c.h.b16 %v2442
    %v2984 = vunpack.c.l.b16 %v2443
    %v2985 = vunpack.c.h.b16 %v2443
    %v2986 = vunpack.c.l.b16 %v2444
    %v2987 = vunpack.c.h.b16 %v2444
    %v2988 = vunpack.c.l.b16 %v2445
    %v2989 = vunpack.c.h.b16 %v2445
    %v2990 = vunpack.c.l.b16 %v2446
    %v2991 = vunpack.c.h.b16 %v2446
    %v2992 = vunpack.c.l.b16 %v2447
    %v2993 = vunpack.c.h.b16 %v2447
    %v2994 = vunpack.c.l.b16 %v2448
    %v2995 = vunpack.c.h.b16 %v2448
    %v2996 = vunpack.c.l.b16 %v2449
    %v2997 = vunpack.c.h.b16 %v2449
    %v2998 = vunpack.c.l.b16 %v2450
    %v2999 = vunpack.c.h.b16 %v2450
    %v3000 = vunpack.c.l.b16 %v2451
    %v3001 = vunpack.c.h.b16 %v2451
    %v3002 = vunpack.c.l.b16 %v2452
    %v3003 = vunpack.c.h.b16 %v2452
    %v3004 = vunpack.c.l.b16 %v2453
    %v3005 = vunpack.c.h.b16 %v2453
    %v3006 = vunpack.c.l.b16 %v2454
    %v3007 = vunpack.c.h.b16 %v2454
    %v3008 = vunpack.c.l.b16 %v2455
    %v3009 = vunpack.c.h.b16 %v2455
    %v3010 = vunpack.c.l.b16 %v2456
    %v3011 = vunpack.c.h.b16 %v2456
    %v3012 = vunpack.c.l.b16 %v2457
    %v3013 = vunpack.c.h.b16 %v2457
    %v3014 = vunpack.c.l.b16 %v2458
    %v3015 = vunpack.c.h.b16 %v2458
    %v3016 = vunpack.c.l.b16 %v2459
    %v3017 = vunpack.c.h.b16 %v2459
    %v3018 = vunpack.c.l.b16 %v2460
    %v3019 = vunpack.c.h.b16 %v2460
    %v3020 = vunpack.c.l.b16 %v2461
    %v3021 = vunpack.c.h.b16 %v2461
    %v3022 = vunpack.c.l.b16 %v2462
    %v3023 = vunpack.c.h.b16 %v2462
    %v3024 = vunpack.c.l.b16 %v2463
    %v3025 = vunpack.c.h.b16 %v2463
    %v3026 = vunpack.c.l.b16 %v2464
    %v3027 = vunpack.c.h.b16 %v2464
    %v3028 = vunpack.c.l.b16 %v2465
    %v3029 = vunpack.c.h.b16 %v2465
    %v3030 = vunpack.c.l.b16 %v2466
    %v3031 = vunpack.c.h.b16 %v2466
    %v3032 = vunpack.c.l.b16 %v2467
    %v3033 = vunpack.c.h.b16 %v2467
    %v3034 = vunpack.c.l.b16 %v2468
    %v3035 = vunpack.c.h.b16 %v2468
    %v3036 = vunpack.c.l.b16 %v2469
    %v3037 = vunpack.c.h.b16 %v2469
    %v3038 = vunpack.c.l.b16 %v2470
    %v3039 = vunpack.c.h.b16 %v2470
    %v3040 = vunpack.c.l.b16 %v2471
    %v3041 = vunpack.c.h.b16 %v2471
    %v3042 = vunpack.c.l.b16 %v2472
    %v3043 = vunpack.c.h.b16 %v2472
    %v3044 = vunpack.c.l.b16 %v2473
    %v3045 = vunpack.c.h.b16 %v2473
    %v3046 = vunpack.c.l.b16 %v2474
    %v3047 = vunpack.c.h.b16 %v2474
    %v3048 = vunpack.c.l.b16 %v2475
    %v3049 = vunpack.c.h.b16 %v2475
    %v3050 = vunpack.c.l.b16 %v2476
    %v3051 = vunpack.c.h.b16 %v2476
    %v3052 = vunpack.c.l.b16 %v2477
    %v3053 = vunpack.c.h.b16 %v2477
    %v3054 = vunpack.c.l.b16 %v2478
    %v3055 = vunpack.c.h.b16 %v2478
    %v3056 = vunpack.c.l.b16 %v2479
    %v3057 = vunpack.c.h.b16 %v2479
    %v3058 = vunpack.c.l.b16 %v2480
    %v3059 = vunpack.c.h.b16 %v2480
    %v3060 = vunpack.c.l.b16 %v2481
    %v3061 = vunpack.c.h.b16 %v2481
    %v3062 = vunpack.c.l.b16 %v2482
    %v3063 = vunpack.c.h.b16 %v2482
    %v3064 = vunpack.c.l.b16 %v2483
    %v3065 = vunpack.c.h.b16 %v2483
    %v3066 = vunpack.c.l.b16 %v2484
    %v3067 = vunpack.c.h.b16 %v2484
    %v3068 = vunpack.c.l.b16 %v2485
    %v3069 = vunpack.c.h.b16 %v2485
    %v3070 = vunpack.c.l.b16 %v2486
    %v3071 = vunpack.c.h.b16 %v2486
    %v3072 = vunpack.c.l.b16 %v2487
    %v3073 = vunpack.c.h.b16 %v2487
    %v3074 = vunpack.c.l.b16 %v2488
    %v3075 = vunpack.c.h.b16 %v2488
    %v3076 = vunpack.c.l.b16 %v2489
    %v3077 = vunpack.c.h.b16 %v2489
    %v3078 = vunpack.c.l.b16 %v2490
    %v3079 = vunpack.c.h.b16 %v2490
    %v3080 = vunpack.c.l.b16 %v2491
    %v3081 = vunpack.c.h.b16 %v2491
    %v3082 = vunpack.c.l.b16 %v2492
    %v3083 = vunpack.c.h.b16 %v2492
    %v3084 = vunpack.c.l.b16 %v2493
    %v3085 = vunpack.c.h.b16 %v2493
    %v3086 = vunpack.c.l.b16 %v2494
    %v3087 = vunpack.c.h.b16 %v2494
    %v3088 = vunpack.c.l.b16 %v2495
    %v3089 = vunpack.c.h.b16 %v2495
    %v3090 = vunpack.c.l.b16 %v2496
    %v3091 = vunpack.c.h.b16 %v2496
    %v3092 = vunpack.c.l.b16 %v2497
    %v3093 = vunpack.c.h.b16 %v2497
    %v3094 = vunpack.c.l.b16 %v2498
    %v3095 = vunpack.c.h.b16 %v2498
    %v3096 = vunpack.c.l.b16 %v2499
    %v3097 = vunpack.c.h.b16 %v2499
    %v3098 = vunpack.c.l.b16 %v2500
    %v3099 = vunpack.c.h.b16 %v2500
    %v3100 = vunpack.c.l.b16 %v2501
    %v3101 = vunpack.c.h.b16 %v2501
    %v3102 = vunpack.c.l.b16 %v2502
    %v3103 = vunpack.c.h.b16 %v2502
    %v3104 = vunpack.c.l.b16 %v2503
    %v3105 = vunpack.c.h.b16 %v2503
    %v3106 = vunpack.c.l.b16 %v2504
    %v3107 = vunpack.c.h.b16 %v2504
    %v3108 = vunpack.c.l.b16 %v2505
    %v3109 = vunpack.c.h.b16 %v2505
    %v3110 = vunpack.c.l.b16 %v2506
    %v3111 = vunpack.c.h.b16 %v2506
    %v3112 = vunpack.c.l.b16 %v2507
    %v3113 = vunpack.c.h.b16 %v2507
    %v3114 = vunpack.c.l.b16 %v2508
    %v3115 = vunpack.c.h.b16 %v2508
    %v3116 = vunpack.c.l.b16 %v2509
    %v3117 = vunpack.c.h.b16 %v2509
    %v3118 = vunpack.c.l.b16 %v2510
    %v3119 = vunpack.c.h.b16 %v2510
    %v3120 = vunpack.c.l.b16 %v2511
    %v3121 = vunpack.c.h.b16 %v2511
    %v3122 = vunpack.c.l.b16 %v2512
    %v3123 = vunpack.c.h.b16 %v2512
    %v3124 = vunpack.c.l.b16 %v2513
    %v3125 = vunpack.c.h.b16 %v2513
    %v3126 = vunpack.c.l.b16 %v2514
    %v3127 = vunpack.c.h.b16 %v2514
    %v3128 = vunpack.c.l.b16 %v2515
    %v3129 = vunpack.c.h.b16 %v2515
    %v3130 = vunpack.c.l.b16 %v2516
    %v3131 = vunpack.c.h.b16 %v2516
    %v3132 = vunpack.c.l.b16 %v2517
    %v3133 = vunpack.c.h.b16 %v2517
    %v3134 = vunpack.c.l.b16 %v2518
    %v3135 = vunpack.c.h.b16 %v2518
    %v3136 = vunpack.c.l.b16 %v2519
    %v3137 = vunpack.c.h.b16 %v2519
    %v3138 = vunpack.c.l.b16 %v2520
    %v3139 = vunpack.c.h.b16 %v2520
    %v3140 = vunpack.c.l.b16 %v2521
    %v3141 = vunpack.c.h.b16 %v2521
    %v3142 = vunpack.c.l.b16 %v2522
    %v3143 = vunpack.c.h.b16 %v2522
    %v3144 = vunpack.c.l.b16 %v2523
    %v3145 = vunpack.c.h.b16 %v2523
    %v3146 = vunpack.c.l.b16 %v2524
    %v3147 = vunpack.c.h.b16 %v2524
    %v3148 = vunpack.c.l.b16 %v2525
    %v3149 = vunpack.c.h.b16 %v2525
    %v3150 = vunpack.c.l.b16 %v2526
    %v3151 = vunpack.c.h.b16 %v2526
    %v3152 = vunpack.c.l.b16 %v2527
    %v3153 = vunpack.c.h.b16 %v2527
    %v3154 = vunpack.c.l.b16 %v2528
    %v3155 = vunpack.c.h.b16 %v2528
    %v3156 = vunpack.c.l.b16 %v2529
    %v3157 = vunpack.c.h.b16 %v2529
    %v3158 = vunpack.c.l.b16 %v2530
    %v3159 = vunpack.c.h.b16 %v2530
    %v3160 = vunpack.c.l.b16 %v2531
    %v3161 = vunpack.c.h.b16 %v2531
    %v3162 = vunpack.c.l.b16 %v2532
    %v3163 = vunpack.c.h.b16 %v2532
    %v3164 = vunpack.c.l.b16 %v2533
    %v3165 = vunpack.c.h.b16 %v2533
    %v3166 = vunpack.c.l.b16 %v2534
    %v3167 = vunpack.c.h.b16 %v2534
    %v3168 = vunpack.c.l.b16 %v2535
    %v3169 = vunpack.c.h.b16 %v2535
    %v3170 = vunpack.c.l.b16 %v2536
    %v3171 = vunpack.c.h.b16 %v2536
    %v3172 = vunpack.c.l.b16 %v2537
    %v3173 = vunpack.c.h.b16 %v2537
    %v3174 = vunpack.c.l.b16 %v2538
    %v3175 = vunpack.c.h.b16 %v2538
    %v3176 = vunpack.c.l.b16 %v2539
    %v3177 = vunpack.c.h.b16 %v2539
    %v3178 = vunpack.c.l.b16 %v2540
    %v3179 = vunpack.c.h.b16 %v2540
    %v3180 = vunpack.c.l.b16 %v2541
    %v3181 = vunpack.c.h.b16 %v2541
    %v3182 = vunpack.c.l.b16 %v2542
    %v3183 = vunpack.c.h.b16 %v2542
    %v3184 = vunpack.c.l.b16 %v2543
    %v3185 = vunpack.c.h.b16 %v2543
    %v3186 = vunpack.c.l.b16 %v2544
    %v3187 = vunpack.c.h.b16 %v2544
    %v3188 = vunpack.c.l.b16 %v2545
    %v3189 = vunpack.c.h.b16 %v2545
    %v3190 = vunpack.c.l.b16 %v2546
    %v3191 = vunpack.c.h.b16 %v2546
    %v3192 = vunpack.c.l.b16 %v2547
    %v3193 = vunpack.c.h.b16 %v2547
    %v3194 = vunpack.c.l.b16 %v2548
    %v3195 = vunpack.c.h.b16 %v2548
    %v3196 = vunpack.c.l.b16 %v2549
    %v3197 = vunpack.c.h.b16 %v2549
    %v3198 = vunpack.c.l.b16 %v2550
    %v3199 = vunpack.c.h.b16 %v2550
    %v3200 = vunpack.c.l.b16 %v2551
    %v3201 = vunpack.c.h.b16 %v2551
    %v3202 = vunpack.c.l.b16 %v2552
    %v3203 = vunpack.c.h.b16 %v2552
    %v3204 = vunpack.c.l.b16 %v2553
    %v3205 = vunpack.c.h.b16 %v2553
    %v3206 = vunpack.c.l.b16 %v2554
    %v3207 = vunpack.c.h.b16 %v2554
    %v3208 = vunpack.c.l.b16 %v2555
    %v3209 = vunpack.c.h.b16 %v2555
    %v3210 = vunpack.c.l.b16 %v2556
    %v3211 = vunpack.c.h.b16 %v2556
    %v3212 = vunpack.c.l.b16 %v2557
    %v3213 = vunpack.c.h.b16 %v2557
    %v3214 = vunpack.c.l.b16 %v2558
    %v3215 = vunpack.c.h.b16 %v2558
    %v3216 = vunpack.c.l.b16 %v2559
    %v3217 = vunpack.c.h.b16 %v2559
    %v3218 = vunpack.c.l.b16 %v2560
    %v3219 = vunpack.c.h.b16 %v2560
    %v3220 = vunpack.c.l.b16 %v2561
    %v3221 = vunpack.c.h.b16 %v2561
    %v3222 = vunpack.c.l.b16 %v2562
    %v3223 = vunpack.c.h.b16 %v2562
    %v3224 = vunpack.c.l.b16 %v2563
    %v3225 = vunpack.c.h.b16 %v2563
    %v3226 = vunpack.c.l.b16 %v2564
    %v3227 = vunpack.c.h.b16 %v2564
    %v3228 = vunpack.c.l.b16 %v2565
    %v3229 = vunpack.c.h.b16 %v2565
    %v3230 = vunpack.c.l.b16 %v2566
    %v3231 = vunpack.c.h.b16 %v2566
    %v3232 = vunpack.c.l.b16 %v2567
    %v3233 = vunpack.c.h.b16 %v2567
    %v3234 = vunpack.c.l.b16 %v2568
    %v3235 = vunpack.c.h.b16 %v2568
    %v3236 = vunpack.c.l.b16 %v2569
    %v3237 = vunpack.c.h.b16 %v2569
    %v3238 = vunpack.c.l.b16 %v2570
    %v3239 = vunpack.c.h.b16 %v2570
    %v3240 = vunpack.c.l.b16 %v2571
    %v3241 = vunpack.c.h.b16 %v2571
    %v3242 = vunpack.c.l.b16 %v2572
    %v3243 = vunpack.c.h.b16 %v2572
    %v3244 = vunpack.c.l.b16 %v2573
    %v3245 = vunpack.c.h.b16 %v2573
    %v3246 = vunpack.c.l.b16 %v2574
    %v3247 = vunpack.c.h.b16 %v2574
    %v3248 = vunpack.c.l.b16 %v2575
    %v3249 = vunpack.c.h.b16 %v2575
    %v3250 = vunpack.c.l.b16 %v2576
    %v3251 = vunpack.c.h.b16 %v2576
    %v3252 = vunpack.c.l.b16 %v2577
    %v3253 = vunpack.c.h.b16 %v2577
    %v3254 = vunpack.c.l.b16 %v2578
    %v3255 = vunpack.c.h.b16 %v2578
    %v3256 = vunpack.c.l.b16 %v2579
    %v3257 = vunpack.c.h.b16 %v2579
    %v3258 = vunpack.c.l.b16 %v2580
    %v3259 = vunpack.c.h.b16 %v2580
    %v3260 = vunpack.c.l.b16 %v2581
    %v3261 = vunpack.c.h.b16 %v2581
    %v3262 = vunpack.c.l.b16 %v2582
    %v3263 = vunpack.c.h.b16 %v2582
    %v3264 = vunpack.c.l.b16 %v2583
    %v3265 = vunpack.c.h.b16 %v2583
    %v3266 = vunpack.c.l.b16 %v2584
    %v3267 = vunpack.c.h.b16 %v2584
    %v3268 = vunpack.c.l.b16 %v2585
    %v3269 = vunpack.c.h.b16 %v2585
    %v3270 = vunpack.c.l.b16 %v2586
    %v3271 = vunpack.c.h.b16 %v2586
    %v3272 = vunpack.c.l.b16 %v2587
    %v3273 = vunpack.c.h.b16 %v2587
    %v3274 = vunpack.c.l.b16 %v2588
    %v3275 = vunpack.c.h.b16 %v2588
    %v3276 = vunpack.c.l.b16 %v2589
    %v3277 = vunpack.c.h.b16 %v2589
    %v3278 = vunpack.c.l.b16 %v2590
    %v3279 = vunpack.c.h.b16 %v2590
    %v3280 = vunpack.c.l.b16 %v2591
    %v3281 = vunpack.c.h.b16 %v2591
    %v3282 = vunpack.c.l.b16 %v2592
    %v3283 = vunpack.c.h.b16 %v2592
    %v3284 = vunpack.c.l.b16 %v2593
    %v3285 = vunpack.c.h.b16 %v2593
    %v3286 = vunpack.c.l.b16 %v2594
    %v3287 = vunpack.c.h.b16 %v2594
    %v3288 = vunpack.c.l.b16 %v2595
    %v3289 = vunpack.c.h.b16 %v2595
    %v3290 = vunpack.c.l.b16 %v2596
    %v3291 = vunpack.c.h.b16 %v2596
    %v3292 = vunpack.c.l.b16 %v2597
    %v3293 = vunpack.c.h.b16 %v2597
    %v3294 = vunpack.c.l.b16 %v2598
    %v3295 = vunpack.c.h.b16 %v2598
    %v3296 = vunpack.c.l.b16 %v2599
    %v3297 = vunpack.c.h.b16 %v2599
    %v3298 = vunpack.c.l.b16 %v2600
    %v3299 = vunpack.c.h.b16 %v2600
    %v3300 = vunpack.c.l.b16 %v2601
    %v3301 = vunpack.c.h.b16 %v2601
    %v3302 = vunpack.c.l.b16 %v2602
    %v3303 = vunpack.c.h.b16 %v2602
    %v3304 = vunpack.c.l.b16 %v2603
    %v3305 = vunpack.c.h.b16 %v2603
    %v3306 = vunpack.c.l.b16 %v2604
    %v3307 = vunpack.c.h.b16 %v2604
    %v3308 = vunpack.c.l.b16 %v2605
    %v3309 = vunpack.c.h.b16 %v2605
    %v3310 = vunpack.c.l.b16 %v2606
    %v3311 = vunpack.c.h.b16 %v2606
    %v3312 = vunpack.c.l.b16 %v2607
    %v3313 = vunpack.c.h.b16 %v2607
    %v3314 = vunpack.c.l.b16 %v2608
    %v3315 = vunpack.c.h.b16 %v2608
    %v3316 = vunpack.c.l.b16 %v2609
    %v3317 = vunpack.c.h.b16 %v2609
    %v3318 = vunpack.c.l.b16 %v2610
    %v3319 = vunpack.c.h.b16 %v2610
    %v3320 = vunpack.c.l.b16 %v2611
    %v3321 = vunpack.c.h.b16 %v2611
    %v3322 = vunpack.c.l.b16 %v2612
    %v3323 = vunpack.c.h.b16 %v2612
    %v3324 = vunpack.c.l.b16 %v2613
    %v3325 = vunpack.c.h.b16 %v2613
    %v3326 = vunpack.c.l.b16 %v2614
    %v3327 = vunpack.c.h.b16 %v2614
    %v3328 = vunpack.c.l.b16 %v2615
    %v3329 = vunpack.c.h.b16 %v2615
    %v3330 = vunpack.c.l.b16 %v2616
    %v3331 = vunpack.c.h.b16 %v2616
    %v3332 = vunpack.c.l.b16 %v2617
    %v3333 = vunpack.c.h.b16 %v2617
    %v3334 = vunpack.c.l.b16 %v2618
    %v3335 = vunpack.c.h.b16 %v2618
    %v3336 = vunpack.c.l.b16 %v2619
    %v3337 = vunpack.c.h.b16 %v2619
    %v3338 = vunpack.c.l.b16 %v2620
    %v3339 = vunpack.c.h.b16 %v2620
    %v3340 = vunpack.c.l.b16 %v2621
    %v3341 = vunpack.c.h.b16 %v2621
    %v3342 = vunpack.c.l.b16 %v2622
    %v3343 = vunpack.c.h.b16 %v2622
    %v3344 = vunpack.c.l.b16 %v2623
    %v3345 = vunpack.c.h.b16 %v2623
    %v3346 = vunpack.c.l.b16 %v2624
    %v3347 = vunpack.c.h.b16 %v2624
    %v3348 = vunpack.c.l.b16 %v2625
    %v3349 = vunpack.c.h.b16 %v2625
    %v3350 = vunpack.c.l.b16 %v2626
    %v3351 = vunpack.c.h.b16 %v2626
    %v3352 = vunpack.c.l.b16 %v2627
    %v3353 = vunpack.c.h.b16 %v2627
    %v3354 = vunpack.c.l.b16 %v2628
    %v3355 = vunpack.c.h.b16 %v2628
    %v3356 = vunpack.c.l.b16 %v2629
    %v3357 = vunpack.c.h.b16 %v2629
    %v3358 = vunpack.c.l.b16 %v2630
    %v3359 = vunpack.c.h.b16 %v2630
    %v3360 = vunpack.c.l.b16 %v2631
    %v3361 = vunpack.c.h.b16 %v2631
    %v3362 = vunpack.c.l.b16 %v2632
    %v3363 = vunpack.c.h.b16 %v2632
    %v3364 = vunpack.c.l.b16 %v2633
    %v3365 = vunpack.c.h.b16 %v2633
    %v3366 = vunpack.c.l.b16 %v2634
    %v3367 = vunpack.c.h.b16 %v2634
    %v3368 = vunpack.c.l.b16 %v2635
    %v3369 = vunpack.c.h.b16 %v2635
    %v3370 = vunpack.c.l.b16 %v2636
    %v3371 = vunpack.c.h.b16 %v2636
    %v3372 = vunpack.c.l.b16 %v2637
    %v3373 = vunpack.c.h.b16 %v2637
    %v3374 = vunpack.c.l.b16 %v2638
    %v3375 = vunpack.c.h.b16 %v2638
    %v3376 = vunpack.c.l.b16 %v2639
    %v3377 = vunpack.c.h.b16 %v2639
    %v3378 = vunpack.c.l.b16 %v2640
    %v3379 = vunpack.c.h.b16 %v2640
    %v3380 = vunpack.c.l.b16 %v2641
    %v3381 = vunpack.c.h.b16 %v2641
    %v3382 = vunpack.c.l.b16 %v2642
    %v3383 = vunpack.c.h.b16 %v2642
    %v3384 = vunpack.c.l.b16 %v2643
    %v3385 = vunpack.c.h.b16 %v2643
    %v3386 = vunpack.c.l.b16 %v2644
    %v3387 = vunpack.c.h.b16 %v2644
    %v3388 = vunpack.c.l.b16 %v2645
    %v3389 = vunpack.c.h.b16 %v2645
    %v3390 = vunpack.c.l.b16 %v2646
    %v3391 = vunpack.c.h.b16 %v2646
    %v3392 = vunpack.c.l.b16 %v2647
    %v3393 = vunpack.c.h.b16 %v2647
    %v3394 = vunpack.c.l.b16 %v2648
    %v3395 = vunpack.c.h.b16 %v2648
    %v3396 = vunpack.c.l.b16 %v2649
    %v3397 = vunpack.c.h.b16 %v2649
    %v3398 = vunpack.c.l.b16 %v2650
    %v3399 = vunpack.c.h.b16 %v2650
    %v3400 = vunpack.c.l.b16 %v2651
    %v3401 = vunpack.c.h.b16 %v2651
    %v3402 = vunpack.c.l.b16 %v2652
    %v3403 = vunpack.c.h.b16 %v2652
    %v3404 = vunpack.c.l.b16 %v2653
    %v3405 = vunpack.c.h.b16 %v2653
    %v3406 = vunpack.c.l.b16 %v2654
    %v3407 = vunpack.c.h.b16 %v2654
    %v3408 = vunpack.c.l.b16 %v2655
    %v3409 = vunpack.c.h.b16 %v2655
    %v3410 = vunpack.c.l.b16 %v2656
    %v3411 = vunpack.c.h.b16 %v2656
    %v3412 = vunpack.c.l.b16 %v2657
    %v3413 = vunpack.c.h.b16 %v2657
    %v3414 = vunpack.c.l.b16 %v2658
    %v3415 = vunpack.c.h.b16 %v2658
    %v3416 = vunpack.c.l.b16 %v2659
    %v3417 = vunpack.c.h.b16 %v2659
    %v3418 = vunpack.c.l.b16 %v2660
    %v3419 = vunpack.c.h.b16 %v2660
    %v3420 = vunpack.c.l.b16 %v2661
    %v3421 = vunpack.c.h.b16 %v2661
    %v3422 = vunpack.c.l.b16 %v2662
    %v3423 = vunpack.c.h.b16 %v2662
    %v3424 = vunpack.c.l.b16 %v2663
    %v3425 = vunpack.c.h.b16 %v2663
    %v3426 = vunpack.c.l.b16 %v2664
    %v3427 = vunpack.c.h.b16 %v2664
    %v3428 = vunpack.c.l.b16 %v2665
    %v3429 = vunpack.c.h.b16 %v2665
    %v3430 = vunpack.c.l.b16 %v2666
    %v3431 = vunpack.c.h.b16 %v2666
    %v3432 = vunpack.c.l.b16 %v2667
    %v3433 = vunpack.c.h.b16 %v2667
    %v3434 = vunpack.c.l.b16 %v2668
    %v3435 = vunpack.c.h.b16 %v2668
    %v3436 = vunpack.c.l.b16 %v2669
    %v3437 = vunpack.c.h.b16 %v2669
    %v3438 = vunpack.c.l.b16 %v2670
    %v3439 = vunpack.c.h.b16 %v2670
    %v3440 = vunpack.c.l.b16 %v2671
    %v3441 = vunpack.c.h.b16 %v2671
    %v3442 = vunpack.c.l.b16 %v2672
    %v3443 = vunpack.c.h.b16 %v2672
    %v3444 = vunpack.c.l.b16 %v2673
    %v3445 = vunpack.c.h.b16 %v2673
    %v3446 = vunpack.c.l.b16 %v2674
    %v3447 = vunpack.c.h.b16 %v2674
    %v3448 = vunpack.c.l.b16 %v2675
    %v3449 = vunpack.c.h.b16 %v2675
    %v3450 = vunpack.c.l.b16 %v2676
    %v3451 = vunpack.c.h.b16 %v2676
    %v3452 = vunpack.c.l.b16 %v2677
    %v3453 = vunpack.c.h.b16 %v2677
    %v3454 = vunpack.c.l.b16 %v2678
    %v3455 = vunpack.c.h.b16 %v2678
    %v3456 = vunpack.c.l.b16 %v2679
    %v3457 = vunpack.c.h.b16 %v2679
    %v3458 = vunpack.c.l.b16 %v2680
    %v3459 = vunpack.c.h.b16 %v2680
    %v3460 = vunpack.c.l.b16 %v2681
    %v3461 = vunpack.c.h.b16 %v2681
    %v3462 = vunpack.c.l.b16 %v2682
    %v3463 = vunpack.c.h.b16 %v2682
    %v3464 = vunpack.c.l.b16 %v2683
    %v3465 = vunpack.c.h.b16 %v2683
    %v3466 = vunpack.c.l.b16 %v2684
    %v3467 = vunpack.c.h.b16 %v2684
    %v3468 = vunpack.c.l.b16 %v2685
    %v3469 = vunpack.c.h.b16 %v2685
    %v3470 = vunpack.c.l.b16 %v2686
    %v3471 = vunpack.c.h.b16 %v2686
    %v3472 = vunpack.c.l.b16 %v2687
    %v3473 = vunpack.c.h.b16 %v2687
    %v3474 = vunpack.c.l.b16 %v2688
    %v3475 = vunpack.c.h.b16 %v2688
    %v3476 = vunpack.c.l.b16 %v2689
    %v3477 = vunpack.c.h.b16 %v2689
    %v3478 = vunpack.c.l.b16 %v2690
    %v3479 = vunpack.c.h.b16 %v2690
    %v3480 = vunpack.c.l.b16 %v2691
    %v3481 = vunpack.c.h.b16 %v2691
    %v3482 = vpack.c.b16 %v2974, %v2970
    %v3483 = vpack.c.b16 %v2975, %v2971
    %v3484 = vpack.c.b16 %v2976, %v2972
    %v3485 = vpack.c.b16 %v2977, %v2973
    %v3486 = vpack.c.b16 %v2982, %v2978
    %v3487 = vpack.c.b16 %v2983, %v2979
    %v3488 = vpack.c.b16 %v2984, %v2980
    %v3489 = vpack.c.b16 %v2985, %v2981
    %v3490 = vpack.c.b16 %v2990, %v2986
    %v3491 = vpack.c.b16 %v2991, %v2987
    %v3492 = vpack.c.b16 %v2992, %v2988
    %v3493 = vpack.c.b16 %v2993, %v2989
    %v3494 = vpack.c.b16 %v2998, %v2994
    %v3495 = vpack.c.b16 %v2999, %v2995
    %v3496 = vpack.c.b16 %v3000, %v2996
    %v3497 = vpack.c.b16 %v3001, %v2997
    %v3498 = vpack.c.b16 %v3006, %v3002
    %v3499 = vpack.c.b16 %v3007, %v3003
    %v3500 = vpack.c.b16 %v3008, %v3004
    %v3501 = vpack.c.b16 %v3009, %v3005
    %v3502 = vpack.c.b16 %v3014, %v3010
    %v3503 = vpack.c.b16 %v3015, %v3011
    %v3504 = vpack.c.b16 %v3016, %v3012
    %v3505 = vpack.c.b16 %v3017, %v3013
    %v3506 = vpack.c.b16 %v3022, %v3018
    %v3507 = vpack.c.b16 %v3023, %v3019
    %v3508 = vpack.c.b16 %v3024, %v3020
    %v3509 = vpack.c.b16 %v3025, %v3021
    %v3510 = vpack.c.b16 %v3030, %v3026
    %v3511 = vpack.c.b16 %v3031, %v3027
    %v3512 = vpack.c.b16 %v3032, %v3028
    %v3513 = vpack.c.b16 %v3033, %v3029
    %v3514 = vpack.c.b16 %v3038, %v3034
    %v3515 = vpack.c.b16 %v3039, %v3035
    %v3516 = vpack.c.b16 %v3040, %v3036
    %v3517 = vpack.c.b16 %v3041, %v3037
    %v3518 = vpack.c.b16 %v3046, %v3042
    %v3519 = vpack.c.b16 %v3047, %v3043
    %v3520 = vpack.c.b16 %v3048, %v3044
    %v3521 = vpack.c.b16 %v3049, %v3045
    %v3522 = vpack.c.b16 %v3054, %v3050
    %v3523 = vpack.c.b16 %v3055, %v3051
    %v3524 = vpack.c.b16 %v3056, %v3052
    %v3525 = vpack.c.b16 %v3057, %v3053
    %v3526 = vpack.c.b16 %v3062, %v3058
    %v3527 = vpack.c.b16 %v3063, %v3059
    %v3528 = vpack.c.b16 %v3064, %v3060
    %v3529 = vpack.c.b16 %v3065, %v3061
    %v3530 = vpack.c.b16 %v3070, %v3066
    %v3531 = vpack.c.b16 %v3071, %v3067
    %v3532 = vpack.c.b16 %v3072, %v3068
    %v3533 = vpack.c.b16 %v3073, %v3069
    %v3534 = vpack.c.b16 %v3078, %v3074
    %v3535 = vpack.c.b16 %v3079, %v3075
    %v3536 = vpack.c.b16 %v3080, %v3076
    %v3537 = vpack.c.b16 %v3081, %v3077
    %v3538 = vpack.c.b16 %v3086, %v3082
    %v3539 = vpack.c.b16 %v3087, %v3083
    %v3540 = vpack.c.b16 %v3088, %v3084
    %v3541 = vpack.c.b16 %v3089, %v3085
    %v3542 = vpack.c.b16 %v3094, %v3090
    %v3543 = vpack.c.b16 %v3095, %v3091
    %v3544 = vpack.c.b16 %v3096, %v3092
    %v3545 = vpack.c.b16 %v3097, %v3093
    %v3546 = vpack.c.b16 %v3102, %v3098
    %v3547 = vpack.c.b16 %v3103, %v3099
    %v3548 = vpack.c.b16 %v3104, %v3100
    %v3549 = vpack.c.b16 %v3105, %v3101
    %v3550 = vpack.c.b16 %v3110, %v3106
    %v3551 = vpack.c.b16 %v3111, %v3107
    %v3552 = vpack.c.b16 %v3112, %v3108
    %v3553 = vpack.c.b16 %v3113, %v3109
    %v3554 = vpack.c.b16 %v3118, %v3114
    %v3555 = vpack.c.b16 %v3119, %v3115
    %v3556 = vpack.c.b16 %v3120, %v3116
    %v3557 = vpack.c.b16 %v3121, %v3117
    %v3558 = vpack.c.b16 %v3126, %v3122
    %v3559 = vpack.c.b16 %v3127, %v3123
    %v3560 = vpack.c.b16 %v3128, %v3124
    %v3561 = vpack.c.b16 %v3129, %v3125
    %v3562 = vpack.c.b16 %v3134, %v3130
    %v3563 = vpack.c.b16 %v3135, %v3131
    %v3564 = vpack.c.b16 %v3136, %v3132
    %v3565 = vpack.c.b16 %v3137, %v3133
    %v3566 = vpack.c.b16 %v3142, %v3138
    %v3567 = vpack.c.b16 %v3143, %v3139
    %v3568 = vpack.c.b16 %v3144, %v3140
    %v3569 = vpack.c.b16 %v3145, %v3141
    %v3570 = vpack.c.b16 %v3150, %v3146
    %v3571 = vpack.c.b16 %v3151, %v3147
    %v3572 = vpack.c.b16 %v3152, %v3148
    %v3573 = vpack.c.b16 %v3153, %v3149
    %v3574 = vpack.c.b16 %v3158, %v3154
    %v3575 = vpack.c.b16 %v3159, %v3155
    %v3576 = vpack.c.b16 %v3160, %v3156
    %v3577 = vpack.c.b16 %v3161, %v3157
    %v3578 = vpack.c.b16 %v3166, %v3162
    %v3579 = vpack.c.b16 %v3167, %v3163
    %v3580 = vpack.c.b16 %v3168, %v3164
    %v3581 = vpack.c.b16 %v3169, %v3165
    %v3582 = vpack.c.b16 %v3174, %v3170
    %v3583 = vpack.c.b16 %v3175, %v3171
    %v3584 = vpack.c.b16 %v3176, %v3172
    %v3585 = vpack.c.b16 %v3177, %v3173
    %v3586 = vpack.c.b16 %v3182, %v3178
    %v3587 = vpack.c.b16 %v3183, %v3179
    %v3588 = vpack.c.b16 %v3184, %v3180
    %v3589 = vpack.c.b16 %v3185, %v3181
    %v3590 = vpack.c.b16 %v3190, %v3186
    %v3591 = vpack.c.b16 %v3191, %v3187
    %v3592 = vpack.c.b16 %v3192, %v3188
    %v3593 = vpack.c.b16 %v3193, %v3189
    %v3594 = vpack.c.b16 %v3198, %v3194
    %v3595 = vpack.c.b16 %v3199, %v3195
    %v3596 = vpack.c.b16 %v3200, %v3196
    %v3597 = vpack.c.b16 %v3201, %v3197
    %v3598 = vpack.c.b16 %v3206, %v3202
    %v3599 = vpack.c.b16 %v3207, %v3203
    %v3600 = vpack.c.b16 %v3208, %v3204
    %v3601 = vpack.c.b16 %v3209, %v3205
    %v3602 = vpack.c.b16 %v3214, %v3210
    %v3603 = vpack.c.b16 %v3215, %v3211
    %v3604 = vpack.c.b16 %v3216, %v3212
    %v3605 = vpack.c.b16 %v3217, %v3213
    %v3606 = vpack.c.b16 %v3222, %v3218
    %v3607 = vpack.c.b16 %v3223, %v3219
    %v3608 = vpack.c.b16 %v3224, %v3220
    %v3609 = vpack.c.b16 %v3225, %v3221
    %v3610 = vpack.c.b16 %v3230, %v3226
    %v3611 = vpack.c.b16 %v3231, %v3227
    %v3612 = vpack.c.b16 %v3232, %v3228
    %v3613 = vpack.c.b16 %v3233, %v3229
    %v3614 = vpack.c.b16 %v3238, %v3234
    %v3615 = vpack.c.b16 %v3239, %v3235
    %v3616 = vpack.c.b16 %v3240, %v3236
    %v3617 = vpack.c.b16 %v3241, %v3237
    %v3618 = vpack.c.b16 %v3246, %v3242
    %v3619 = vpack.c.b16 %v3247, %v3243
    %v3620 = vpack.c.b16 %v3248, %v3244
    %v3621 = vpack.c.b16 %v3249, %v3245
    %v3622 = vpack.c.b16 %v3254, %v3250
    %v3623 = vpack.c.b16 %v3255, %v3251
    %v3624 = vpack.c.b16 %v3256, %v3252
    %v3625 = vpack.c.b16 %v3257, %v3253
    %v3626 = vpack.c.b16 %v3262, %v3258
    %v3627 = vpack.c.b16 %v3263, %v3259
    %v3628 = vpack.c.b16 %v3264, %v3260
    %v3629 = vpack.c.b16 %v3265, %v3261
    %v3630 = vpack.c.b16 %v3270, %v3266
    %v3631 = vpack.c.b16 %v3271, %v3267
    %v3632 = vpack.c.b16 %v3272, %v3268
    %v3633 = vpack.c.b16 %v3273, %v3269
    %v3634 = vpack.c.b16 %v3278, %v3274
    %v3635 = vpack.c.b16 %v3279, %v3275
    %v3636 = vpack.c.b16 %v3280, %v3276
    %v3637 = vpack.c.b16 %v3281, %v3277
    %v3638 = vpack.c.b16 %v3286, %v3282
    %v3639 = vpack.c.b16 %v3287, %v3283
    %v3640 = vpack.c.b16 %v3288, %v3284
    %v3641 = vpack.c.b16 %v3289, %v3285
    %v3642 = vpack.c.b16 %v3294, %v3290
    %v3643 = vpack.c.b16 %v3295, %v3291
    %v3644 = vpack.c.b16 %v3296, %v3292
    %v3645 = vpack.c.b16 %v3297, %v3293
    %v3646 = vpack.c.b16 %v3302, %v3298
    %v3647 = vpack.c.b16 %v3303, %v3299
    %v3648 = vpack.c.b16 %v3304, %v3300
    %v3649 = vpack.c.b16 %v3305, %v3301
    %v3650 = vpack.c.b16 %v3310, %v3306
    %v3651 = vpack.c.b16 %v3311, %v3307
    %v3652 = vpack.c.b16 %v3312, %v3308
    %v3653 = vpack.c.b16 %v3313, %v3309
    %v3654 = vpack.c.b16 %v3318, %v3314
    %v3655 = vpack.c.b16 %v3319, %v3315
    %v3656 = vpack.c.b16 %v3320, %v3316
    %v3657 = vpack.c.b16 %v3321, %v3317
    %v3658 = vpack.c.b16 %v3326, %v3322
    %v3659 = vpack.c.b16 %v3327, %v3323
    %v3660 = vpack.c.b16 %v3328, %v3324
    %v3661 = vpack.c.b16 %v3329, %v3325
    %v3662 = vpack.c.b16 %v3334, %v3330
    %v3663 = vpack.c.b16 %v3335, %v3331
    %v3664 = vpack.c.b16 %v3336, %v3332
    %v3665 = vpack.c.b16 %v3337, %v3333
    %v3666 = vpack.c.b16 %v3342, %v3338
    %v3667 = vpack.c.b16 %v3343, %v3339
    %v3668 = vpack.c.b16 %v3344, %v3340
    %v3669 = vpack.c.b16 %v3345, %v3341
    %v3670 = vpack.c.b16 %v3350, %v3346
    %v3671 = vpack.c.b16 %v3351, %v3347
    %v3672 = vpack.c.b16 %v3352, %v3348
    %v3673 = vpack.c.b16 %v3353, %v3349
    %v3674 = vpack.c.b16 %v3358, %v3354
    %v3675 = vpack.c.b16 %v3359, %v3355
    %v3676 = vpack.c.b16 %v3360, %v3356
    %v3677 = vpack.c.b16 %v3361, %v3357
    %v3678 = vpack.c.b16 %v3366, %v3362
    %v3679 = vpack.c.b16 %v3367, %v3363
    %v3680 = vpack.c.b16 %v3368, %v3364
    %v3681 = vpack.c.b16 %v3369, %v3365
    %v3682 = vpack.c.b16 %v3374, %v3370
    %v3683 = vpack.c.b16 %v3375, %v3371
    %v3684 = vpack.c.b16 %v3376, %v3372
    %v3685 = vpack.c.b16 %v3377, %v3373
    %v3686 = vpack.c.b16 %v3382, %v3378
    %v3687 = vpack.c.b16 %v3383, %v3379
    %v3688 = vpack.c.b16 %v3384, %v3380
    %v3689 = vpack.c.b16 %v3385, %v3381
    %v3690 = vpack.c.b16 %v3390, %v3386
    %v3691 = vpack.c.b16 %v3391, %v3387
    %v3692 = vpack.c.b16 %v3392, %v3388
    %v3693 = vpack.c.b16 %v3393, %v3389
    %v3694 = vpack.c.b16 %v3398, %v3394
    %v3695 = vpack.c.b16 %v3399, %v3395
    %v3696 = vpack.c.b16 %v3400, %v3396
    %v3697 = vpack.c.b16 %v3401, %v3397
    %v3698 = vpack.c.b16 %v3406, %v3402
    %v3699 = vpack.c.b16 %v3407, %v3403
    %v3700 = vpack.c.b16 %v3408, %v3404
    %v3701 = vpack.c.b16 %v3409, %v3405
    %v3702 = vpack.c.b16 %v3414, %v3410
    %v3703 = vpack.c.b16 %v3415, %v3411
    %v3704 = vpack.c.b16 %v3416, %v3412
    %v3705 = vpack.c.b16 %v3417, %v3413
    %v3706 = vpack.c.b16 %v3422, %v3418
    %v3707 = vpack.c.b16 %v3423, %v3419
    %v3708 = vpack.c.b16 %v3424, %v3420
    %v3709 = vpack.c.b16 %v3425, %v3421
    %v3710 = vpack.c.b16 %v3430, %v3426
    %v3711 = vpack.c.b16 %v3431, %v3427
    %v3712 = vpack.c.b16 %v3432, %v3428
    %v3713 = vpack.c.b16 %v3433, %v3429
    %v3714 = vpack.c.b16 %v3438, %v3434
    %v3715 = vpack.c.b16 %v3439, %v3435
    %v3716 = vpack.c.b16 %v3440, %v3436
    %v3717 = vpack.c.b16 %v3441, %v3437
    %v3718 = vpack.c.b16 %v3446, %v3442
    %v3719 = vpack.c.b16 %v3447, %v3443
    %v3720 = vpack.c.b16 %v3448, %v3444
    %v3721 = vpack.c.b16 %v3449, %v3445
    %v3722 = vpack.c.b16 %v3454, %v3450
    %v3723 = vpack.c.b16 %v3455, %v3451
    %v3724 = vpack.c.b16 %v3456, %v3452
    %v3725 = vpack.c.b16 %v3457, %v3453
    %v3726 = vpack.c.b16 %v3462, %v3458
    %v3727 = vpack.c.b16 %v3463, %v3459
    %v3728 = vpack.c.b16 %v3464, %v3460
    %v3729 = vpack.c.b16 %v3465, %v3461
    %v3730 = vpack.c.b16 %v3470, %v3466
    %v3731 = vpack.c.b16 %v3471, %v3467
    %v3732 = vpack.c.b16 %v3472, %v3468
    %v3733 = vpack.c.b16 %v3473, %v3469
    %v3734 = vpack.c.b16 %v3478, %v3474
    %v3735 = vpack.c.b16 %v3479, %v3475
    %v3736 = vpack.c.b16 %v3480, %v3476
    %v3737 = vpack.c.b16 %v3481, %v3477
    %3994 = vmatprep.subr.bf16.mxu0 %v3483
    %3995 = vmatpush1.bf16.msra.mxu0 %v3482
    %3996 = vmatprep.subr.bf16.mxu0 %v3487
    %3997 = vmatpush1.bf16.msra.mxu0 %v3486
    %3998 = vmatprep.subr.bf16.mxu0 %v3491
    %3999 = vmatpush1.bf16.msra.mxu0 %v3490
    %4000 = vmatprep.subr.bf16.mxu0 %v3495
    %4001 = vmatpush1.bf16.msra.mxu0 %v3494
    %4002 = vmatprep.subr.bf16.mxu0 %v3499
    %4003 = vmatpush1.bf16.msra.mxu0 %v3498
    %4004 = vmatprep.subr.bf16.mxu0 %v3503
    %4005 = vmatpush1.bf16.msra.mxu0 %v3502
    %4006 = vmatprep.subr.bf16.mxu0 %v3507
    %4007 = vmatpush1.bf16.msra.mxu0 %v3506
    %4008 = vmatprep.subr.bf16.mxu0 %v3511
    %4009 = vmatpush1.bf16.msra.mxu0 %v3510
    %4010 = vmatprep.subr.bf16.mxu0 %v3515
    %4011 = vmatpush1.bf16.msra.mxu0 %v3514
    %4012 = vmatprep.subr.bf16.mxu0 %v3519
    %4013 = vmatpush1.bf16.msra.mxu0 %v3518
    %4014 = vmatprep.subr.bf16.mxu0 %v3523
    %4015 = vmatpush1.bf16.msra.mxu0 %v3522
    %4016 = vmatprep.subr.bf16.mxu0 %v3527
    %4017 = vmatpush1.bf16.msra.mxu0 %v3526
    %4018 = vmatprep.subr.bf16.mxu0 %v3531
    %4019 = vmatpush1.bf16.msra.mxu0 %v3530
    %4020 = vmatprep.subr.bf16.mxu0 %v3535
    %4021 = vmatpush1.bf16.msra.mxu0 %v3534
    %4022 = vmatprep.subr.bf16.mxu0 %v3539
    %4023 = vmatpush1.bf16.msra.mxu0 %v3538
    %4024 = vmatprep.subr.bf16.mxu0 %v3543
    %4025 = vmatpush1.bf16.msra.mxu0 %v3542
    %4026 = vmatprep.mubr.bf16.mxu0 %v2429
    %4027 = vmatmul.mubr.bf16.gmra.mrb[0].mxu0 %v2428
    %v4028 = vpop.f32.mrb[0].mxu0
    %v4029 = vadd.f32 %v2697, %v4028
    %v4030 = vpop.f32.mrb[0].mxu0
    %v4031 = vadd.f32 %v2701, %v4030
    %v4032 = vpop.f32.mrb[0].mxu0
    %v4033 = vpop.f32.mrb[0].mxu0
    %4034 = vdwg.mxu0
    %4035 = vmatprep.subr.bf16.mxu0 %v3547
    %4036 = vmatpush1.bf16.msra.mxu0 %v3546
    %4037 = vmatprep.subr.bf16.mxu0 %v3551
    %4038 = vmatpush1.bf16.msra.mxu0 %v3550
    %4039 = vmatprep.subr.bf16.mxu0 %v3555
    %4040 = vmatpush1.bf16.msra.mxu0 %v3554
    %4041 = vmatprep.subr.bf16.mxu0 %v3559
    %4042 = vmatpush1.bf16.msra.mxu0 %v3558
    %4043 = vmatprep.subr.bf16.mxu0 %v3563
    %4044 = vmatpush1.bf16.msra.mxu0 %v3562
    %4045 = vmatprep.subr.bf16.mxu0 %v3567
    %4046 = vmatpush1.bf16.msra.mxu0 %v3566
    %4047 = vmatprep.subr.bf16.mxu0 %v3571
    %4048 = vmatpush1.bf16.msra.mxu0 %v3570
    %4049 = vmatprep.subr.bf16.mxu0 %v3575
    %4050 = vmatpush1.bf16.msra.mxu0 %v3574
    %4051 = vmatprep.subr.bf16.mxu0 %v3579
    %4052 = vmatpush1.bf16.msra.mxu0 %v3578
    %4053 = vmatprep.subr.bf16.mxu0 %v3583
    %4054 = vmatpush1.bf16.msra.mxu0 %v3582
    %4055 = vmatprep.subr.bf16.mxu0 %v3587
    %4056 = vmatpush1.bf16.msra.mxu0 %v3586
    %4057 = vmatprep.subr.bf16.mxu0 %v3591
    %4058 = vmatpush1.bf16.msra.mxu0 %v3590
    %4059 = vmatprep.subr.bf16.mxu0 %v3595
    %4060 = vmatpush1.bf16.msra.mxu0 %v3594
    %4061 = vmatprep.subr.bf16.mxu0 %v3599
    %4062 = vmatpush1.bf16.msra.mxu0 %v3598
    %4063 = vmatprep.subr.bf16.mxu0 %v3603
    %4064 = vmatpush1.bf16.msra.mxu0 %v3602
    %4065 = vmatprep.subr.bf16.mxu0 %v3607
    %4066 = vmatpush1.bf16.msra.mxu0 %v3606
    %4067 = vmatprep.mubr.bf16.mxu0 %v2431
    %4068 = vmatmul.mubr.bf16.gmra.mrb[0].mxu0 %v2430
    %v4069 = vpop.f32.mrb[0].mxu0
    %v4070 = vadd.f32 %v4029, %v4069
    %v4071 = vpop.f32.mrb[0].mxu0
    %v4072 = vadd.f32 %v4031, %v4071
    %v4073 = vpop.f32.mrb[0].mxu0
    %v4074 = vpop.f32.mrb[0].mxu0
    %4075 = vdwg.mxu0
    %4076 = vmatprep.subr.bf16.mxu0 %v3611
    %4077 = vmatpush1.bf16.msra.mxu0 %v3610
    %4078 = vmatprep.subr.bf16.mxu0 %v3615
    %4079 = vmatpush1.bf16.msra.mxu0 %v3614
    %4080 = vmatprep.subr.bf16.mxu0 %v3619
    %4081 = vmatpush1.bf16.msra.mxu0 %v3618
    %4082 = vmatprep.subr.bf16.mxu0 %v3623
    %4083 = vmatpush1.bf16.msra.mxu0 %v3622
    %4084 = vmatprep.subr.bf16.mxu0 %v3627
    %4085 = vmatpush1.bf16.msra.mxu0 %v3626
    %4086 = vmatprep.subr.bf16.mxu0 %v3631
    %4087 = vmatpush1.bf16.msra.mxu0 %v3630
    %4088 = vmatprep.subr.bf16.mxu0 %v3635
    %4089 = vmatpush1.bf16.msra.mxu0 %v3634
    %4090 = vmatprep.subr.bf16.mxu0 %v3639
    %4091 = vmatpush1.bf16.msra.mxu0 %v3638
    %4092 = vmatprep.subr.bf16.mxu0 %v3643
    %4093 = vmatpush1.bf16.msra.mxu0 %v3642
    %4094 = vmatprep.subr.bf16.mxu0 %v3647
    %4095 = vmatpush1.bf16.msra.mxu0 %v3646
    %4096 = vmatprep.subr.bf16.mxu0 %v3651
    %4097 = vmatpush1.bf16.msra.mxu0 %v3650
    %4098 = vmatprep.subr.bf16.mxu0 %v3655
    %4099 = vmatpush1.bf16.msra.mxu0 %v3654
    %4100 = vmatprep.subr.bf16.mxu0 %v3659
    %4101 = vmatpush1.bf16.msra.mxu0 %v3658
    %4102 = vmatprep.subr.bf16.mxu0 %v3663
    %4103 = vmatpush1.bf16.msra.mxu0 %v3662
    %4104 = vmatprep.subr.bf16.mxu0 %v3667
    %4105 = vmatpush1.bf16.msra.mxu0 %v3666
    %4106 = vmatprep.subr.bf16.mxu0 %v3671
    %4107 = vmatpush1.bf16.msra.mxu0 %v3670
    %4108 = vmatprep.mubr.bf16.mxu0 %v2433
    %4109 = vmatmul.mubr.bf16.gmra.mrb[0].mxu0 %v2432
    %v4110 = vpop.f32.mrb[0].mxu0
    %v4111 = vadd.f32 %v4070, %v4110
    %v4112 = vpop.f32.mrb[0].mxu0
    %v4113 = vadd.f32 %v4072, %v4112
    %v4114 = vpop.f32.mrb[0].mxu0
    %v4115 = vpop.f32.mrb[0].mxu0
    %4116 = vdwg.mxu0
    %4117 = vmatprep.subr.bf16.mxu0 %v3675
    %4118 = vmatpush1.bf16.msra.mxu0 %v3674
    %4119 = vmatprep.subr.bf16.mxu0 %v3679
    %4120 = vmatpush1.bf16.msra.mxu0 %v3678
    %4121 = vmatprep.subr.bf16.mxu0 %v3683
    %4122 = vmatpush1.bf16.msra.mxu0 %v3682
    %4123 = vmatprep.subr.bf16.mxu0 %v3687
    %4124 = vmatpush1.bf16.msra.mxu0 %v3686
    %4125 = vmatprep.subr.bf16.mxu0 %v3691
    %4126 = vmatpush1.bf16.msra.mxu0 %v3690
    %4127 = vmatprep.subr.bf16.mxu0 %v3695
    %4128 = vmatpush1.bf16.msra.mxu0 %v3694
    %4129 = vmatprep.subr.bf16.mxu0 %v3699
    %4130 = vmatpush1.bf16.msra.mxu0 %v3698
    %4131 = vmatprep.subr.bf16.mxu0 %v3703
    %4132 = vmatpush1.bf16.msra.mxu0 %v3702
    %4133 = vmatprep.subr.bf16.mxu0 %v3707
    %4134 = vmatpush1.bf16.msra.mxu0 %v3706
    %4135 = vmatprep.subr.bf16.mxu0 %v3711
    %4136 = vmatpush1.bf16.msra.mxu0 %v3710
    %4137 = vmatprep.subr.bf16.mxu0 %v3715
    %4138 = vmatpush1.bf16.msra.mxu0 %v3714
    %4139 = vmatprep.subr.bf16.mxu0 %v3719
    %4140 = vmatpush1.bf16.msra.mxu0 %v3718
    %4141 = vmatprep.subr.bf16.mxu0 %v3723
    %4142 = vmatpush1.bf16.msra.mxu0 %v3722
    %4143 = vmatprep.subr.bf16.mxu0 %v3727
    %4144 = vmatpush1.bf16.msra.mxu0 %v3726
    %4145 = vmatprep.subr.bf16.mxu0 %v3731
    %4146 = vmatpush1.bf16.msra.mxu0 %v3730
    %4147 = vmatprep.subr.bf16.mxu0 %v3735
    %4148 = vmatpush1.bf16.msra.mxu0 %v3734
    %4149 = vmatprep.mubr.bf16.mxu0 %v2435
    %4150 = vmatmul.mubr.bf16.gmra.mrb[0].mxu0 %v2434
    %v4151 = vpop.f32.mrb[0].mxu0
    %v4152 = vadd.f32 %v4111, %v4151
    %v4153 = vpop.f32.mrb[0].mxu0
    %v4154 = vadd.f32 %v4113, %v4153
    %v4155 = vpop.f32.mrb[0].mxu0
    %v4156 = vpop.f32.mrb[0].mxu0
    %4157 = vdwg.mxu0
    %4158 = vmatprep.subr.bf16.mxu0 %v3485
    %4159 = vmatpush1.bf16.msra.mxu0 %v3484
    %4160 = vmatprep.subr.bf16.mxu0 %v3489
    %4161 = vmatpush1.bf16.msra.mxu0 %v3488
    %4162 = vmatprep.subr.bf16.mxu0 %v3493
    %4163 = vmatpush1.bf16.msra.mxu0 %v3492
    %4164 = vmatprep.subr.bf16.mxu0 %v3497
    %4165 = vmatpush1.bf16.msra.mxu0 %v3496
    %4166 = vmatprep.subr.bf16.mxu0 %v3501
    %4167 = vmatpush1.bf16.msra.mxu0 %v3500
    %4168 = vmatprep.subr.bf16.mxu0 %v3505
    %4169 = vmatpush1.bf16.msra.mxu0 %v3504
    %4170 = vmatprep.subr.bf16.mxu0 %v3509
    %4171 = vmatpush1.bf16.msra.mxu0 %v3508
    %4172 = vmatprep.subr.bf16.mxu0 %v3513
    %4173 = vmatpush1.bf16.msra.mxu0 %v3512
    %4174 = vmatprep.subr.bf16.mxu0 %v3517
    %4175 = vmatpush1.bf16.msra.mxu0 %v3516
    %4176 = vmatprep.subr.bf16.mxu0 %v3521
    %4177 = vmatpush1.bf16.msra.mxu0 %v3520
    %4178 = vmatprep.subr.bf16.mxu0 %v3525
    %4179 = vmatpush1.bf16.msra.mxu0 %v3524
    %4180 = vmatprep.subr.bf16.mxu0 %v3529
    %4181 = vmatpush1.bf16.msra.mxu0 %v3528
    %4182 = vmatprep.subr.bf16.mxu0 %v3533
    %4183 = vmatpush1.bf16.msra.mxu0 %v3532
    %4184 = vmatprep.subr.bf16.mxu0 %v3537
    %4185 = vmatpush1.bf16.msra.mxu0 %v3536
    %4186 = vmatprep.subr.bf16.mxu0 %v3541
    %4187 = vmatpush1.bf16.msra.mxu0 %v3540
    %4188 = vmatprep.subr.bf16.mxu0 %v3545
    %4189 = vmatpush1.bf16.msra.mxu0 %v3544
    %4190 = vmatprep.mubr.bf16.mxu0 %v2429
    %4191 = vmatmul.mubr.bf16.gmra.mrb[0].mxu0 %v2428
    %v4192 = vpop.f32.mrb[0].mxu0
    %v4193 = vadd.f32 %v2705, %v4192
    %v4194 = vpop.f32.mrb[0].mxu0
    %v4195 = vadd.f32 %v2709, %v4194
    %v4196 = vpop.f32.mrb[0].mxu0
    %v4197 = vpop.f32.mrb[0].mxu0
    %4198 = vdwg.mxu0
    %4199 = vmatprep.subr.bf16.mxu0 %v3549
    %4200 = vmatpush1.bf16.msra.mxu0 %v3548
    %4201 = vmatprep.subr.bf16.mxu0 %v3553
    %4202 = vmatpush1.bf16.msra.mxu0 %v3552
    %4203 = vmatprep.subr.bf16.mxu0 %v3557
    %4204 = vmatpush1.bf16.msra.mxu0 %v3556
    %4205 = vmatprep.subr.bf16.mxu0 %v3561
    %4206 = vmatpush1.bf16.msra.mxu0 %v3560
    %4207 = vmatprep.subr.bf16.mxu0 %v3565
    %4208 = vmatpush1.bf16.msra.mxu0 %v3564
    %4209 = vmatprep.subr.bf16.mxu0 %v3569
    %4210 = vmatpush1.bf16.msra.mxu0 %v3568
    %4211 = vmatprep.subr.bf16.mxu0 %v3573
    %4212 = vmatpush1.bf16.msra.mxu0 %v3572
    %4213 = vmatprep.subr.bf16.mxu0 %v3577
    %4214 = vmatpush1.bf16.msra.mxu0 %v3576
    %4215 = vmatprep.subr.bf16.mxu0 %v3581
    %4216 = vmatpush1.bf16.msra.mxu0 %v3580
    %4217 = vmatprep.subr.bf16.mxu0 %v3585
    %4218 = vmatpush1.bf16.msra.mxu0 %v3584
    %4219 = vmatprep.subr.bf16.mxu0 %v3589
    %4220 = vmatpush1.bf16.msra.mxu0 %v3588
    %4221 = vmatprep.subr.bf16.mxu0 %v3593
    %4222 = vmatpush1.bf16.msra.mxu0 %v3592
    %4223 = vmatprep.subr.bf16.mxu0 %v3597
    %4224 = vmatpush1.bf16.msra.mxu0 %v3596
    %4225 = vmatprep.subr.bf16.mxu0 %v3601
    %4226 = vmatpush1.bf16.msra.mxu0 %v3600
    %4227 = vmatprep.subr.bf16.mxu0 %v3605
    %4228 = vmatpush1.bf16.msra.mxu0 %v3604
    %4229 = vmatprep.subr.bf16.mxu0 %v3609
    %4230 = vmatpush1.bf16.msra.mxu0 %v3608
    %4231 = vmatprep.mubr.bf16.mxu0 %v2431
    %4232 = vmatmul.mubr.bf16.gmra.mrb[0].mxu0 %v2430
    %v4233 = vpop.f32.mrb[0].mxu0
    %v4234 = vadd.f32 %v4193, %v4233
    %v4235 = vpop.f32.mrb[0].mxu0
    %v4236 = vadd.f32 %v4195, %v4235
    %v4237 = vpop.f32.mrb[0].mxu0
    %v4238 = vpop.f32.mrb[0].mxu0
    %4239 = vdwg.mxu0
    %4240 = vmatprep.subr.bf16.mxu0 %v3613
    %4241 = vmatpush1.bf16.msra.mxu0 %v3612
    %4242 = vmatprep.subr.bf16.mxu0 %v3617
    %4243 = vmatpush1.bf16.msra.mxu0 %v3616
    %4244 = vmatprep.subr.bf16.mxu0 %v3621
    %4245 = vmatpush1.bf16.msra.mxu0 %v3620
    %4246 = vmatprep.subr.bf16.mxu0 %v3625
    %4247 = vmatpush1.bf16.msra.mxu0 %v3624
    %4248 = vmatprep.subr.bf16.mxu0 %v3629
    %4249 = vmatpush1.bf16.msra.mxu0 %v3628
    %4250 = vmatprep.subr.bf16.mxu0 %v3633
    %4251 = vmatpush1.bf16.msra.mxu0 %v3632
    %4252 = vmatprep.subr.bf16.mxu0 %v3637
    %4253 = vmatpush1.bf16.msra.mxu0 %v3636
    %4254 = vmatprep.subr.bf16.mxu0 %v3641
    %4255 = vmatpush1.bf16.msra.mxu0 %v3640
    %4256 = vmatprep.subr.bf16.mxu0 %v3645
    %4257 = vmatpush1.bf16.msra.mxu0 %v3644
    %4258 = vmatprep.subr.bf16.mxu0 %v3649
    %4259 = vmatpush1.bf16.msra.mxu0 %v3648
    %4260 = vmatprep.subr.bf16.mxu0 %v3653
    %4261 = vmatpush1.bf16.msra.mxu0 %v3652
    %4262 = vmatprep.subr.bf16.mxu0 %v3657
    %4263 = vmatpush1.bf16.msra.mxu0 %v3656
    %4264 = vmatprep.subr.bf16.mxu0 %v3661
    %4265 = vmatpush1.bf16.msra.mxu0 %v3660
    %4266 = vmatprep.subr.bf16.mxu0 %v3665
    %4267 = vmatpush1.bf16.msra.mxu0 %v3664
    %4268 = vmatprep.subr.bf16.mxu0 %v3669
    %4269 = vmatpush1.bf16.msra.mxu0 %v3668
    %4270 = vmatprep.subr.bf16.mxu0 %v3673
    %4271 = vmatpush1.bf16.msra.mxu0 %v3672
    %4272 = vmatprep.mubr.bf16.mxu0 %v2433
    %4273 = vmatmul.mubr.bf16.gmra.mrb[0].mxu0 %v2432
    %v4274 = vpop.f32.mrb[0].mxu0
    %v4275 = vadd.f32 %v4234, %v4274
    %v4276 = vpop.f32.mrb[0].mxu0
    %v4277 = vadd.f32 %v4236, %v4276
    %v4278 = vpop.f32.mrb[0].mxu0
    %v4279 = vpop.f32.mrb[0].mxu0
    %4280 = vdwg.mxu0
    %4281 = vmatprep.subr.bf16.mxu0 %v3677
    %4282 = vmatpush1.bf16.msra.mxu0 %v3676
    %4283 = vmatprep.subr.bf16.mxu0 %v3681
    %4284 = vmatpush1.bf16.msra.mxu0 %v3680
    %4285 = vmatprep.subr.bf16.mxu0 %v3685
    %4286 = vmatpush1.bf16.msra.mxu0 %v3684
    %4287 = vmatprep.subr.bf16.mxu0 %v3689
    %4288 = vmatpush1.bf16.msra.mxu0 %v3688
    %4289 = vmatprep.subr.bf16.mxu0 %v3693
    %4290 = vmatpush1.bf16.msra.mxu0 %v3692
    %4291 = vmatprep.subr.bf16.mxu0 %v3697
    %4292 = vmatpush1.bf16.msra.mxu0 %v3696
    %4293 = vmatprep.subr.bf16.mxu0 %v3701
    %4294 = vmatpush1.bf16.msra.mxu0 %v3700
    %4295 = vmatprep.subr.bf16.mxu0 %v3705
    %4296 = vmatpush1.bf16.msra.mxu0 %v3704
    %4297 = vmatprep.subr.bf16.mxu0 %v3709
    %4298 = vmatpush1.bf16.msra.mxu0 %v3708
    %4299 = vmatprep.subr.bf16.mxu0 %v3713
    %4300 = vmatpush1.bf16.msra.mxu0 %v3712
    %4301 = vmatprep.subr.bf16.mxu0 %v3717
    %4302 = vmatpush1.bf16.msra.mxu0 %v3716
    %4303 = vmatprep.subr.bf16.mxu0 %v3721
    %4304 = vmatpush1.bf16.msra.mxu0 %v3720
    %4305 = vmatprep.subr.bf16.mxu0 %v3725
    %4306 = vmatpush1.bf16.msra.mxu0 %v3724
    %4307 = vmatprep.subr.bf16.mxu0 %v3729
    %4308 = vmatpush1.bf16.msra.mxu0 %v3728
    %4309 = vmatprep.subr.bf16.mxu0 %v3733
    %4310 = vmatpush1.bf16.msra.mxu0 %v3732
    %4311 = vmatprep.subr.bf16.mxu0 %v3737
    %4312 = vmatpush1.bf16.msra.mxu0 %v3736
    %4313 = vmatprep.mubr.bf16.mxu0 %v2435
    %4314 = vmatmul.mubr.bf16.gmra.mrb[0].mxu0 %v2434
    %v4315 = vpop.f32.mrb[0].mxu0
    %v4316 = vadd.f32 %v4275, %v4315
    %v4317 = vpop.f32.mrb[0].mxu0
    %v4318 = vadd.f32 %v4277, %v4317
    %v4319 = vpop.f32.mrb[0].mxu0
    %v4320 = vpop.f32.mrb[0].mxu0
    %4321 = vdwg.mxu0
    %v4322 = vld [vmem:[#allocation2] sm:$0xff]
    %v4323 = vld [vmem:[#allocation2 + $0x8] sm:$0xff]
    %v4324 = vld [vmem:[#allocation2 + $0x10] sm:$0xff]
    %v4325 = vld [vmem:[#allocation2 + $0x18] sm:$0xff]
    %v4326 = vld [vmem:[#allocation2 + $0x20] sm:$0xff]
    %v4327 = vld [vmem:[#allocation2 + $0x28] sm:$0xff]
    %v4328 = vld [vmem:[#allocation2 + $0x30] sm:$0xff]
    %v4329 = vld [vmem:[#allocation2 + $0x38] sm:$0xff]
    %v4330 = vld [vmem:[#allocation21] sm:$0xff]
    %v4331 = vld [vmem:[#allocation21 + $0x8] sm:$0xff]
    %v4332 = vld [vmem:[#allocation21 + $0x10] sm:$0xff]
    %v4333 = vld [vmem:[#allocation21 + $0x18] sm:$0xff]
    %v4334 = vld [vmem:[#allocation21 + $0x20] sm:$0xff]
    %v4335 = vld [vmem:[#allocation21 + $0x28] sm:$0xff]
    %v4336 = vld [vmem:[#allocation21 + $0x30] sm:$0xff]
    %v4337 = vld [vmem:[#allocation21 + $0x38] sm:$0xff]
    %v4338 = vld [vmem:[#allocation21 + $0x40] sm:$0xff]
    %v4339 = vld [vmem:[#allocation21 + $0x48] sm:$0xff]
    %v4340 = vld [vmem:[#allocation21 + $0x50] sm:$0xff]
    %v4341 = vld [vmem:[#allocation21 + $0x58] sm:$0xff]
    %v4342 = vld [vmem:[#allocation21 + $0x60] sm:$0xff]
    %v4343 = vld [vmem:[#allocation21 + $0x68] sm:$0xff]
    %v4344 = vld [vmem:[#allocation21 + $0x70] sm:$0xff]
    %v4345 = vld [vmem:[#allocation21 + $0x78] sm:$0xff]
    %v4362 = vunpack.c.l.b16 %v4330
    %v4363 = vunpack.c.h.b16 %v4330
    %v4364 = vunpack.c.l.b16 %v4331
    %v4365 = vunpack.c.h.b16 %v4331
    %v4366 = vunpack.c.l.b16 %v4332
    %v4367 = vunpack.c.h.b16 %v4332
    %v4368 = vunpack.c.l.b16 %v4333
    %v4369 = vunpack.c.h.b16 %v4333
    %v4370 = vunpack.c.l.b16 %v4334
    %v4371 = vunpack.c.h.b16 %v4334
    %v4372 = vunpack.c.l.b16 %v4335
    %v4373 = vunpack.c.h.b16 %v4335
    %v4374 = vunpack.c.l.b16 %v4336
    %v4375 = vunpack.c.h.b16 %v4336
    %v4376 = vunpack.c.l.b16 %v4337
    %v4377 = vunpack.c.h.b16 %v4337
    %v4378 = vunpack.c.l.b16 %v4338
    %v4379 = vunpack.c.h.b16 %v4338
    %v4380 = vunpack.c.l.b16 %v4339
    %v4381 = vunpack.c.h.b16 %v4339
    %v4382 = vunpack.c.l.b16 %v4340
    %v4383 = vunpack.c.h.b16 %v4340
    %v4384 = vunpack.c.l.b16 %v4341
    %v4385 = vunpack.c.h.b16 %v4341
    %v4386 = vunpack.c.l.b16 %v4342
    %v4387 = vunpack.c.h.b16 %v4342
    %v4388 = vunpack.c.l.b16 %v4343
    %v4389 = vunpack.c.h.b16 %v4343
    %v4390 = vunpack.c.l.b16 %v4344
    %v4391 = vunpack.c.h.b16 %v4344
    %v4392 = vunpack.c.l.b16 %v4345
    %v4393 = vunpack.c.h.b16 %v4345
    %v4394 = vpack.c.b16 %v4366, %v4362
    %v4395 = vpack.c.b16 %v4367, %v4363
    %v4396 = vpack.c.b16 %v4368, %v4364
    %v4397 = vpack.c.b16 %v4369, %v4365
    %v4398 = vpack.c.b16 %v4374, %v4370
    %v4399 = vpack.c.b16 %v4375, %v4371
    %v4400 = vpack.c.b16 %v4376, %v4372
    %v4401 = vpack.c.b16 %v4377, %v4373
    %v4402 = vpack.c.b16 %v4382, %v4378
    %v4403 = vpack.c.b16 %v4383, %v4379
    %v4404 = vpack.c.b16 %v4384, %v4380
    %v4405 = vpack.c.b16 %v4385, %v4381
    %v4406 = vpack.c.b16 %v4390, %v4386
    %v4407 = vpack.c.b16 %v4391, %v4387
    %v4408 = vpack.c.b16 %v4392, %v4388
    %v4409 = vpack.c.b16 %v4393, %v4389
    %v4427 = vsel %vm523, %v4322, 0
    %v4430 = vsel %vm523, %v4323, 0
    %v4433 = vsel %vm523, %v4324, 0
    %v4436 = vsel %vm523, %v4325, 0
    %v4439 = vsel %vm523, %v4326, 0
    %v4442 = vsel %vm523, %v4327, 0
    %v4445 = vsel %vm523, %v4328, 0
    %v4448 = vsel %vm523, %v4329, 0
    %4450 = vmatprep.subr.bf16.mxu0 %v4395
    %4451 = vmatpush1.bf16.msra.mxu0 %v4394
    %4452 = vmatprep.subr.bf16.mxu0 %v4399
    %4453 = vmatpush1.bf16.msra.mxu0 %v4398
    %4454 = vmatprep.subr.bf16.mxu0 %v4403
    %4455 = vmatpush1.bf16.msra.mxu0 %v4402
    %4456 = vmatprep.subr.bf16.mxu0 %v4407
    %4457 = vmatpush1.bf16.msra.mxu0 %v4406
    %4458 = vmatprep.subr.bf16.mxu0 0
    %4459 = vmatpush1.bf16.msra.mxu0 0
    %4460 = vmatprep.subr.bf16.mxu0 0
    %4461 = vmatpush1.bf16.msra.mxu0 0
    %4462 = vmatprep.subr.bf16.mxu0 0
    %4463 = vmatpush1.bf16.msra.mxu0 0
    %4464 = vmatprep.subr.bf16.mxu0 0
    %4465 = vmatpush1.bf16.msra.mxu0 0
    %4466 = vmatprep.subr.bf16.mxu0 0
    %4467 = vmatpush1.bf16.msra.mxu0 0
    %4468 = vmatprep.subr.bf16.mxu0 0
    %4469 = vmatpush1.bf16.msra.mxu0 0
    %4470 = vmatprep.subr.bf16.mxu0 0
    %4471 = vmatpush1.bf16.msra.mxu0 0
    %4472 = vmatprep.subr.bf16.mxu0 0
    %4473 = vmatpush1.bf16.msra.mxu0 0
    %4474 = vmatprep.subr.bf16.mxu0 0
    %4475 = vmatpush1.bf16.msra.mxu0 0
    %4476 = vmatprep.subr.bf16.mxu0 0
    %4477 = vmatpush1.bf16.msra.mxu0 0
    %4478 = vmatprep.subr.bf16.mxu0 0
    %4479 = vmatpush1.bf16.msra.mxu0 0
    %4480 = vmatprep.subr.bf16.mxu0 0
    %4481 = vmatpush1.bf16.msra.mxu0 0
    %4482 = vmatprep.mubr.bf16.mxu0 0
    %4483 = vmatmul.mubr.bf16.gmra.mrb[0].mxu0 %v4427
    %v4484 = vpop.f32.mrb[0].mxu0
    %v4485 = vadd.f32 0.0, %v4484
    %v4486 = vpop.f32.mrb[0].mxu0
    %v4487 = vadd.f32 0.0, %v4486
    %v4488 = vpop.f32.mrb[0].mxu0
    %v4489 = vadd.f32 0.0, %v4488
    %v4490 = vpop.f32.mrb[0].mxu0
    %v4491 = vadd.f32 0.0, %v4490
    %4492 = vmatprep.mubr.bf16.mxu0 0
    %4493 = vmatmul.mubr.bf16.gmra.mrb[0].mxu0 %v4430
    %v4494 = vpop.f32.mrb[0].mxu0
    %v4495 = vadd.f32 0.0, %v4494
    %v4496 = vpop.f32.mrb[0].mxu0
    %v4497 = vadd.f32 0.0, %v4496
    %v4498 = vpop.f32.mrb[0].mxu0
    %v4499 = vadd.f32 0.0, %v4498
    %v4500 = vpop.f32.mrb[0].mxu0
    %v4501 = vadd.f32 0.0, %v4500
    %4502 = vmatprep.mubr.bf16.mxu0 0
    %4503 = vmatmul.mubr.bf16.gmra.mrb[0].mxu0 %v4433
    %v4504 = vpop.f32.mrb[0].mxu0
    %v4505 = vadd.f32 0.0, %v4504
    %v4506 = vpop.f32.mrb[0].mxu0
    %v4507 = vadd.f32 0.0, %v4506
    %v4508 = vpop.f32.mrb[0].mxu0
    %v4509 = vadd.f32 0.0, %v4508
    %v4510 = vpop.f32.mrb[0].mxu0
    %v4511 = vadd.f32 0.0, %v4510
    %4512 = vmatprep.mubr.bf16.mxu0 0
    %4513 = vmatmul.mubr.bf16.gmra.mrb[0].mxu0 %v4436
    %v4514 = vpop.f32.mrb[0].mxu0
    %v4515 = vadd.f32 0.0, %v4514
    %v4516 = vpop.f32.mrb[0].mxu0
    %v4517 = vadd.f32 0.0, %v4516
    %v4518 = vpop.f32.mrb[0].mxu0
    %v4519 = vadd.f32 0.0, %v4518
    %v4520 = vpop.f32.mrb[0].mxu0
    %v4521 = vadd.f32 0.0, %v4520
    %4522 = vmatprep.mubr.bf16.mxu0 0
    %4523 = vmatmul.mubr.bf16.gmra.mrb[0].mxu0 %v4439
    %v4524 = vpop.f32.mrb[0].mxu0
    %v4525 = vadd.f32 0.0, %v4524
    %v4526 = vpop.f32.mrb[0].mxu0
    %v4527 = vadd.f32 0.0, %v4526
    %v4528 = vpop.f32.mrb[0].mxu0
    %v4529 = vadd.f32 0.0, %v4528
    %v4530 = vpop.f32.mrb[0].mxu0
    %v4531 = vadd.f32 0.0, %v4530
    %4532 = vmatprep.mubr.bf16.mxu0 0
    %4533 = vmatmul.mubr.bf16.gmra.mrb[0].mxu0 %v4442
    %v4534 = vpop.f32.mrb[0].mxu0
    %v4535 = vadd.f32 0.0, %v4534
    %v4536 = vpop.f32.mrb[0].mxu0
    %v4537 = vadd.f32 0.0, %v4536
    %v4538 = vpop.f32.mrb[0].mxu0
    %v4539 = vadd.f32 0.0, %v4538
    %v4540 = vpop.f32.mrb[0].mxu0
    %v4541 = vadd.f32 0.0, %v4540
    %4542 = vmatprep.mubr.bf16.mxu0 0
    %4543 = vmatmul.mubr.bf16.gmra.mrb[0].mxu0 %v4445
    %v4544 = vpop.f32.mrb[0].mxu0
    %v4545 = vadd.f32 0.0, %v4544
    %v4546 = vpop.f32.mrb[0].mxu0
    %v4547 = vadd.f32 0.0, %v4546
    %v4548 = vpop.f32.mrb[0].mxu0
    %v4549 = vadd.f32 0.0, %v4548
    %v4550 = vpop.f32.mrb[0].mxu0
    %v4551 = vadd.f32 0.0, %v4550
    %4552 = vmatprep.mubr.bf16.mxu0 0
    %4553 = vmatmul.mubr.bf16.gmra.mrb[0].mxu0 %v4448
    %v4554 = vpop.f32.mrb[0].mxu0
    %v4555 = vadd.f32 0.0, %v4554
    %v4556 = vpop.f32.mrb[0].mxu0
    %v4557 = vadd.f32 0.0, %v4556
    %v4558 = vpop.f32.mrb[0].mxu0
    %v4559 = vadd.f32 0.0, %v4558
    %v4560 = vpop.f32.mrb[0].mxu0
    %v4561 = vadd.f32 0.0, %v4560
    %4562 = vdwg.mxu0
    %4563 = vmatprep.subr.bf16.mxu0 %v4397
    %4564 = vmatpush1.bf16.msra.mxu0 %v4396
    %4565 = vmatprep.subr.bf16.mxu0 %v4401
    %4566 = vmatpush1.bf16.msra.mxu0 %v4400
    %4567 = vmatprep.subr.bf16.mxu0 %v4405
    %4568 = vmatpush1.bf16.msra.mxu0 %v4404
    %4569 = vmatprep.subr.bf16.mxu0 %v4409
    %4570 = vmatpush1.bf16.msra.mxu0 %v4408
    %4571 = vmatprep.subr.bf16.mxu0 0
    %4572 = vmatpush1.bf16.msra.mxu0 0
    %4573 = vmatprep.subr.bf16.mxu0 0
    %4574 = vmatpush1.bf16.msra.mxu0 0
    %4575 = vmatprep.subr.bf16.mxu0 0
    %4576 = vmatpush1.bf16.msra.mxu0 0
    %4577 = vmatprep.subr.bf16.mxu0 0
    %4578 = vmatpush1.bf16.msra.mxu0 0
    %4579 = vmatprep.subr.bf16.mxu0 0
    %4580 = vmatpush1.bf16.msra.mxu0 0
    %4581 = vmatprep.subr.bf16.mxu0 0
    %4582 = vmatpush1.bf16.msra.mxu0 0
    %4583 = vmatprep.subr.bf16.mxu0 0
    %4584 = vmatpush1.bf16.msra.mxu0 0
    %4585 = vmatprep.subr.bf16.mxu0 0
    %4586 = vmatpush1.bf16.msra.mxu0 0
    %4587 = vmatprep.subr.bf16.mxu0 0
    %4588 = vmatpush1.bf16.msra.mxu0 0
    %4589 = vmatprep.subr.bf16.mxu0 0
    %4590 = vmatpush1.bf16.msra.mxu0 0
    %4591 = vmatprep.subr.bf16.mxu0 0
    %4592 = vmatpush1.bf16.msra.mxu0 0
    %4593 = vmatprep.subr.bf16.mxu0 0
    %4594 = vmatpush1.bf16.msra.mxu0 0
    %4595 = vmatprep.mubr.bf16.mxu0 0
    %4596 = vmatmul.mubr.bf16.gmra.mrb[0].mxu0 %v4427
    %v4597 = vpop.f32.mrb[0].mxu0
    %v4598 = vadd.f32 0.0, %v4597
    %v4599 = vpop.f32.mrb[0].mxu0
    %v4600 = vadd.f32 0.0, %v4599
    %v4601 = vpop.f32.mrb[0].mxu0
    %v4602 = vadd.f32 0.0, %v4601
    %v4603 = vpop.f32.mrb[0].mxu0
    %v4604 = vadd.f32 0.0, %v4603
    %4605 = vmatprep.mubr.bf16.mxu0 0
    %4606 = vmatmul.mubr.bf16.gmra.mrb[0].mxu0 %v4430
    %v4607 = vpop.f32.mrb[0].mxu0
    %v4608 = vadd.f32 0.0, %v4607
    %v4609 = vpop.f32.mrb[0].mxu0
    %v4610 = vadd.f32 0.0, %v4609
    %v4611 = vpop.f32.mrb[0].mxu0
    %v4612 = vadd.f32 0.0, %v4611
    %v4613 = vpop.f32.mrb[0].mxu0
    %v4614 = vadd.f32 0.0, %v4613
    %4615 = vmatprep.mubr.bf16.mxu0 0
    %4616 = vmatmul.mubr.bf16.gmra.mrb[0].mxu0 %v4433
    %v4617 = vpop.f32.mrb[0].mxu0
    %v4618 = vadd.f32 0.0, %v4617
    %v4619 = vpop.f32.mrb[0].mxu0
    %v4620 = vadd.f32 0.0, %v4619
    %v4621 = vpop.f32.mrb[0].mxu0
    %v4622 = vadd.f32 0.0, %v4621
    %v4623 = vpop.f32.mrb[0].mxu0
    %v4624 = vadd.f32 0.0, %v4623
    %4625 = vmatprep.mubr.bf16.mxu0 0
    %4626 = vmatmul.mubr.bf16.gmra.mrb[0].mxu0 %v4436
    %v4627 = vpop.f32.mrb[0].mxu0
    %v4628 = vadd.f32 0.0, %v4627
    %v4629 = vpop.f32.mrb[0].mxu0
    %v4630 = vadd.f32 0.0, %v4629
    %v4631 = vpop.f32.mrb[0].mxu0
    %v4632 = vadd.f32 0.0, %v4631
    %v4633 = vpop.f32.mrb[0].mxu0
    %v4634 = vadd.f32 0.0, %v4633
    %4635 = vmatprep.mubr.bf16.mxu0 0
    %4636 = vmatmul.mubr.bf16.gmra.mrb[0].mxu0 %v4439
    %v4637 = vpop.f32.mrb[0].mxu0
    %v4638 = vadd.f32 0.0, %v4637
    %v4639 = vpop.f32.mrb[0].mxu0
    %v4640 = vadd.f32 0.0, %v4639
    %v4641 = vpop.f32.mrb[0].mxu0
    %v4642 = vadd.f32 0.0, %v4641
    %v4643 = vpop.f32.mrb[0].mxu0
    %v4644 = vadd.f32 0.0, %v4643
    %4645 = vmatprep.mubr.bf16.mxu0 0
    %4646 = vmatmul.mubr.bf16.gmra.mrb[0].mxu0 %v4442
    %v4647 = vpop.f32.mrb[0].mxu0
    %v4648 = vadd.f32 0.0, %v4647
    %v4649 = vpop.f32.mrb[0].mxu0
    %v4650 = vadd.f32 0.0, %v4649
    %v4651 = vpop.f32.mrb[0].mxu0
    %v4652 = vadd.f32 0.0, %v4651
    %v4653 = vpop.f32.mrb[0].mxu0
    %v4654 = vadd.f32 0.0, %v4653
    %4655 = vmatprep.mubr.bf16.mxu0 0
    %4656 = vmatmul.mubr.bf16.gmra.mrb[0].mxu0 %v4445
    %v4657 = vpop.f32.mrb[0].mxu0
    %v4658 = vadd.f32 0.0, %v4657
    %v4659 = vpop.f32.mrb[0].mxu0
    %v4660 = vadd.f32 0.0, %v4659
    %v4661 = vpop.f32.mrb[0].mxu0
    %v4662 = vadd.f32 0.0, %v4661
    %v4663 = vpop.f32.mrb[0].mxu0
    %v4664 = vadd.f32 0.0, %v4663
    %4665 = vmatprep.mubr.bf16.mxu0 0
    %4666 = vmatmul.mubr.bf16.gmra.mrb[0].mxu0 %v4448
    %v4667 = vpop.f32.mrb[0].mxu0
    %v4668 = vadd.f32 0.0, %v4667
    %v4669 = vpop.f32.mrb[0].mxu0
    %v4670 = vadd.f32 0.0, %v4669
    %v4671 = vpop.f32.mrb[0].mxu0
    %v4672 = vadd.f32 0.0, %v4671
    %v4673 = vpop.f32.mrb[0].mxu0
    %v4674 = vadd.f32 0.0, %v4673
    %4675 = vdwg.mxu0
    %v4676 = vlaneseq
    %v4677 = vshrl.u32 %v4676, 7
    %v4678 = vsub.s32 0, %v4677
    %v4679 = vrot.slane %v4152, %v4678
    %v4680 = vlaneseq
    %v4681 = vshrl.u32 %v4680, 7
    %v4682 = vsub.s32 0, %v4681
    %v4683 = vrot.slane %v4154, %v4682
    %v4684 = vlaneseq
    %v4685 = vshrl.u32 %v4684, 7
    %v4686 = vsub.s32 0, %v4685
    %v4687 = vrot.slane %v4316, %v4686
    %v4688 = vlaneseq
    %v4689 = vshrl.u32 %v4688, 7
    %v4690 = vsub.s32 0, %v4689
    %v4691 = vrot.slane %v4318, %v4690
    %v4692 = vadd.f32 %v4485, %v4679
    %v4693 = vadd.f32 %v4487, %v4683
    %v4694 = vadd.f32 %v4598, %v4687
    %v4695 = vadd.f32 %v4600, %v4691
    %v4696 = vadd.f32 %v4489, %v4679
    %v4697 = vadd.f32 %v4491, %v4683
    %v4698 = vadd.f32 %v4602, %v4687
    %v4699 = vadd.f32 %v4604, %v4691
    %v4700 = vadd.f32 %v4495, %v4679
    %v4701 = vadd.f32 %v4497, %v4683
    %v4702 = vadd.f32 %v4608, %v4687
    %v4703 = vadd.f32 %v4610, %v4691
    %v4704 = vadd.f32 %v4499, %v4679
    %v4705 = vadd.f32 %v4501, %v4683
    %v4706 = vadd.f32 %v4612, %v4687
    %v4707 = vadd.f32 %v4614, %v4691
    %v4708 = vadd.f32 %v4505, %v4679
    %v4709 = vadd.f32 %v4507, %v4683
    %v4710 = vadd.f32 %v4618, %v4687
    %v4711 = vadd.f32 %v4620, %v4691
    %v4712 = vadd.f32 %v4509, %v4679
    %v4713 = vadd.f32 %v4511, %v4683
    %v4714 = vadd.f32 %v4622, %v4687
    %v4715 = vadd.f32 %v4624, %v4691
    %v4716 = vadd.f32 %v4515, %v4679
    %v4717 = vadd.f32 %v4517, %v4683
    %v4718 = vadd.f32 %v4628, %v4687
    %v4719 = vadd.f32 %v4630, %v4691
    %v4720 = vadd.f32 %v4519, %v4679
    %v4721 = vadd.f32 %v4521, %v4683
    %v4722 = vadd.f32 %v4632, %v4687
    %v4723 = vadd.f32 %v4634, %v4691
    %v4724 = vlaneseq
    %v4725 = vshrl.u32 %v4724, 7
    %v4726 = vsub.s32 1, %v4725
    %v4727 = vrot.slane %v4152, %v4726
    %v4728 = vlaneseq
    %v4729 = vshrl.u32 %v4728, 7
    %v4730 = vsub.s32 1, %v4729
    %v4731 = vrot.slane %v4154, %v4730
    %v4732 = vlaneseq
    %v4733 = vshrl.u32 %v4732, 7
    %v4734 = vsub.s32 1, %v4733
    %v4735 = vrot.slane %v4316, %v4734
    %v4736 = vlaneseq
    %v4737 = vshrl.u32 %v4736, 7
    %v4738 = vsub.s32 1, %v4737
    %v4739 = vrot.slane %v4318, %v4738
    %v4740 = vadd.f32 %v4525, %v4727
    %v4741 = vadd.f32 %v4527, %v4731
    %v4742 = vadd.f32 %v4638, %v4735
    %v4743 = vadd.f32 %v4640, %v4739
    %v4744 = vadd.f32 %v4529, %v4727
    %v4745 = vadd.f32 %v4531, %v4731
    %v4746 = vadd.f32 %v4642, %v4735
    %v4747 = vadd.f32 %v4644, %v4739
    %v4748 = vadd.f32 %v4535, %v4727
    %v4749 = vadd.f32 %v4537, %v4731
    %v4750 = vadd.f32 %v4648, %v4735
    %v4751 = vadd.f32 %v4650, %v4739
    %v4752 = vadd.f32 %v4539, %v4727
    %v4753 = vadd.f32 %v4541, %v4731
    %v4754 = vadd.f32 %v4652, %v4735
    %v4755 = vadd.f32 %v4654, %v4739
    %v4756 = vadd.f32 %v4545, %v4727
    %v4757 = vadd.f32 %v4547, %v4731
    %v4758 = vadd.f32 %v4658, %v4735
    %v4759 = vadd.f32 %v4660, %v4739
    %v4760 = vadd.f32 %v4549, %v4727
    %v4761 = vadd.f32 %v4551, %v4731
    %v4762 = vadd.f32 %v4662, %v4735
    %v4763 = vadd.f32 %v4664, %v4739
    %v4764 = vadd.f32 %v4555, %v4727
    %v4765 = vadd.f32 %v4557, %v4731
    %v4766 = vadd.f32 %v4668, %v4735
    %v4767 = vadd.f32 %v4670, %v4739
    %v4768 = vadd.f32 %v4559, %v4727
    %v4769 = vadd.f32 %v4561, %v4731
    %v4770 = vadd.f32 %v4672, %v4735
    %v4771 = vadd.f32 %v4674, %v4739
    %v4772 = vmax.f32 %v4692, 0.0
    %v4773 = vmax.f32 %v4693, 0.0
    %v4774 = vmax.f32 %v4694, 0.0
    %v4775 = vmax.f32 %v4695, 0.0
    %v4776 = vmax.f32 %v4696, 0.0
    %v4777 = vmax.f32 %v4697, 0.0
    %v4778 = vmax.f32 %v4698, 0.0
    %v4779 = vmax.f32 %v4699, 0.0
    %v4780 = vmax.f32 %v4700, 0.0
    %v4781 = vmax.f32 %v4701, 0.0
    %v4782 = vmax.f32 %v4702, 0.0
    %v4783 = vmax.f32 %v4703, 0.0
    %v4784 = vmax.f32 %v4704, 0.0
    %v4785 = vmax.f32 %v4705, 0.0
    %v4786 = vmax.f32 %v4706, 0.0
    %v4787 = vmax.f32 %v4707, 0.0
    %v4788 = vmax.f32 %v4708, 0.0
    %v4789 = vmax.f32 %v4709, 0.0
    %v4790 = vmax.f32 %v4710, 0.0
    %v4791 = vmax.f32 %v4711, 0.0
    %v4792 = vmax.f32 %v4712, 0.0
    %v4793 = vmax.f32 %v4713, 0.0
    %v4794 = vmax.f32 %v4714, 0.0
    %v4795 = vmax.f32 %v4715, 0.0
    %v4796 = vmax.f32 %v4716, 0.0
    %v4797 = vmax.f32 %v4717, 0.0
    %v4798 = vmax.f32 %v4718, 0.0
    %v4799 = vmax.f32 %v4719, 0.0
    %v4800 = vmax.f32 %v4720, 0.0
    %v4801 = vmax.f32 %v4721, 0.0
    %v4802 = vmax.f32 %v4722, 0.0
    %v4803 = vmax.f32 %v4723, 0.0
    %v4804 = vmax.f32 %v4740, 0.0
    %v4805 = vmax.f32 %v4741, 0.0
    %v4806 = vmax.f32 %v4742, 0.0
    %v4807 = vmax.f32 %v4743, 0.0
    %v4808 = vmax.f32 %v4744, 0.0
    %v4809 = vmax.f32 %v4745, 0.0
    %v4810 = vmax.f32 %v4746, 0.0
    %v4811 = vmax.f32 %v4747, 0.0
    %v4812 = vmax.f32 %v4748, 0.0
    %v4813 = vmax.f32 %v4749, 0.0
    %v4814 = vmax.f32 %v4750, 0.0
    %v4815 = vmax.f32 %v4751, 0.0
    %v4816 = vmax.f32 %v4752, 0.0
    %v4817 = vmax.f32 %v4753, 0.0
    %v4818 = vmax.f32 %v4754, 0.0
    %v4819 = vmax.f32 %v4755, 0.0
    %v4820 = vmax.f32 %v4756, 0.0
    %v4821 = vmax.f32 %v4757, 0.0
    %v4822 = vmax.f32 %v4758, 0.0
    %v4823 = vmax.f32 %v4759, 0.0
    %v4824 = vmax.f32 %v4760, 0.0
    %v4825 = vmax.f32 %v4761, 0.0
    %v4826 = vmax.f32 %v4762, 0.0
    %v4827 = vmax.f32 %v4763, 0.0
    %v4828 = vmax.f32 %v4764, 0.0
    %v4829 = vmax.f32 %v4765, 0.0
    %v4830 = vmax.f32 %v4766, 0.0
    %v4831 = vmax.f32 %v4767, 0.0
    %v4832 = vmax.f32 %v4768, 0.0
    %v4833 = vmax.f32 %v4769, 0.0
    %v4834 = vmax.f32 %v4770, 0.0
    %v4835 = vmax.f32 %v4771, 0.0
    %v4836 = vpack.c.bf16 %v4776, %v4772
    %v4837 = vpack.c.bf16 %v4777, %v4773
    %v4838 = vpack.c.bf16 %v4778, %v4774
    %v4839 = vpack.c.bf16 %v4779, %v4775
    %v4840 = vpack.c.bf16 %v4784, %v4780
    %v4841 = vpack.c.bf16 %v4785, %v4781
    %v4842 = vpack.c.bf16 %v4786, %v4782
    %v4843 = vpack.c.bf16 %v4787, %v4783
    %v4844 = vpack.c.bf16 %v4792, %v4788
    %v4845 = vpack.c.bf16 %v4793, %v4789
    %v4846 = vpack.c.bf16 %v4794, %v4790
    %v4847 = vpack.c.bf16 %v4795, %v4791
    %v4848 = vpack.c.bf16 %v4800, %v4796
    %v4849 = vpack.c.bf16 %v4801, %v4797
    %v4850 = vpack.c.bf16 %v4802, %v4798
    %v4851 = vpack.c.bf16 %v4803, %v4799
    %v4852 = vpack.c.bf16 %v4808, %v4804
    %v4853 = vpack.c.bf16 %v4809, %v4805
    %v4854 = vpack.c.bf16 %v4810, %v4806
    %v4855 = vpack.c.bf16 %v4811, %v4807
    %v4856 = vpack.c.bf16 %v4816, %v4812
    %v4857 = vpack.c.bf16 %v4817, %v4813
    %v4858 = vpack.c.bf16 %v4818, %v4814
    %v4859 = vpack.c.bf16 %v4819, %v4815
    %v4860 = vpack.c.bf16 %v4824, %v4820
    %v4861 = vpack.c.bf16 %v4825, %v4821
    %v4862 = vpack.c.bf16 %v4826, %v4822
    %v4863 = vpack.c.bf16 %v4827, %v4823
    %v4864 = vpack.c.bf16 %v4832, %v4828
    %v4865 = vpack.c.bf16 %v4833, %v4829
    %v4866 = vpack.c.bf16 %v4834, %v4830
    %v4867 = vpack.c.bf16 %v4835, %v4831
    %v4868 = vld [vmem:[#allocation25] sm:$0xff]
    %v4869 = vld [vmem:[#allocation25 + $0x8] sm:$0xff]
    %v4870 = vld [vmem:[#allocation25 + $0x10] sm:$0xff]
    %v4871 = vld [vmem:[#allocation25 + $0x18] sm:$0xff]
    %v4872 = vld [vmem:[#allocation25 + $0x20] sm:$0xff]
    %v4873 = vld [vmem:[#allocation25 + $0x28] sm:$0xff]
    %v4874 = vld [vmem:[#allocation25 + $0x30] sm:$0xff]
    %v4875 = vld [vmem:[#allocation25 + $0x38] sm:$0xff]
    %v4876 = vld [vmem:[#allocation25 + $0x40] sm:$0xff]
    %v4877 = vld [vmem:[#allocation25 + $0x48] sm:$0xff]
    %v4878 = vld [vmem:[#allocation25 + $0x50] sm:$0xff]
    %v4879 = vld [vmem:[#allocation25 + $0x58] sm:$0xff]
    %v4880 = vld [vmem:[#allocation25 + $0x60] sm:$0xff]
    %v4881 = vld [vmem:[#allocation25 + $0x68] sm:$0xff]
    %v4882 = vld [vmem:[#allocation25 + $0x70] sm:$0xff]
    %v4883 = vld [vmem:[#allocation25 + $0x78] sm:$0xff]
    %v4884 = vld [vmem:[#allocation25 + $0x80] sm:$0xff]
    %v4885 = vld [vmem:[#allocation25 + $0x88] sm:$0xff]
    %v4886 = vld [vmem:[#allocation25 + $0x90] sm:$0xff]
    %v4887 = vld [vmem:[#allocation25 + $0x98] sm:$0xff]
    %v4888 = vld [vmem:[#allocation25 + $0xa0] sm:$0xff]
    %v4889 = vld [vmem:[#allocation25 + $0xa8] sm:$0xff]
    %v4890 = vld [vmem:[#allocation25 + $0xb0] sm:$0xff]
    %v4891 = vld [vmem:[#allocation25 + $0xb8] sm:$0xff]
    %v4892 = vld [vmem:[#allocation25 + $0xc0] sm:$0xff]
    %v4893 = vld [vmem:[#allocation25 + $0xc8] sm:$0xff]
    %v4894 = vld [vmem:[#allocation25 + $0xd0] sm:$0xff]
    %v4895 = vld [vmem:[#allocation25 + $0xd8] sm:$0xff]
    %v4896 = vld [vmem:[#allocation25 + $0xe0] sm:$0xff]
    %v4897 = vld [vmem:[#allocation25 + $0xe8] sm:$0xff]
    %v4898 = vld [vmem:[#allocation25 + $0xf0] sm:$0xff]
    %v4899 = vld [vmem:[#allocation25 + $0xf8] sm:$0xff]
    %v4900 = vld [vmem:[#allocation25 + $0x100] sm:$0xff]
    %v4901 = vld [vmem:[#allocation25 + $0x108] sm:$0xff]
    %v4902 = vld [vmem:[#allocation25 + $0x110] sm:$0xff]
    %v4903 = vld [vmem:[#allocation25 + $0x118] sm:$0xff]
    %v4904 = vld [vmem:[#allocation25 + $0x120] sm:$0xff]
    %v4905 = vld [vmem:[#allocation25 + $0x128] sm:$0xff]
    %v4906 = vld [vmem:[#allocation25 + $0x130] sm:$0xff]
    %v4907 = vld [vmem:[#allocation25 + $0x138] sm:$0xff]
    %v4908 = vld [vmem:[#allocation25 + $0x140] sm:$0xff]
    %v4909 = vld [vmem:[#allocation25 + $0x148] sm:$0xff]
    %v4910 = vld [vmem:[#allocation25 + $0x150] sm:$0xff]
    %v4911 = vld [vmem:[#allocation25 + $0x158] sm:$0xff]
    %v4912 = vld [vmem:[#allocation25 + $0x160] sm:$0xff]
    %v4913 = vld [vmem:[#allocation25 + $0x168] sm:$0xff]
    %v4914 = vld [vmem:[#allocation25 + $0x170] sm:$0xff]
    %v4915 = vld [vmem:[#allocation25 + $0x178] sm:$0xff]
    %v4916 = vld [vmem:[#allocation25 + $0x180] sm:$0xff]
    %v4917 = vld [vmem:[#allocation25 + $0x188] sm:$0xff]
    %v4918 = vld [vmem:[#allocation25 + $0x190] sm:$0xff]
    %v4919 = vld [vmem:[#allocation25 + $0x198] sm:$0xff]
    %v4920 = vld [vmem:[#allocation25 + $0x1a0] sm:$0xff]
    %v4921 = vld [vmem:[#allocation25 + $0x1a8] sm:$0xff]
    %v4922 = vld [vmem:[#allocation25 + $0x1b0] sm:$0xff]
    %v4923 = vld [vmem:[#allocation25 + $0x1b8] sm:$0xff]
    %v4924 = vld [vmem:[#allocation25 + $0x1c0] sm:$0xff]
    %v4925 = vld [vmem:[#allocation25 + $0x1c8] sm:$0xff]
    %v4926 = vld [vmem:[#allocation25 + $0x1d0] sm:$0xff]
    %v4927 = vld [vmem:[#allocation25 + $0x1d8] sm:$0xff]
    %v4928 = vld [vmem:[#allocation25 + $0x1e0] sm:$0xff]
    %v4929 = vld [vmem:[#allocation25 + $0x1e8] sm:$0xff]
    %v4930 = vld [vmem:[#allocation25 + $0x1f0] sm:$0xff]
    %v4931 = vld [vmem:[#allocation25 + $0x1f8] sm:$0xff]
    %v4932 = vld [vmem:[#allocation27] sm:$0x3]
    %v4934 = vlaneseq
    %v4935 = vshrl.u32 %v4934, 7
    %v4936 = vsub.s32 0, %v4935
    %v4937 = vrot.slane %v4932, %v4936
    %v4938 = vlaneseq
    %v4939 = vshrl.u32 %v4938, 7
    %v4940 = vsub.s32 1, %v4939
    %v4941 = vrot.slane %v4932, %v4940
    %v5008 = vunpack.c.l.b16 %v4868
    %v5009 = vunpack.c.h.b16 %v4868
    %v5010 = vunpack.c.l.b16 %v4869
    %v5011 = vunpack.c.h.b16 %v4869
    %v5012 = vunpack.c.l.b16 %v4870
    %v5013 = vunpack.c.h.b16 %v4870
    %v5014 = vunpack.c.l.b16 %v4871
    %v5015 = vunpack.c.h.b16 %v4871
    %v5016 = vunpack.c.l.b16 %v4872
    %v5017 = vunpack.c.h.b16 %v4872
    %v5018 = vunpack.c.l.b16 %v4873
    %v5019 = vunpack.c.h.b16 %v4873
    %v5020 = vunpack.c.l.b16 %v4874
    %v5021 = vunpack.c.h.b16 %v4874
    %v5022 = vunpack.c.l.b16 %v4875
    %v5023 = vunpack.c.h.b16 %v4875
    %v5024 = vunpack.c.l.b16 %v4876
    %v5025 = vunpack.c.h.b16 %v4876
    %v5026 = vunpack.c.l.b16 %v4877
    %v5027 = vunpack.c.h.b16 %v4877
    %v5028 = vunpack.c.l.b16 %v4878
    %v5029 = vunpack.c.h.b16 %v4878
    %v5030 = vunpack.c.l.b16 %v4879
    %v5031 = vunpack.c.h.b16 %v4879
    %v5032 = vunpack.c.l.b16 %v4880
    %v5033 = vunpack.c.h.b16 %v4880
    %v5034 = vunpack.c.l.b16 %v4881
    %v5035 = vunpack.c.h.b16 %v4881
    %v5036 = vunpack.c.l.b16 %v4882
    %v5037 = vunpack.c.h.b16 %v4882
    %v5038 = vunpack.c.l.b16 %v4883
    %v5039 = vunpack.c.h.b16 %v4883
    %v5040 = vunpack.c.l.b16 %v4884
    %v5041 = vunpack.c.h.b16 %v4884
    %v5042 = vunpack.c.l.b16 %v4885
    %v5043 = vunpack.c.h.b16 %v4885
    %v5044 = vunpack.c.l.b16 %v4886
    %v5045 = vunpack.c.h.b16 %v4886
    %v5046 = vunpack.c.l.b16 %v4887
    %v5047 = vunpack.c.h.b16 %v4887
    %v5048 = vunpack.c.l.b16 %v4888
    %v5049 = vunpack.c.h.b16 %v4888
    %v5050 = vunpack.c.l.b16 %v4889
    %v5051 = vunpack.c.h.b16 %v4889
    %v5052 = vunpack.c.l.b16 %v4890
    %v5053 = vunpack.c.h.b16 %v4890
    %v5054 = vunpack.c.l.b16 %v4891
    %v5055 = vunpack.c.h.b16 %v4891
    %v5056 = vunpack.c.l.b16 %v4892
    %v5057 = vunpack.c.h.b16 %v4892
    %v5058 = vunpack.c.l.b16 %v4893
    %v5059 = vunpack.c.h.b16 %v4893
    %v5060 = vunpack.c.l.b16 %v4894
    %v5061 = vunpack.c.h.b16 %v4894
    %v5062 = vunpack.c.l.b16 %v4895
    %v5063 = vunpack.c.h.b16 %v4895
    %v5064 = vunpack.c.l.b16 %v4896
    %v5065 = vunpack.c.h.b16 %v4896
    %v5066 = vunpack.c.l.b16 %v4897
    %v5067 = vunpack.c.h.b16 %v4897
    %v5068 = vunpack.c.l.b16 %v4898
    %v5069 = vunpack.c.h.b16 %v4898
    %v5070 = vunpack.c.l.b16 %v4899
    %v5071 = vunpack.c.h.b16 %v4899
    %v5072 = vunpack.c.l.b16 %v4900
    %v5073 = vunpack.c.h.b16 %v4900
    %v5074 = vunpack.c.l.b16 %v4901
    %v5075 = vunpack.c.h.b16 %v4901
    %v5076 = vunpack.c.l.b16 %v4902
    %v5077 = vunpack.c.h.b16 %v4902
    %v5078 = vunpack.c.l.b16 %v4903
    %v5079 = vunpack.c.h.b16 %v4903
    %v5080 = vunpack.c.l.b16 %v4904
    %v5081 = vunpack.c.h.b16 %v4904
    %v5082 = vunpack.c.l.b16 %v4905
    %v5083 = vunpack.c.h.b16 %v4905
    %v5084 = vunpack.c.l.b16 %v4906
    %v5085 = vunpack.c.h.b16 %v4906
    %v5086 = vunpack.c.l.b16 %v4907
    %v5087 = vunpack.c.h.b16 %v4907
    %v5088 = vunpack.c.l.b16 %v4908
    %v5089 = vunpack.c.h.b16 %v4908
    %v5090 = vunpack.c.l.b16 %v4909
    %v5091 = vunpack.c.h.b16 %v4909
    %v5092 = vunpack.c.l.b16 %v4910
    %v5093 = vunpack.c.h.b16 %v4910
    %v5094 = vunpack.c.l.b16 %v4911
    %v5095 = vunpack.c.h.b16 %v4911
    %v5096 = vunpack.c.l.b16 %v4912
    %v5097 = vunpack.c.h.b16 %v4912
    %v5098 = vunpack.c.l.b16 %v4913
    %v5099 = vunpack.c.h.b16 %v4913
    %v5100 = vunpack.c.l.b16 %v4914
    %v5101 = vunpack.c.h.b16 %v4914
    %v5102 = vunpack.c.l.b16 %v4915
    %v5103 = vunpack.c.h.b16 %v4915
    %v5104 = vunpack.c.l.b16 %v4916
    %v5105 = vunpack.c.h.b16 %v4916
    %v5106 = vunpack.c.l.b16 %v4917
    %v5107 = vunpack.c.h.b16 %v4917
    %v5108 = vunpack.c.l.b16 %v4918
    %v5109 = vunpack.c.h.b16 %v4918
    %v5110 = vunpack.c.l.b16 %v4919
    %v5111 = vunpack.c.h.b16 %v4919
    %v5112 = vunpack.c.l.b16 %v4920
    %v5113 = vunpack.c.h.b16 %v4920
    %v5114 = vunpack.c.l.b16 %v4921
    %v5115 = vunpack.c.h.b16 %v4921
    %v5116 = vunpack.c.l.b16 %v4922
    %v5117 = vunpack.c.h.b16 %v4922
    %v5118 = vunpack.c.l.b16 %v4923
    %v5119 = vunpack.c.h.b16 %v4923
    %v5120 = vunpack.c.l.b16 %v4924
    %v5121 = vunpack.c.h.b16 %v4924
    %v5122 = vunpack.c.l.b16 %v4925
    %v5123 = vunpack.c.h.b16 %v4925
    %v5124 = vunpack.c.l.b16 %v4926
    %v5125 = vunpack.c.h.b16 %v4926
    %v5126 = vunpack.c.l.b16 %v4927
    %v5127 = vunpack.c.h.b16 %v4927
    %v5128 = vunpack.c.l.b16 %v4928
    %v5129 = vunpack.c.h.b16 %v4928
    %v5130 = vunpack.c.l.b16 %v4929
    %v5131 = vunpack.c.h.b16 %v4929
    %v5132 = vunpack.c.l.b16 %v4930
    %v5133 = vunpack.c.h.b16 %v4930
    %v5134 = vunpack.c.l.b16 %v4931
    %v5135 = vunpack.c.h.b16 %v4931
    %v5136 = vpack.c.b16 %v5010, %v5008
    %v5137 = vpack.c.b16 %v5011, %v5009
    %v5138 = vpack.c.b16 %v5014, %v5012
    %v5139 = vpack.c.b16 %v5015, %v5013
    %v5140 = vpack.c.b16 %v5018, %v5016
    %v5141 = vpack.c.b16 %v5019, %v5017
    %v5142 = vpack.c.b16 %v5022, %v5020
    %v5143 = vpack.c.b16 %v5023, %v5021
    %v5144 = vpack.c.b16 %v5026, %v5024
    %v5145 = vpack.c.b16 %v5027, %v5025
    %v5146 = vpack.c.b16 %v5030, %v5028
    %v5147 = vpack.c.b16 %v5031, %v5029
    %v5148 = vpack.c.b16 %v5034, %v5032
    %v5149 = vpack.c.b16 %v5035, %v5033
    %v5150 = vpack.c.b16 %v5038, %v5036
    %v5151 = vpack.c.b16 %v5039, %v5037
    %v5152 = vpack.c.b16 %v5042, %v5040
    %v5153 = vpack.c.b16 %v5043, %v5041
    %v5154 = vpack.c.b16 %v5046, %v5044
    %v5155 = vpack.c.b16 %v5047, %v5045
    %v5156 = vpack.c.b16 %v5050, %v5048
    %v5157 = vpack.c.b16 %v5051, %v5049
    %v5158 = vpack.c.b16 %v5054, %v5052
    %v5159 = vpack.c.b16 %v5055, %v5053
    %v5160 = vpack.c.b16 %v5058, %v5056
    %v5161 = vpack.c.b16 %v5059, %v5057
    %v5162 = vpack.c.b16 %v5062, %v5060
    %v5163 = vpack.c.b16 %v5063, %v5061
    %v5164 = vpack.c.b16 %v5066, %v5064
    %v5165 = vpack.c.b16 %v5067, %v5065
    %v5166 = vpack.c.b16 %v5070, %v5068
    %v5167 = vpack.c.b16 %v5071, %v5069
    %v5168 = vpack.c.b16 %v5074, %v5072
    %v5169 = vpack.c.b16 %v5075, %v5073
    %v5170 = vpack.c.b16 %v5078, %v5076
    %v5171 = vpack.c.b16 %v5079, %v5077
    %v5172 = vpack.c.b16 %v5082, %v5080
    %v5173 = vpack.c.b16 %v5083, %v5081
    %v5174 = vpack.c.b16 %v5086, %v5084
    %v5175 = vpack.c.b16 %v5087, %v5085
    %v5176 = vpack.c.b16 %v5090, %v5088
    %v5177 = vpack.c.b16 %v5091, %v5089
    %v5178 = vpack.c.b16 %v5094, %v5092
    %v5179 = vpack.c.b16 %v5095, %v5093
    %v5180 = vpack.c.b16 %v5098, %v5096
    %v5181 = vpack.c.b16 %v5099, %v5097
    %v5182 = vpack.c.b16 %v5102, %v5100
    %v5183 = vpack.c.b16 %v5103, %v5101
    %v5184 = vpack.c.b16 %v5106, %v5104
    %v5185 = vpack.c.b16 %v5107, %v5105
    %v5186 = vpack.c.b16 %v5110, %v5108
    %v5187 = vpack.c.b16 %v5111, %v5109
    %v5188 = vpack.c.b16 %v5114, %v5112
    %v5189 = vpack.c.b16 %v5115, %v5113
    %v5190 = vpack.c.b16 %v5118, %v5116
    %v5191 = vpack.c.b16 %v5119, %v5117
    %v5192 = vpack.c.b16 %v5122, %v5120
    %v5193 = vpack.c.b16 %v5123, %v5121
    %v5194 = vpack.c.b16 %v5126, %v5124
    %v5195 = vpack.c.b16 %v5127, %v5125
    %v5196 = vpack.c.b16 %v5130, %v5128
    %v5197 = vpack.c.b16 %v5131, %v5129
    %v5198 = vpack.c.b16 %v5134, %v5132
    %v5199 = vpack.c.b16 %v5135, %v5133
    %5264 = vmatprep.subr.bf16.mxu0 %v5137
    %5265 = vmatpush1.bf16.msra.mxu0 %v5136
    %5266 = vmatprep.subr.bf16.mxu0 %v5139
    %5267 = vmatpush1.bf16.msra.mxu0 %v5138
    %5268 = vmatprep.subr.bf16.mxu0 %v5141
    %5269 = vmatpush1.bf16.msra.mxu0 %v5140
    %5270 = vmatprep.subr.bf16.mxu0 %v5143
    %5271 = vmatpush1.bf16.msra.mxu0 %v5142
    %5272 = vmatprep.subr.bf16.mxu0 %v5145
    %5273 = vmatpush1.bf16.msra.mxu0 %v5144
    %5274 = vmatprep.subr.bf16.mxu0 %v5147
    %5275 = vmatpush1.bf16.msra.mxu0 %v5146
    %5276 = vmatprep.subr.bf16.mxu0 %v5149
    %5277 = vmatpush1.bf16.msra.mxu0 %v5148
    %5278 = vmatprep.subr.bf16.mxu0 %v5151
    %5279 = vmatpush1.bf16.msra.mxu0 %v5150
    %5280 = vmatprep.subr.bf16.mxu0 %v5153
    %5281 = vmatpush1.bf16.msra.mxu0 %v5152
    %5282 = vmatprep.subr.bf16.mxu0 %v5155
    %5283 = vmatpush1.bf16.msra.mxu0 %v5154
    %5284 = vmatprep.subr.bf16.mxu0 %v5157
    %5285 = vmatpush1.bf16.msra.mxu0 %v5156
    %5286 = vmatprep.subr.bf16.mxu0 %v5159
    %5287 = vmatpush1.bf16.msra.mxu0 %v5158
    %5288 = vmatprep.subr.bf16.mxu0 %v5161
    %5289 = vmatpush1.bf16.msra.mxu0 %v5160
    %5290 = vmatprep.subr.bf16.mxu0 %v5163
    %5291 = vmatpush1.bf16.msra.mxu0 %v5162
    %5292 = vmatprep.subr.bf16.mxu0 %v5165
    %5293 = vmatpush1.bf16.msra.mxu0 %v5164
    %5294 = vmatprep.subr.bf16.mxu0 %v5167
    %5295 = vmatpush1.bf16.msra.mxu0 %v5166
    %5296 = vmatprep.mubr.bf16.mxu0 %v4837
    %5297 = vmatmul.mubr.bf16.gmra.mrb[0].mxu0 %v4836
    %v5298 = vpop.f32.mrb[0].mxu0
    %v5299 = vadd.f32 %v4937, %v5298
    %v5300 = vpop.f32.mrb[0].mxu0
    %v5301 = vadd.f32 %v4941, %v5300
    %v5302 = vpop.f32.mrb[0].mxu0
    %v5303 = vadd.f32 %v4937, %v5302
    %v5304 = vpop.f32.mrb[0].mxu0
    %v5305 = vadd.f32 %v4941, %v5304
    %5306 = vmatprep.mubr.bf16.mxu0 %v4841
    %5307 = vmatmul.mubr.bf16.gmra.mrb[0].mxu0 %v4840
    %v5308 = vpop.f32.mrb[0].mxu0
    %v5309 = vadd.f32 %v4937, %v5308
    %v5310 = vpop.f32.mrb[0].mxu0
    %v5311 = vadd.f32 %v4941, %v5310
    %v5312 = vpop.f32.mrb[0].mxu0
    %v5313 = vadd.f32 %v4937, %v5312
    %v5314 = vpop.f32.mrb[0].mxu0
    %v5315 = vadd.f32 %v4941, %v5314
    %5316 = vmatprep.mubr.bf16.mxu0 %v4845
    %5317 = vmatmul.mubr.bf16.gmra.mrb[0].mxu0 %v4844
    %v5318 = vpop.f32.mrb[0].mxu0
    %v5319 = vadd.f32 %v4937, %v5318
    %v5320 = vpop.f32.mrb[0].mxu0
    %v5321 = vadd.f32 %v4941, %v5320
    %v5322 = vpop.f32.mrb[0].mxu0
    %v5323 = vadd.f32 %v4937, %v5322
    %v5324 = vpop.f32.mrb[0].mxu0
    %v5325 = vadd.f32 %v4941, %v5324
    %5326 = vmatprep.mubr.bf16.mxu0 %v4849
    %5327 = vmatmul.mubr.bf16.gmra.mrb[0].mxu0 %v4848
    %v5328 = vpop.f32.mrb[0].mxu0
    %v5329 = vadd.f32 %v4937, %v5328
    %v5330 = vpop.f32.mrb[0].mxu0
    %v5331 = vadd.f32 %v4941, %v5330
    %v5332 = vpop.f32.mrb[0].mxu0
    %v5333 = vadd.f32 %v4937, %v5332
    %v5334 = vpop.f32.mrb[0].mxu0
    %v5335 = vadd.f32 %v4941, %v5334
    %5336 = vmatprep.mubr.bf16.mxu0 %v4853
    %5337 = vmatmul.mubr.bf16.gmra.mrb[0].mxu0 %v4852
    %v5338 = vpop.f32.mrb[0].mxu0
    %v5339 = vadd.f32 %v4937, %v5338
    %v5340 = vpop.f32.mrb[0].mxu0
    %v5341 = vadd.f32 %v4941, %v5340
    %v5342 = vpop.f32.mrb[0].mxu0
    %v5343 = vadd.f32 %v4937, %v5342
    %v5344 = vpop.f32.mrb[0].mxu0
    %v5345 = vadd.f32 %v4941, %v5344
    %5346 = vmatprep.mubr.bf16.mxu0 %v4857
    %5347 = vmatmul.mubr.bf16.gmra.mrb[0].mxu0 %v4856
    %v5348 = vpop.f32.mrb[0].mxu0
    %v5349 = vadd.f32 %v4937, %v5348
    %v5350 = vpop.f32.mrb[0].mxu0
    %v5351 = vadd.f32 %v4941, %v5350
    %v5352 = vpop.f32.mrb[0].mxu0
    %v5353 = vadd.f32 %v4937, %v5352
    %v5354 = vpop.f32.mrb[0].mxu0
    %v5355 = vadd.f32 %v4941, %v5354
    %5356 = vmatprep.mubr.bf16.mxu0 %v4861
    %5357 = vmatmul.mubr.bf16.gmra.mrb[0].mxu0 %v4860
    %v5358 = vpop.f32.mrb[0].mxu0
    %v5359 = vadd.f32 %v4937, %v5358
    %v5360 = vpop.f32.mrb[0].mxu0
    %v5361 = vadd.f32 %v4941, %v5360
    %v5362 = vpop.f32.mrb[0].mxu0
    %v5363 = vadd.f32 %v4937, %v5362
    %v5364 = vpop.f32.mrb[0].mxu0
    %v5365 = vadd.f32 %v4941, %v5364
    %5366 = vmatprep.mubr.bf16.mxu0 %v4865
    %5367 = vmatmul.mubr.bf16.gmra.mrb[0].mxu0 %v4864
    %v5368 = vpop.f32.mrb[0].mxu0
    %v5369 = vadd.f32 %v4937, %v5368
    %v5370 = vpop.f32.mrb[0].mxu0
    %v5371 = vadd.f32 %v4941, %v5370
    %v5372 = vpop.f32.mrb[0].mxu0
    %v5373 = vadd.f32 %v4937, %v5372
    %v5374 = vpop.f32.mrb[0].mxu0
    %v5375 = vadd.f32 %v4941, %v5374
    %5376 = vdwg.mxu0
    %5377 = vmatprep.subr.bf16.mxu0 %v5169
    %5378 = vmatpush1.bf16.msra.mxu0 %v5168
    %5379 = vmatprep.subr.bf16.mxu0 %v5171
    %5380 = vmatpush1.bf16.msra.mxu0 %v5170
    %5381 = vmatprep.subr.bf16.mxu0 %v5173
    %5382 = vmatpush1.bf16.msra.mxu0 %v5172
    %5383 = vmatprep.subr.bf16.mxu0 %v5175
    %5384 = vmatpush1.bf16.msra.mxu0 %v5174
    %5385 = vmatprep.subr.bf16.mxu0 %v5177
    %5386 = vmatpush1.bf16.msra.mxu0 %v5176
    %5387 = vmatprep.subr.bf16.mxu0 %v5179
    %5388 = vmatpush1.bf16.msra.mxu0 %v5178
    %5389 = vmatprep.subr.bf16.mxu0 %v5181
    %5390 = vmatpush1.bf16.msra.mxu0 %v5180
    %5391 = vmatprep.subr.bf16.mxu0 %v5183
    %5392 = vmatpush1.bf16.msra.mxu0 %v5182
    %5393 = vmatprep.subr.bf16.mxu0 %v5185
    %5394 = vmatpush1.bf16.msra.mxu0 %v5184
    %5395 = vmatprep.subr.bf16.mxu0 %v5187
    %5396 = vmatpush1.bf16.msra.mxu0 %v5186
    %5397 = vmatprep.subr.bf16.mxu0 %v5189
    %5398 = vmatpush1.bf16.msra.mxu0 %v5188
    %5399 = vmatprep.subr.bf16.mxu0 %v5191
    %5400 = vmatpush1.bf16.msra.mxu0 %v5190
    %5401 = vmatprep.subr.bf16.mxu0 %v5193
    %5402 = vmatpush1.bf16.msra.mxu0 %v5192
    %5403 = vmatprep.subr.bf16.mxu0 %v5195
    %5404 = vmatpush1.bf16.msra.mxu0 %v5194
    %5405 = vmatprep.subr.bf16.mxu0 %v5197
    %5406 = vmatpush1.bf16.msra.mxu0 %v5196
    %5407 = vmatprep.subr.bf16.mxu0 %v5199
    %5408 = vmatpush1.bf16.msra.mxu0 %v5198
    %5409 = vmatprep.mubr.bf16.mxu0 %v4839
    %5410 = vmatmul.mubr.bf16.gmra.mrb[0].mxu0 %v4838
    %v5411 = vpop.f32.mrb[0].mxu0
    %v5412 = vadd.f32 %v5299, %v5411
    %v5413 = vpop.f32.mrb[0].mxu0
    %v5414 = vadd.f32 %v5301, %v5413
    %v5415 = vpop.f32.mrb[0].mxu0
    %v5416 = vadd.f32 %v5303, %v5415
    %v5417 = vpop.f32.mrb[0].mxu0
    %v5418 = vadd.f32 %v5305, %v5417
    %5419 = vmatprep.mubr.bf16.mxu0 %v4843
    %5420 = vmatmul.mubr.bf16.gmra.mrb[0].mxu0 %v4842
    %v5421 = vpop.f32.mrb[0].mxu0
    %v5422 = vadd.f32 %v5309, %v5421
    %v5423 = vpop.f32.mrb[0].mxu0
    %v5424 = vadd.f32 %v5311, %v5423
    %v5425 = vpop.f32.mrb[0].mxu0
    %v5426 = vadd.f32 %v5313, %v5425
    %v5427 = vpop.f32.mrb[0].mxu0
    %v5428 = vadd.f32 %v5315, %v5427
    %5429 = vmatprep.mubr.bf16.mxu0 %v4847
    %5430 = vmatmul.mubr.bf16.gmra.mrb[0].mxu0 %v4846
    %v5431 = vpop.f32.mrb[0].mxu0
    %v5432 = vadd.f32 %v5319, %v5431
    %v5433 = vpop.f32.mrb[0].mxu0
    %v5434 = vadd.f32 %v5321, %v5433
    %v5435 = vpop.f32.mrb[0].mxu0
    %v5436 = vadd.f32 %v5323, %v5435
    %v5437 = vpop.f32.mrb[0].mxu0
    %v5438 = vadd.f32 %v5325, %v5437
    %5439 = vmatprep.mubr.bf16.mxu0 %v4851
    %5440 = vmatmul.mubr.bf16.gmra.mrb[0].mxu0 %v4850
    %v5441 = vpop.f32.mrb[0].mxu0
    %v5442 = vadd.f32 %v5329, %v5441
    %v5443 = vpop.f32.mrb[0].mxu0
    %v5444 = vadd.f32 %v5331, %v5443
    %v5445 = vpop.f32.mrb[0].mxu0
    %v5446 = vadd.f32 %v5333, %v5445
    %v5447 = vpop.f32.mrb[0].mxu0
    %v5448 = vadd.f32 %v5335, %v5447
    %5449 = vmatprep.mubr.bf16.mxu0 %v4855
    %5450 = vmatmul.mubr.bf16.gmra.mrb[0].mxu0 %v4854
    %v5451 = vpop.f32.mrb[0].mxu0
    %v5452 = vadd.f32 %v5339, %v5451
    %v5453 = vpop.f32.mrb[0].mxu0
    %v5454 = vadd.f32 %v5341, %v5453
    %v5455 = vpop.f32.mrb[0].mxu0
    %v5456 = vadd.f32 %v5343, %v5455
    %v5457 = vpop.f32.mrb[0].mxu0
    %v5458 = vadd.f32 %v5345, %v5457
    %5459 = vmatprep.mubr.bf16.mxu0 %v4859
    %5460 = vmatmul.mubr.bf16.gmra.mrb[0].mxu0 %v4858
    %v5461 = vpop.f32.mrb[0].mxu0
    %v5462 = vadd.f32 %v5349, %v5461
    %v5463 = vpop.f32.mrb[0].mxu0
    %v5464 = vadd.f32 %v5351, %v5463
    %v5465 = vpop.f32.mrb[0].mxu0
    %v5466 = vadd.f32 %v5353, %v5465
    %v5467 = vpop.f32.mrb[0].mxu0
    %v5468 = vadd.f32 %v5355, %v5467
    %5469 = vmatprep.mubr.bf16.mxu0 %v4863
    %5470 = vmatmul.mubr.bf16.gmra.mrb[0].mxu0 %v4862
    %v5471 = vpop.f32.mrb[0].mxu0
    %v5472 = vadd.f32 %v5359, %v5471
    %v5473 = vpop.f32.mrb[0].mxu0
    %v5474 = vadd.f32 %v5361, %v5473
    %v5475 = vpop.f32.mrb[0].mxu0
    %v5476 = vadd.f32 %v5363, %v5475
    %v5477 = vpop.f32.mrb[0].mxu0
    %v5478 = vadd.f32 %v5365, %v5477
    %5479 = vmatprep.mubr.bf16.mxu0 %v4867
    %5480 = vmatmul.mubr.bf16.gmra.mrb[0].mxu0 %v4866
    %v5481 = vpop.f32.mrb[0].mxu0
    %v5482 = vadd.f32 %v5369, %v5481
    %v5483 = vpop.f32.mrb[0].mxu0
    %v5484 = vadd.f32 %v5371, %v5483
    %v5485 = vpop.f32.mrb[0].mxu0
    %v5486 = vadd.f32 %v5373, %v5485
    %v5487 = vpop.f32.mrb[0].mxu0
    %v5488 = vadd.f32 %v5375, %v5487
    %5489 = vdwg.mxu0
    %v5490 = vmax.f32 %v5412, 0.0
    %v5491 = vmax.f32 %v5414, 0.0
    %v5492 = vmax.f32 %v5416, 0.0
    %v5493 = vmax.f32 %v5418, 0.0
    %v5494 = vmax.f32 %v5422, 0.0
    %v5495 = vmax.f32 %v5424, 0.0
    %v5496 = vmax.f32 %v5426, 0.0
    %v5497 = vmax.f32 %v5428, 0.0
    %v5498 = vmax.f32 %v5432, 0.0
    %v5499 = vmax.f32 %v5434, 0.0
    %v5500 = vmax.f32 %v5436, 0.0
    %v5501 = vmax.f32 %v5438, 0.0
    %v5502 = vmax.f32 %v5442, 0.0
    %v5503 = vmax.f32 %v5444, 0.0
    %v5504 = vmax.f32 %v5446, 0.0
    %v5505 = vmax.f32 %v5448, 0.0
    %v5506 = vmax.f32 %v5452, 0.0
    %v5507 = vmax.f32 %v5454, 0.0
    %v5508 = vmax.f32 %v5456, 0.0
    %v5509 = vmax.f32 %v5458, 0.0
    %v5510 = vmax.f32 %v5462, 0.0
    %v5511 = vmax.f32 %v5464, 0.0
    %v5512 = vmax.f32 %v5466, 0.0
    %v5513 = vmax.f32 %v5468, 0.0
    %v5514 = vmax.f32 %v5472, 0.0
    %v5515 = vmax.f32 %v5474, 0.0
    %v5516 = vmax.f32 %v5476, 0.0
    %v5517 = vmax.f32 %v5478, 0.0
    %v5518 = vmax.f32 %v5482, 0.0
    %v5519 = vmax.f32 %v5484, 0.0
    %v5520 = vmax.f32 %v5486, 0.0
    %v5521 = vmax.f32 %v5488, 0.0
    %v5522 = vpack.c.bf16 %v5492, %v5490
    %v5523 = vpack.c.bf16 %v5493, %v5491
    %v5524 = vpack.c.bf16 %v5496, %v5494
    %v5525 = vpack.c.bf16 %v5497, %v5495
    %v5526 = vpack.c.bf16 %v5500, %v5498
    %v5527 = vpack.c.bf16 %v5501, %v5499
    %v5528 = vpack.c.bf16 %v5504, %v5502
    %v5529 = vpack.c.bf16 %v5505, %v5503
    %v5530 = vpack.c.bf16 %v5508, %v5506
    %v5531 = vpack.c.bf16 %v5509, %v5507
    %v5532 = vpack.c.bf16 %v5512, %v5510
    %v5533 = vpack.c.bf16 %v5513, %v5511
    %v5534 = vpack.c.bf16 %v5516, %v5514
    %v5535 = vpack.c.bf16 %v5517, %v5515
    %v5536 = vpack.c.bf16 %v5520, %v5518
    %v5537 = vpack.c.bf16 %v5521, %v5519
    %v5538 = vld [vmem:[%s16] sm:$0xf]
    %v5539 = vld [vmem:[%s16 + $0x4] sm:$0xf]
    %v5540 = vld [vmem:[%s16 + $0x8] sm:$0xf]
    %v5541 = vld [vmem:[%s16 + $0xc] sm:$0xf]
    %v5542 = vld [vmem:[%s16 + $0x10] sm:$0xf]
    %v5543 = vld [vmem:[%s16 + $0x14] sm:$0xf]
    %v5544 = vld [vmem:[%s16 + $0x18] sm:$0xf]
    %v5545 = vld [vmem:[%s16 + $0x1c] sm:$0xf]
    %v5546 = vld [vmem:[%s16 + $0x20] sm:$0xf]
    %v5547 = vld [vmem:[%s16 + $0x24] sm:$0xf]
    %v5548 = vld [vmem:[%s16 + $0x28] sm:$0xf]
    %v5549 = vld [vmem:[%s16 + $0x2c] sm:$0xf]
    %v5550 = vld [vmem:[%s16 + $0x30] sm:$0xf]
    %v5551 = vld [vmem:[%s16 + $0x34] sm:$0xf]
    %v5552 = vld [vmem:[%s16 + $0x38] sm:$0xf]
    %v5553 = vld [vmem:[%s16 + $0x3c] sm:$0xf]
    %v5554 = vld [vmem:[%s16 + $0x40] sm:$0xf]
    %v5555 = vld [vmem:[%s16 + $0x44] sm:$0xf]
    %v5556 = vld [vmem:[%s16 + $0x48] sm:$0xf]
    %v5557 = vld [vmem:[%s16 + $0x4c] sm:$0xf]
    %v5558 = vld [vmem:[%s16 + $0x50] sm:$0xf]
    %v5559 = vld [vmem:[%s16 + $0x54] sm:$0xf]
    %v5560 = vld [vmem:[%s16 + $0x58] sm:$0xf]
    %v5561 = vld [vmem:[%s16 + $0x5c] sm:$0xf]
    %v5562 = vld [vmem:[%s16 + $0x60] sm:$0xf]
    %v5563 = vld [vmem:[%s16 + $0x64] sm:$0xf]
    %v5564 = vld [vmem:[%s16 + $0x68] sm:$0xf]
    %v5565 = vld [vmem:[%s16 + $0x6c] sm:$0xf]
    %v5566 = vld [vmem:[%s16 + $0x70] sm:$0xf]
    %v5567 = vld [vmem:[%s16 + $0x74] sm:$0xf]
    %v5568 = vld [vmem:[%s16 + $0x78] sm:$0xf]
    %v5569 = vld [vmem:[%s16 + $0x7c] sm:$0xf]
    %v5570 = vld [vmem:[%s17] sm:$0x1]
    %v5572 = vlaneseq
    %v5573 = vshrl.u32 %v5572, 7
    %v5574 = vsub.s32 0, %v5573
    %v5575 = vrot.slane %v5570, %v5574
    %v5609 = vunpack.c.l.b16 %v5538
    %v5610 = vunpack.c.l.b16 %v5539
    %v5611 = vunpack.c.l.b16 %v5540
    %v5612 = vunpack.c.l.b16 %v5541
    %v5613 = vunpack.c.l.b16 %v5542
    %v5614 = vunpack.c.l.b16 %v5543
    %v5615 = vunpack.c.l.b16 %v5544
    %v5616 = vunpack.c.l.b16 %v5545
    %v5617 = vunpack.c.l.b16 %v5546
    %v5618 = vunpack.c.l.b16 %v5547
    %v5619 = vunpack.c.l.b16 %v5548
    %v5620 = vunpack.c.l.b16 %v5549
    %v5621 = vunpack.c.l.b16 %v5550
    %v5622 = vunpack.c.l.b16 %v5551
    %v5623 = vunpack.c.l.b16 %v5552
    %v5624 = vunpack.c.l.b16 %v5553
    %v5625 = vunpack.c.l.b16 %v5554
    %v5626 = vunpack.c.l.b16 %v5555
    %v5627 = vunpack.c.l.b16 %v5556
    %v5628 = vunpack.c.l.b16 %v5557
    %v5629 = vunpack.c.l.b16 %v5558
    %v5630 = vunpack.c.l.b16 %v5559
    %v5631 = vunpack.c.l.b16 %v5560
    %v5632 = vunpack.c.l.b16 %v5561
    %v5633 = vunpack.c.l.b16 %v5562
    %v5634 = vunpack.c.l.b16 %v5563
    %v5635 = vunpack.c.l.b16 %v5564
    %v5636 = vunpack.c.l.b16 %v5565
    %v5637 = vunpack.c.l.b16 %v5566
    %v5638 = vunpack.c.l.b16 %v5567
    %v5639 = vunpack.c.l.b16 %v5568
    %v5640 = vunpack.c.l.b16 %v5569
    %v5641 = vpack.c.b16 %v5610, %v5609
    %v5642 = vpack.c.b16 %v5612, %v5611
    %v5643 = vpack.c.b16 %v5614, %v5613
    %v5644 = vpack.c.b16 %v5616, %v5615
    %v5645 = vpack.c.b16 %v5618, %v5617
    %v5646 = vpack.c.b16 %v5620, %v5619
    %v5647 = vpack.c.b16 %v5622, %v5621
    %v5648 = vpack.c.b16 %v5624, %v5623
    %v5649 = vpack.c.b16 %v5626, %v5625
    %v5650 = vpack.c.b16 %v5628, %v5627
    %v5651 = vpack.c.b16 %v5630, %v5629
    %v5652 = vpack.c.b16 %v5632, %v5631
    %v5653 = vpack.c.b16 %v5634, %v5633
    %v5654 = vpack.c.b16 %v5636, %v5635
    %v5655 = vpack.c.b16 %v5638, %v5637
    %v5656 = vpack.c.b16 %v5640, %v5639
    %5673 = vmatprep.subr.bf16.mxu0 0
    %5674 = vmatpush1.bf16.msra.mxu0 %v5641
    %5675 = vmatprep.subr.bf16.mxu0 0
    %5676 = vmatpush1.bf16.msra.mxu0 %v5642
    %5677 = vmatprep.subr.bf16.mxu0 0
    %5678 = vmatpush1.bf16.msra.mxu0 %v5643
    %5679 = vmatprep.subr.bf16.mxu0 0
    %5680 = vmatpush1.bf16.msra.mxu0 %v5644
    %5681 = vmatprep.subr.bf16.mxu0 0
    %5682 = vmatpush1.bf16.msra.mxu0 %v5645
    %5683 = vmatprep.subr.bf16.mxu0 0
    %5684 = vmatpush1.bf16.msra.mxu0 %v5646
    %5685 = vmatprep.subr.bf16.mxu0 0
    %5686 = vmatpush1.bf16.msra.mxu0 %v5647
    %5687 = vmatprep.subr.bf16.mxu0 0
    %5688 = vmatpush1.bf16.msra.mxu0 %v5648
    %5689 = vmatprep.subr.bf16.mxu0 0
    %5690 = vmatpush1.bf16.msra.mxu0 %v5649
    %5691 = vmatprep.subr.bf16.mxu0 0
    %5692 = vmatpush1.bf16.msra.mxu0 %v5650
    %5693 = vmatprep.subr.bf16.mxu0 0
    %5694 = vmatpush1.bf16.msra.mxu0 %v5651
    %5695 = vmatprep.subr.bf16.mxu0 0
    %5696 = vmatpush1.bf16.msra.mxu0 %v5652
    %5697 = vmatprep.subr.bf16.mxu0 0
    %5698 = vmatpush1.bf16.msra.mxu0 %v5653
    %5699 = vmatprep.subr.bf16.mxu0 0
    %5700 = vmatpush1.bf16.msra.mxu0 %v5654
    %5701 = vmatprep.subr.bf16.mxu0 0
    %5702 = vmatpush1.bf16.msra.mxu0 %v5655
    %5703 = vmatprep.subr.bf16.mxu0 0
    %5704 = vmatpush1.bf16.msra.mxu0 %v5656
    %5705 = vmatprep.mubr.bf16.mxu0 %v5523
    %5706 = vmatmul.mubr.bf16.gmra.mrb[0].mxu0 %v5522
    %v5707 = vpop.f32.mrb[0].mxu0
    %v5708 = vadd.f32 %v5575, %v5707
    %v5709 = vpop.f32.mrb[0].mxu0
    %v5710 = vpop.f32.mrb[0].mxu0
    %v5711 = vadd.f32 %v5575, %v5710
    %v5712 = vpop.f32.mrb[0].mxu0
    %5713 = vmatprep.mubr.bf16.mxu0 %v5525
    %5714 = vmatmul.mubr.bf16.gmra.mrb[0].mxu0 %v5524
    %v5715 = vpop.f32.mrb[0].mxu0
    %v5716 = vadd.f32 %v5575, %v5715
    %v5717 = vpop.f32.mrb[0].mxu0
    %v5718 = vpop.f32.mrb[0].mxu0
    %v5719 = vadd.f32 %v5575, %v5718
    %v5720 = vpop.f32.mrb[0].mxu0
    %5721 = vmatprep.mubr.bf16.mxu0 %v5527
    %5722 = vmatmul.mubr.bf16.gmra.mrb[0].mxu0 %v5526
    %v5723 = vpop.f32.mrb[0].mxu0
    %v5724 = vadd.f32 %v5575, %v5723
    %v5725 = vpop.f32.mrb[0].mxu0
    %v5726 = vpop.f32.mrb[0].mxu0
    %v5727 = vadd.f32 %v5575, %v5726
    %v5728 = vpop.f32.mrb[0].mxu0
    %5729 = vmatprep.mubr.bf16.mxu0 %v5529
    %5730 = vmatmul.mubr.bf16.gmra.mrb[0].mxu0 %v5528
    %v5731 = vpop.f32.mrb[0].mxu0
    %v5732 = vadd.f32 %v5575, %v5731
    %v5733 = vpop.f32.mrb[0].mxu0
    %v5734 = vpop.f32.mrb[0].mxu0
    %v5735 = vadd.f32 %v5575, %v5734
    %v5736 = vpop.f32.mrb[0].mxu0
    %5737 = vmatprep.mubr.bf16.mxu0 %v5531
    %5738 = vmatmul.mubr.bf16.gmra.mrb[0].mxu0 %v5530
    %v5739 = vpop.f32.mrb[0].mxu0
    %v5740 = vadd.f32 %v5575, %v5739
    %v5741 = vpop.f32.mrb[0].mxu0
    %v5742 = vpop.f32.mrb[0].mxu0
    %v5743 = vadd.f32 %v5575, %v5742
    %v5744 = vpop.f32.mrb[0].mxu0
    %5745 = vmatprep.mubr.bf16.mxu0 %v5533
    %5746 = vmatmul.mubr.bf16.gmra.mrb[0].mxu0 %v5532
    %v5747 = vpop.f32.mrb[0].mxu0
    %v5748 = vadd.f32 %v5575, %v5747
    %v5749 = vpop.f32.mrb[0].mxu0
    %v5750 = vpop.f32.mrb[0].mxu0
    %v5751 = vadd.f32 %v5575, %v5750
    %v5752 = vpop.f32.mrb[0].mxu0
    %5753 = vmatprep.mubr.bf16.mxu0 %v5535
    %5754 = vmatmul.mubr.bf16.gmra.mrb[0].mxu0 %v5534
    %v5755 = vpop.f32.mrb[0].mxu0
    %v5756 = vadd.f32 %v5575, %v5755
    %v5757 = vpop.f32.mrb[0].mxu0
    %v5758 = vpop.f32.mrb[0].mxu0
    %v5759 = vadd.f32 %v5575, %v5758
    %v5760 = vpop.f32.mrb[0].mxu0
    %5761 = vmatprep.mubr.bf16.mxu0 %v5537
    %5762 = vmatmul.mubr.bf16.gmra.mrb[0].mxu0 %v5536
    %v5763 = vpop.f32.mrb[0].mxu0
    %v5764 = vadd.f32 %v5575, %v5763
    %v5765 = vpop.f32.mrb[0].mxu0
    %v5766 = vpop.f32.mrb[0].mxu0
    %v5767 = vadd.f32 %v5575, %v5766
    %v5768 = vpop.f32.mrb[0].mxu0
    %5769 = vdwg.mxu0
    %v5770 = vmax.f32 %v5708, 0.0
    %v5771 = vmax.f32 %v5711, 0.0
    %v5772 = vmax.f32 %v5716, 0.0
    %v5773 = vmax.f32 %v5719, 0.0
    %v5774 = vmax.f32 %v5724, 0.0
    %v5775 = vmax.f32 %v5727, 0.0
    %v5776 = vmax.f32 %v5732, 0.0
    %v5777 = vmax.f32 %v5735, 0.0
    %v5778 = vmax.f32 %v5740, 0.0
    %v5779 = vmax.f32 %v5743, 0.0
    %v5780 = vmax.f32 %v5748, 0.0
    %v5781 = vmax.f32 %v5751, 0.0
    %v5782 = vmax.f32 %v5756, 0.0
    %v5783 = vmax.f32 %v5759, 0.0
    %v5784 = vmax.f32 %v5764, 0.0
    %v5785 = vmax.f32 %v5767, 0.0
    %v5786 = vpack.c.bf16 %v5771, %v5770
    %v5787 = vpack.c.bf16 %v5773, %v5772
    %v5788 = vpack.c.bf16 %v5775, %v5774
    %v5789 = vpack.c.bf16 %v5777, %v5776
    %v5790 = vpack.c.bf16 %v5779, %v5778
    %v5791 = vpack.c.bf16 %v5781, %v5780
    %v5792 = vpack.c.bf16 %v5783, %v5782
    %v5793 = vpack.c.bf16 %v5785, %v5784
    %v5794 = vld [vmem:[#allocation28] sm:$0xf]
    %v5795 = vld [vmem:[#allocation28 + $0x4] sm:$0xf]
    %v5796 = vld [vmem:[#allocation28 + $0x8] sm:$0xf]
    %v5797 = vld [vmem:[#allocation28 + $0xc] sm:$0xf]
    %v5798 = vld [vmem:[#allocation28 + $0x10] sm:$0xf]
    %v5799 = vld [vmem:[#allocation28 + $0x14] sm:$0xf]
    %v5800 = vld [vmem:[#allocation28 + $0x18] sm:$0xf]
    %v5801 = vld [vmem:[#allocation28 + $0x1c] sm:$0xf]
    %v5802 = vld [vmem:[#allocation28 + $0x20] sm:$0xf]
    %v5803 = vld [vmem:[#allocation28 + $0x24] sm:$0xf]
    %v5804 = vld [vmem:[#allocation28 + $0x28] sm:$0xf]
    %v5805 = vld [vmem:[#allocation28 + $0x2c] sm:$0xf]
    %v5806 = vld [vmem:[#allocation28 + $0x30] sm:$0xf]
    %v5807 = vld [vmem:[#allocation28 + $0x34] sm:$0xf]
    %v5808 = vld [vmem:[#allocation28 + $0x38] sm:$0xf]
    %v5809 = vld [vmem:[#allocation28 + $0x3c] sm:$0xf]
    %v5810 = vld [vmem:[%s19] sm:$0x1]
    %v5812 = vlaneseq
    %v5813 = vshrl.u32 %v5812, 7
    %v5814 = vsub.s32 0, %v5813
    %v5815 = vrot.slane %v5810, %v5814
    %v5833 = vunpack.c.l.b16 %v5794
    %v5834 = vunpack.c.l.b16 %v5795
    %v5835 = vunpack.c.l.b16 %v5796
    %v5836 = vunpack.c.l.b16 %v5797
    %v5837 = vunpack.c.l.b16 %v5798
    %v5838 = vunpack.c.l.b16 %v5799
    %v5839 = vunpack.c.l.b16 %v5800
    %v5840 = vunpack.c.l.b16 %v5801
    %v5841 = vunpack.c.l.b16 %v5802
    %v5842 = vunpack.c.l.b16 %v5803
    %v5843 = vunpack.c.l.b16 %v5804
    %v5844 = vunpack.c.l.b16 %v5805
    %v5845 = vunpack.c.l.b16 %v5806
    %v5846 = vunpack.c.l.b16 %v5807
    %v5847 = vunpack.c.l.b16 %v5808
    %v5848 = vunpack.c.l.b16 %v5809
    %v5849 = vpack.c.b16 %v5834, %v5833
    %v5850 = vpack.c.b16 %v5836, %v5835
    %v5851 = vpack.c.b16 %v5838, %v5837
    %v5852 = vpack.c.b16 %v5840, %v5839
    %v5853 = vpack.c.b16 %v5842, %v5841
    %v5854 = vpack.c.b16 %v5844, %v5843
    %v5855 = vpack.c.b16 %v5846, %v5845
    %v5856 = vpack.c.b16 %v5848, %v5847
    %5865 = vmatprep.subr.bf16.mxu0 0
    %5866 = vmatpush1.bf16.msra.mxu0 %v5849
    %5867 = vmatprep.subr.bf16.mxu0 0
    %5868 = vmatpush1.bf16.msra.mxu0 %v5850
    %5869 = vmatprep.subr.bf16.mxu0 0
    %5870 = vmatpush1.bf16.msra.mxu0 %v5851
    %5871 = vmatprep.subr.bf16.mxu0 0
    %5872 = vmatpush1.bf16.msra.mxu0 %v5852
    %5873 = vmatprep.subr.bf16.mxu0 0
    %5874 = vmatpush1.bf16.msra.mxu0 %v5853
    %5875 = vmatprep.subr.bf16.mxu0 0
    %5876 = vmatpush1.bf16.msra.mxu0 %v5854
    %5877 = vmatprep.subr.bf16.mxu0 0
    %5878 = vmatpush1.bf16.msra.mxu0 %v5855
    %5879 = vmatprep.subr.bf16.mxu0 0
    %5880 = vmatpush1.bf16.msra.mxu0 %v5856
    %5881 = vmatprep.subr.bf16.mxu0 0
    %5882 = vmatpush1.bf16.msra.mxu0 0
    %5883 = vmatprep.subr.bf16.mxu0 0
    %5884 = vmatpush1.bf16.msra.mxu0 0
    %5885 = vmatprep.subr.bf16.mxu0 0
    %5886 = vmatpush1.bf16.msra.mxu0 0
    %5887 = vmatprep.subr.bf16.mxu0 0
    %5888 = vmatpush1.bf16.msra.mxu0 0
    %5889 = vmatprep.subr.bf16.mxu0 0
    %5890 = vmatpush1.bf16.msra.mxu0 0
    %5891 = vmatprep.subr.bf16.mxu0 0
    %5892 = vmatpush1.bf16.msra.mxu0 0
    %5893 = vmatprep.subr.bf16.mxu0 0
    %5894 = vmatpush1.bf16.msra.mxu0 0
    %5895 = vmatprep.subr.bf16.mxu0 0
    %5896 = vmatpush1.bf16.msra.mxu0 0
    %5897 = vmatprep.mubr.bf16.mxu0 0
    %5898 = vmatmul.mubr.bf16.gmra.mrb[0].mxu0 %v5786
    %v5899 = vpop.f32.mrb[0].mxu0
    %v5900 = vadd.f32 %v5815, %v5899
    %v5901 = vpop.f32.mrb[0].mxu0
    %v5902 = vpop.f32.mrb[0].mxu0
    %v5903 = vadd.f32 %v5815, %v5902
    %v5904 = vpop.f32.mrb[0].mxu0
    %5905 = vmatprep.mubr.bf16.mxu0 0
    %5906 = vmatmul.mubr.bf16.gmra.mrb[0].mxu0 %v5787
    %v5907 = vpop.f32.mrb[0].mxu0
    %v5908 = vadd.f32 %v5815, %v5907
    %v5909 = vpop.f32.mrb[0].mxu0
    %v5910 = vpop.f32.mrb[0].mxu0
    %v5911 = vadd.f32 %v5815, %v5910
    %v5912 = vpop.f32.mrb[0].mxu0
    %5913 = vmatprep.mubr.bf16.mxu0 0
    %5914 = vmatmul.mubr.bf16.gmra.mrb[0].mxu0 %v5788
    %v5915 = vpop.f32.mrb[0].mxu0
    %v5916 = vadd.f32 %v5815, %v5915
    %v5917 = vpop.f32.mrb[0].mxu0
    %v5918 = vpop.f32.mrb[0].mxu0
    %v5919 = vadd.f32 %v5815, %v5918
    %v5920 = vpop.f32.mrb[0].mxu0
    %5921 = vmatprep.mubr.bf16.mxu0 0
    %5922 = vmatmul.mubr.bf16.gmra.mrb[0].mxu0 %v5789
    %v5923 = vpop.f32.mrb[0].mxu0
    %v5924 = vadd.f32 %v5815, %v5923
    %v5925 = vpop.f32.mrb[0].mxu0
    %v5926 = vpop.f32.mrb[0].mxu0
    %v5927 = vadd.f32 %v5815, %v5926
    %v5928 = vpop.f32.mrb[0].mxu0
    %5929 = vmatprep.mubr.bf16.mxu0 0
    %5930 = vmatmul.mubr.bf16.gmra.mrb[0].mxu0 %v5790
    %v5931 = vpop.f32.mrb[0].mxu0
    %v5932 = vadd.f32 %v5815, %v5931
    %v5933 = vpop.f32.mrb[0].mxu0
    %v5934 = vpop.f32.mrb[0].mxu0
    %v5935 = vadd.f32 %v5815, %v5934
    %v5936 = vpop.f32.mrb[0].mxu0
    %5937 = vmatprep.mubr.bf16.mxu0 0
    %5938 = vmatmul.mubr.bf16.gmra.mrb[0].mxu0 %v5791
    %v5939 = vpop.f32.mrb[0].mxu0
    %v5940 = vadd.f32 %v5815, %v5939
    %v5941 = vpop.f32.mrb[0].mxu0
    %v5942 = vpop.f32.mrb[0].mxu0
    %v5943 = vadd.f32 %v5815, %v5942
    %v5944 = vpop.f32.mrb[0].mxu0
    %5945 = vmatprep.mubr.bf16.mxu0 0
    %5946 = vmatmul.mubr.bf16.gmra.mrb[0].mxu0 %v5792
    %v5947 = vpop.f32.mrb[0].mxu0
    %v5948 = vadd.f32 %v5815, %v5947
    %v5949 = vpop.f32.mrb[0].mxu0
    %v5950 = vpop.f32.mrb[0].mxu0
    %v5951 = vadd.f32 %v5815, %v5950
    %v5952 = vpop.f32.mrb[0].mxu0
    %5953 = vmatprep.mubr.bf16.mxu0 0
    %5954 = vmatmul.mubr.bf16.gmra.mrb[0].mxu0 %v5793
    %v5955 = vpop.f32.mrb[0].mxu0
    %v5956 = vadd.f32 %v5815, %v5955
    %v5957 = vpop.f32.mrb[0].mxu0
    %v5958 = vpop.f32.mrb[0].mxu0
    %v5959 = vadd.f32 %v5815, %v5958
    %v5960 = vpop.f32.mrb[0].mxu0
    %5961 = vdwg.mxu0
    %5962 = vst [vmem:[#allocation30] sm:$0xff] %v5900
    %5963 = vst [vmem:[#allocation30 + $0x8] sm:$0xff] %v5903
    %5964 = vst [vmem:[#allocation30 + $0x10] sm:$0xff] %v5908
    %5965 = vst [vmem:[#allocation30 + $0x18] sm:$0xff] %v5911
    %5966 = vst [vmem:[#allocation30 + $0x20] sm:$0xff] %v5916
    %5967 = vst [vmem:[#allocation30 + $0x28] sm:$0xff] %v5919
    %5968 = vst [vmem:[#allocation30 + $0x30] sm:$0xff] %v5924
    %5969 = vst [vmem:[#allocation30 + $0x38] sm:$0xff] %v5927
    %5970 = vst [vmem:[#allocation30 + $0x40] sm:$0xff] %v5932
    %5971 = vst [vmem:[#allocation30 + $0x48] sm:$0xff] %v5935
    %5972 = vst [vmem:[#allocation30 + $0x50] sm:$0xff] %v5940
    %5973 = vst [vmem:[#allocation30 + $0x58] sm:$0xff] %v5943
    %5974 = vst [vmem:[#allocation30 + $0x60] sm:$0xff] %v5948
    %5975 = vst [vmem:[#allocation30 + $0x68] sm:$0xff] %v5951
    %5976 = vst [vmem:[#allocation30 + $0x70] sm:$0xff] %v5956
    %5977 = vst [vmem:[#allocation30 + $0x78] sm:$0xff] %v5959
    // Predicated region
    $region146: #{tpu_custom_call.1} parent=1 // pred_check
      _
    $region147: #{tpu_custom_call.1} parent=1 // pred_check_branch
      %5979 = sbr.rel (0) target = $region149
    $region148: #{tpu_custom_call.1} parent=1 // pred_region
      %s5981 = ssub.s32 2048, 2048
      %5982 = vsyncadd [#allocation6], %s5981
      %s5983 = sshll.u32 [#allocation30], 4
      %s5984 = int_to_ptr.vmem [resolvable:$true] %s5983
      %5989 = dma.vmem_to_hbm [thread:$0]  %s5984, 2048, %s20, [#allocation6], 128, 128, 8
    $region149: #{tpu_custom_call.1} parent=1 // pred_fallthru
      _
    // Predicated region
    $region150: #{tpu_custom_call.1} parent=1 // pred_check
      _
    $region151: #{tpu_custom_call.1} parent=1 // pred_check_branch
      %5991 = sbr.rel (0) target = $region153
    $region152: #{tpu_custom_call.1} parent=1 // pred_region
      %5992 = dma.done [#allocation6], 2048
    $region153: #{tpu_custom_call.1} parent=1 // pred_fallthru
      _
    %5993 = vsyncpa [#allocation5], 1
    %5994 = vsyncpa [#allocation8], 1
    %5995 = vsyncpa [#allocation11], 1
    %5996 = vsyncpa [#allocation14], 1
    %5997 = vsyncpa [#allocation17], 1
    %5998 = vsyncpa [#allocation20], 1
    %5999 = vsyncpa [#allocation23], 1
    %6000 = vsyncpa [#allocation26], 1
    %6001 = vsyncpa [#allocation29], 1
    %6002 = vsyncpa [#allocation6], 1

</llo_original>
